<compile_context>
chip_gen: v6e
topology: v6e:2x2x1
jax: 0.10.0
libtpu: 0.0.40
codegen_flags: <defaults>
</compile_context>

<pallas_src>
import jax
import jax.numpy as jnp
import numpy as np
from jax import lax
from jax.experimental import pallas as pl
from jax.experimental.pallas import tpu as pltpu

LEAK = 0.2
EPS = 1e-5


def _full_spec(a):
    n = a.ndim
    return pl.BlockSpec(a.shape, lambda i, _n=n: (0,) * _n)


def _leaky(v):
    return jnp.where(v >= 0, v, LEAK * v)


# -----------------------------------------------------------------------------------
# Kernel A: conv stack for one tile of TB batch elements.
# Row conventions of the intermediate activations (lane = b_local*16 + m):
#   A1 rows: p2*8  + c1 , A1[row, (b,m)] = a1[b, c1, 16*m + p2]   (stage-1 pooled, len 256)
#   A2 rows: p3*16 + c2 , A2[row, (b,m)] = a2[b, c2,  4*m + p3]   (stage-2 pooled, len  64)
#   OUT rows: c3        , OUT[row,(b,m)] = a3[b, c3, m]           (stage-3 pooled, len  16)
# -----------------------------------------------------------------------------------
def _conv_stack_kernel(x1_ref, w1_ref, b1_ref, w2_ref, b2_ref, w3_ref, b3_ref, o_ref):
    f32 = jnp.float32
    nl = o_ref.shape[-1]
    m_lane = lax.broadcasted_iota(jnp.int32, (1, nl), 1) % 16

    def shift16(block, s):
        # block[:, b*16+m] -> block[:, b*16+m+s], zeroed where m+s leaves [0,16).
        # The +-1-lane shift on a 1-2 vreg block is not perf-critical; jnp.roll is used
        # for its guaranteed semantics (pltpu.roll would be a drop-in replacement).
        if s == 0:
            return block
        rolled = jnp.roll(block, -s, axis=1)
        valid = jnp.logical_and(m_lane + s >= 0, m_lane + s <= 15)
        return jnp.where(valid, rolled, 0.0)

    # ---- stage 1: Conv1d(1->8,k25,p12) + LeakyReLU + AvgPool(4), one matmul ----
    # h1 rows are (j1, p2, c1); pooling = mean over the 4 j1 blocks of 128 rows.
    h1 = jnp.dot(w1_ref[...], x1_ref[0], preferred_element_type=f32)       # (512, nl)
    b1v = b1_ref[...]                                                      # (128, 1)
    a1 = jnp.zeros((128, nl), f32)
    for j in range(4):
        a1 = a1 + _leaky(h1[j * 128:(j + 1) * 128, :] + b1v)
    a1 = a1 * 0.25                                                         # rows p2*8 + c1

    # ---- stage 2: taps d2 = e2-3 in [-3,18] -> 22 shifted phase blocks of A1 ----
    blocks2 = []
    for e2 in range(22):
        d2 = e2 - 3
        s, p = d2 // 16, d2 % 16
        blocks2.append(shift16(a1[p * 8:(p + 1) * 8, :], s))
    rhs2 = jnp.concatenate(blocks2, axis=0)                                # (176, nl)
    h2 = jnp.dot(w2_ref[...], rhs2, preferred_element_type=f32)            # (256, nl)
    b2v = b2_ref[...]                                                      # (64, 1)
    a2 = jnp.zeros((64, nl), f32)
    for j in range(4):
        a2 = a2 + _leaky(h2[j * 64:(j + 1) * 64, :] + b2v)
    a2 = a2 * 0.25                                                         # rows p3*16 + c2

    # ---- stage 3: taps d3 = e3-3 in [-3,6] -> 10 shifted phase blocks of A2 ----
    blocks3 = []
    for e3 in range(10):
        d3 = e3 - 3
        s, p = d3 // 4, d3 % 4
        blocks3.append(shift16(a2[p * 16:(p + 1) * 16, :], s))
    rhs3 = jnp.concatenate(blocks3, axis=0)                                # (160, nl)
    h3 = jnp.dot(w3_ref[...], rhs3, preferred_element_type=f32)            # (128, nl)
    b3v = b3_ref[...]                                                      # (32, 1)
    out = jnp.zeros((32, nl), f32)
    for j in range(4):
        out = out + _leaky(h3[j * 32:(j + 1) * 32, :] + b3v)
    o_ref[0] = out * 0.25                                                  # rows c3, lanes b*16+m


def _scatter_weights(params):
    """Phase-scattered conv weights (static index maps, built once in glue)."""
    f32 = jnp.float32
    w1 = params["w1"][:, 0, :].astype(f32)          # (8, 25)
    w2 = params["w2"].astype(f32)                   # (16, 8, 7)
    w3 = params["w3"].astype(f32)                   # (32, 16, 7)

    # W1s[j1*128 + p2*8 + c1, d] = w1[c1, d - 4*p2 - j1]
    s1 = np.zeros((4, 16, 88, 25), np.float32)
    for j in range(4):
        for p in range(16):
            for k in range(25):
                s1[j, p, 4 * p + j + k, k] = 1.0
    w1s = jnp.einsum("ck,jpdk->jpcd", w1, jnp.asarray(s1)).reshape(512, 88)

    # W2s[j2*64 + p3*16 + c2, e2*8 + c1] = w2[c2, c1, e2 - 4*p3 - j2]
    s2 = np.zeros((4, 4, 22, 7), np.float32)
    for j in range(4):
        for p in range(4):
            for k in range(7):
                s2[j, p, 4 * p + j + k, k] = 1.0
    w2s = jnp.einsum("ock,jpek->jpoec", w2, jnp.asarray(s2)).reshape(256, 176)

    # W3s[j3*32 + c3, e3*16 + c2] = w3[c3, c2, e3 - j3]
    s3 = np.zeros((4, 10, 7), np.float32)
    for j in range(4):
        for k in range(7):
            s3[j, j + k, k] = 1.0
    w3s = jnp.einsum("ouk,jek->joeu", w3, jnp.asarray(s3)).reshape(128, 160)

    b1t = jnp.tile(params["b1"].astype(f32), 16).reshape(128, 1)   # rows p2*8 + c1
    b2t = jnp.tile(params["b2"].astype(f32), 4).reshape(64, 1)     # rows p3*16 + c2
    b3t = params["b3"].astype(f32).reshape(32, 1)                  # rows c3
    return w1s, b1t, w2s, b2t, w3s, b3t


def generator_1024_v1(x, params, tb=None, ft=256):
    """Returns (bn_output (B,1024), flattened_conv_features (B,512)) for x of shape (B,1024)."""
    B, L = x.shape
    assert L == 1024, "Linear(512, 1024) after the conv stack forces input length 1024"
    f32 = jnp.float32

    # Batch tile: lane width of kernel A is TB*16 (>= 128 when TB >= 8).
    if tb is None:
        tb = 32 if B >= 64 else (8 if B >= 8 else B)
    TB = int(min(tb, B))
    NB = -(-B // TB)
    B_pad = NB * TB
    NL = TB * 16

    w1s, b1t, w2s, b2t, w3s, b3t = _scatter_weights(params)

    # X1[nb, d, b*16+m] = x_pad[nb*TB + b, 64*m + d], d in [0,88)   (max index 64*15+87 = 1047)
    x_pad = jnp.pad(x.astype(f32), ((0, B_pad - B), (12, 12)))             # (B_pad, 1048)
    idx = jnp.asarray(np.arange(88)[:, None] + 64 * np.arange(16)[None, :])
    x1 = x_pad[:, idx]                                                     # (B_pad, 88, 16)
    x1 = x1.reshape(NB, TB, 88, 16).transpose(0, 2, 1, 3).reshape(NB, 88, NL)

    conv_out = pl.pallas_call(
        _conv_stack_kernel,
        out_shape=jax.ShapeDtypeStruct((NB, 32, NL), f32),
        grid_spec=pltpu.PrefetchScalarGridSpec(
            num_scalar_prefetch=0,
            grid=(NB,),
            in_specs=[
                pl.BlockSpec((1, 88, NL), lambda i: (i, 0, 0)),
                _full_spec(w1s), _full_spec(b1t),
                _full_spec(w2s), _full_spec(b2t),
                _full_spec(w3s), _full_spec(b3t),
            ],
            out_specs=pl.BlockSpec((1, 32, NL), lambda i: (i, 0, 0)),
        ),
        compiler_params=pltpu.CompilerParams(dimension_semantics=("parallel",)),
    )(x1, w1s, b1t, w2s, b2t, w3s, b3t)

    # Flatten to PyTorch order: feats[b, c3*16 + n] = a3[b, c3, n]  (tiny 32 KiB relayout).
    feats = (conv_out.reshape(NB, 32, TB, 16)
             .transpose(0, 2, 1, 3)
             .reshape(B_pad, 512)[:B])

    # ---------------- kernel B: fused Linear(512->1024) + train-mode BatchNorm ----------
    wfc_t = params["wfc"].T.astype(f32)                                    # (512, 1024)
    bfc = params["bfc"][None, :].astype(f32)
    gamma = params["gamma"][None, :].astype(f32)
    beta = params["beta"][None, :].astype(f32)

    FT = int(ft)
    assert 1024 % FT == 0 and FT % 128 == 0
    NT = 1024 // FT

    def fc_bn_kernel(x_ref, w_ref, bias_ref, g_ref, bt_ref, o_ref):
        y = jnp.dot(x_ref[...], w_ref[...],
                    preferred_element_type=jnp.float32) + bias_ref[...]    # (B, FT)
        mean = jnp.mean(y, axis=0, keepdims=True)
        var = jnp.mean((y - mean) ** 2, axis=0, keepdims=True)             # biased (train mode)
        o_ref[...] = (y - mean) * lax.rsqrt(var + EPS) * g_ref[...] + bt_ref[...]

    out = pl.pallas_call(
        fc_bn_kernel,
        out_shape=jax.ShapeDtypeStruct((B, 1024), f32),
        grid_spec=pltpu.PrefetchScalarGridSpec(
            num_scalar_prefetch=0,
            grid=(NT,),
            in_specs=[
                pl.BlockSpec((B, 512), lambda i: (0, 0)),    # resident across feature tiles
                pl.BlockSpec((512, FT), lambda i: (0, i)),
                pl.BlockSpec((1, FT), lambda i: (0, i)),
                pl.BlockSpec((1, FT), lambda i: (0, i)),
                pl.BlockSpec((1, FT), lambda i: (0, i)),
            ],
            out_specs=pl.BlockSpec((B, FT), lambda i: (0, i)),
        ),
        compiler_params=pltpu.CompilerParams(dimension_semantics=("parallel",)),
    )(feats, wfc_t, bfc, gamma, beta)

    return out, feats


# ---------------- pure-JAX references (mirror the PyTorch forward) ----------------
def reference_feats(x, params):
    def conv1d(h, w, b, pad):
        out = lax.conv_general_dilated(
            h, w, window_strides=(1,), padding=[(pad, pad)],
            dimension_numbers=("NCH", "OIH", "NCH"),
            precision=lax.Precision.HIGHEST)
        return out + b[None, :, None]

    def pool4(h):
        bb, c, l = h.shape
        return h.reshape(bb, c, l // 4, 4).mean(axis=-1)

    h = x[:, None, :]
    h = pool4(_leaky(conv1d(h, params["w1"], params["b1"], 12)))
    h = pool4(_leaky(conv1d(h, params["w2"], params["b2"], 3)))
    h = pool4(_leaky(conv1d(h, params["w3"], params["b3"], 3)))
    return h.reshape(h.shape[0], -1)                                       # (B, 512)


def reference_bn(h, params):
    mean = h.mean(axis=0, keepdims=True)
    var = ((h - mean) ** 2).mean(axis=0, keepdims=True)
    return (h - mean) / jnp.sqrt(var + EPS) * params["gamma"] + params["beta"]


if __name__ == "__main__":
    key = jax.random.PRNGKey(0)
    ks = jax.random.split(key, 11)
    params = {
        "w1": jax.random.normal(ks[0], (8, 1, 25), jnp.float32) * 0.2,
        "b1": jax.random.normal(ks[1], (8,), jnp.float32) * 0.1,
        "w2": jax.random.normal(ks[2], (16, 8, 7), jnp.float32) * 0.1,
        "b2": jax.random.normal(ks[3], (16,), jnp.float32) * 0.1,
        "w3": jax.random.normal(ks[4], (32, 16, 7), jnp.float32) * 0.1,
        "b3": jax.random.normal(ks[5], (32,), jnp.float32) * 0.1,
        "wfc": jax.random.normal(ks[6], (1024, 512), jnp.float32) * 0.05,
        "bfc": jax.random.normal(ks[7], (1024,), jnp.float32) * 0.1,
        "gamma": 1.0 + 0.1 * jax.random.normal(ks[8], (1024,), jnp.float32),
        "beta": 0.1 * jax.random.normal(ks[9], (1024,), jnp.float32),
    }
    # Input length is forced to 1024 by Linear(in_features=512) after the conv stack.
    B = 16
    x = jax.random.normal(ks[10], (B, 1024), jnp.float32)

    fwd = jax.jit(lambda xx, pp: generator_1024_v1(xx, pp))
    out, feats = fwd(x, params)
    out = jax.block_until_ready(out)
    feats = jax.block_until_ready(feats)

    assert out.shape == (B, 1024) and out.dtype == jnp.float32
    assert feats.shape == (B, 512)

    # Check the conv-stack kernel against the XLA reference.
    ref_f = reference_feats(x, params)
    err_f = float(jnp.max(jnp.abs(feats - ref_f)))
    assert err_f < 2e-3, f"conv-feature mismatch: {err_f}"

    # Check the fused FC+BatchNorm kernel against a reference applied to the same features
    # (train-mode BatchNorm: batch statistics, biased variance -- matches a freshly
    # constructed PyTorch module, which defaults to train()).
    pre_ours = jnp.dot(feats, params["wfc"].T,
                       precision=lax.Precision.HIGHEST) + params["bfc"]
    ref_out = reference_bn(pre_ours, params)
    err_o = float(jnp.max(jnp.abs(out - ref_out)))
    assert err_o < 2e-3, f"FC+BN mismatch: {err_o}"

    print("KERNEL_OK")
</pallas_src>

<mosaic_0001>
module attributes {stable_mosaic.version = 11 : i64} {
  func.func @_conv_stack_kernel(%arg0: i32, %arg1: memref<1x88x128xf32, #tpu.memory_space<vmem>>, %arg2: memref<512x88xf32, #tpu.memory_space<vmem>>, %arg3: memref<128x1xf32, #tpu.memory_space<vmem>>, %arg4: memref<256x176xf32, #tpu.memory_space<vmem>>, %arg5: memref<64x1xf32, #tpu.memory_space<vmem>>, %arg6: memref<128x160xf32, #tpu.memory_space<vmem>>, %arg7: memref<32x1xf32, #tpu.memory_space<vmem>>, %arg8: memref<1x32x128xf32, #tpu.memory_space<vmem>>) attributes {dimension_semantics = [#tpu.dimension_semantics<parallel>], iteration_bounds = array<i64: 2>, scalar_prefetch = 0 : i64, scratch_operands = 0 : i64, tpu.core_type = #tpu.core_type<tc>, window_params = [{transform_indices = @transform_0, window_bounds = array<i64: 1, 88, 128>}, {pipeline_mode = #tpu.pipeline_mode<synchronous>, transform_indices = @transform_1, window_bounds = array<i64: 512, 88>}, {pipeline_mode = #tpu.pipeline_mode<synchronous>, transform_indices = @transform_2, window_bounds = array<i64: 128, 1>}, {pipeline_mode = #tpu.pipeline_mode<synchronous>, transform_indices = @transform_3, window_bounds = array<i64: 256, 176>}, {pipeline_mode = #tpu.pipeline_mode<synchronous>, transform_indices = @transform_4, window_bounds = array<i64: 64, 1>}, {pipeline_mode = #tpu.pipeline_mode<synchronous>, transform_indices = @transform_5, window_bounds = array<i64: 128, 160>}, {pipeline_mode = #tpu.pipeline_mode<synchronous>, transform_indices = @transform_6, window_bounds = array<i64: 32, 1>}, {transform_indices = @transform_7, window_bounds = array<i64: 1, 32, 128>}]} {
    %0 = tpu.iota {dimensions = array<i32: 1>} : vector<1x128xi32>
    %c16_i32 = arith.constant 16 : i32
    %c0_i32 = arith.constant 0 : i32
    %1 = arith.cmpi eq, %c16_i32, %c0_i32 : i32
    %c1_i32 = arith.constant 1 : i32
    %2 = arith.select %1, %c1_i32, %c16_i32 : i32
    %3 = vector.broadcast %2 : i32 to vector<1x128xi32>
    %4 = arith.remsi %0, %3 : vector<1x128xi32>
    %c0_i32_0 = arith.constant 0 : i32
    %5 = vector.broadcast %c0_i32_0 : i32 to vector<1x128xi32>
    %6 = arith.cmpi ne, %4, %5 : vector<1x128xi32>
    %c0_i32_1 = arith.constant 0 : i32
    %7 = vector.broadcast %c0_i32_1 : i32 to vector<1x128xi32>
    %8 = arith.cmpi slt, %4, %7 : vector<1x128xi32>
    %c0_i32_2 = arith.constant 0 : i32
    %9 = arith.cmpi slt, %2, %c0_i32_2 : i32
    %10 = vector.broadcast %9 : i1 to vector<1x128xi1>
    %11 = vector.broadcast %10 : vector<1x128xi1> to vector<1x128xi1>
    %12 = arith.xori %8, %11 : vector<1x128xi1>
    %13 = arith.andi %12, %6 : vector<1x128xi1>
    %14 = vector.broadcast %2 : i32 to vector<1x128xi32>
    %15 = arith.addi %4, %14 : vector<1x128xi32>
    %16 = arith.select %13, %15, %4 : vector<1x128xi1>, vector<1x128xi32>
    %c0 = arith.constant 0 : index
    %c0_3 = arith.constant 0 : index
    %17 = vector.load %arg2[%c0, %c0_3] : memref<512x88xf32, #tpu.memory_space<vmem>>, vector<512x88xf32>
    %c0_4 = arith.constant 0 : index
    %c0_5 = arith.constant 0 : index
    %c0_6 = arith.constant 0 : index
    %18 = vector.load %arg1[%c0_4, %c0_5, %c0_6] : memref<1x88x128xf32, #tpu.memory_space<vmem>>, vector<1x88x128xf32>
    %19 = vector.shape_cast %18 : vector<1x88x128xf32> to vector<88x128xf32>
    %cst = arith.constant dense<0.000000e+00> : vector<512x128xf32>
    %20 = tpu.matmul %17, %19, %cst {dimension_numbers = #tpu.dot_dimension_numbers<[1], [0], [0], [1], [0, 0, 1, 1], [], []>} : vector<512x88xf32>, vector<88x128xf32>, vector<512x128xf32> -> vector<512x128xf32>
    %c0_7 = arith.constant 0 : index
    %c0_8 = arith.constant 0 : index
    %21 = vector.load %arg3[%c0_7, %c0_8] : memref<128x1xf32, #tpu.memory_space<vmem>>, vector<128x1xf32>
    %cst_9 = arith.constant 0.000000e+00 : f32
    %22 = vector.broadcast %cst_9 : f32 to vector<128x128xf32>
    %23 = vector.extract_strided_slice %20 {offsets = [0, 0], sizes = [128, 128], strides = [1, 1]} : vector<512x128xf32> to vector<128x128xf32>
    %24 = vector.broadcast %21 : vector<128x1xf32> to vector<128x128xf32>
    %25 = arith.addf %23, %24 : vector<128x128xf32>
    %cst_10 = arith.constant 0.000000e+00 : f32
    %26 = vector.broadcast %cst_10 : f32 to vector<128x128xf32>
    %27 = arith.cmpf oge, %25, %26 : vector<128x128xf32>
    %cst_11 = arith.constant 2.000000e-01 : f32
    %28 = vector.broadcast %cst_11 : f32 to vector<128x128xf32>
    %29 = arith.mulf %28, %25 : vector<128x128xf32>
    %30 = arith.select %27, %25, %29 : vector<128x128xi1>, vector<128x128xf32>
    %31 = arith.addf %22, %30 : vector<128x128xf32>
    %32 = vector.extract_strided_slice %20 {offsets = [128, 0], sizes = [128, 128], strides = [1, 1]} : vector<512x128xf32> to vector<128x128xf32>
    %33 = vector.broadcast %21 : vector<128x1xf32> to vector<128x128xf32>
    %34 = arith.addf %32, %33 : vector<128x128xf32>
    %cst_12 = arith.constant 0.000000e+00 : f32
    %35 = vector.broadcast %cst_12 : f32 to vector<128x128xf32>
    %36 = arith.cmpf oge, %34, %35 : vector<128x128xf32>
    %cst_13 = arith.constant 2.000000e-01 : f32
    %37 = vector.broadcast %cst_13 : f32 to vector<128x128xf32>
    %38 = arith.mulf %37, %34 : vector<128x128xf32>
    %39 = arith.select %36, %34, %38 : vector<128x128xi1>, vector<128x128xf32>
    %40 = arith.addf %31, %39 : vector<128x128xf32>
    %41 = vector.extract_strided_slice %20 {offsets = [256, 0], sizes = [128, 128], strides = [1, 1]} : vector<512x128xf32> to vector<128x128xf32>
    %42 = vector.broadcast %21 : vector<128x1xf32> to vector<128x128xf32>
    %43 = arith.addf %41, %42 : vector<128x128xf32>
    %cst_14 = arith.constant 0.000000e+00 : f32
    %44 = vector.broadcast %cst_14 : f32 to vector<128x128xf32>
    %45 = arith.cmpf oge, %43, %44 : vector<128x128xf32>
    %cst_15 = arith.constant 2.000000e-01 : f32
    %46 = vector.broadcast %cst_15 : f32 to vector<128x128xf32>
    %47 = arith.mulf %46, %43 : vector<128x128xf32>
    %48 = arith.select %45, %43, %47 : vector<128x128xi1>, vector<128x128xf32>
    %49 = arith.addf %40, %48 : vector<128x128xf32>
    %50 = vector.extract_strided_slice %20 {offsets = [384, 0], sizes = [128, 128], strides = [1, 1]} : vector<512x128xf32> to vector<128x128xf32>
    %51 = vector.broadcast %21 : vector<128x1xf32> to vector<128x128xf32>
    %52 = arith.addf %50, %51 : vector<128x128xf32>
    %cst_16 = arith.constant 0.000000e+00 : f32
    %53 = vector.broadcast %cst_16 : f32 to vector<128x128xf32>
    %54 = arith.cmpf oge, %52, %53 : vector<128x128xf32>
    %cst_17 = arith.constant 2.000000e-01 : f32
    %55 = vector.broadcast %cst_17 : f32 to vector<128x128xf32>
    %56 = arith.mulf %55, %52 : vector<128x128xf32>
    %57 = arith.select %54, %52, %56 : vector<128x128xi1>, vector<128x128xf32>
    %58 = arith.addf %49, %57 : vector<128x128xf32>
    %cst_18 = arith.constant 2.500000e-01 : f32
    %59 = vector.broadcast %cst_18 : f32 to vector<128x128xf32>
    %60 = arith.mulf %58, %59 : vector<128x128xf32>
    %61 = vector.extract_strided_slice %60 {offsets = [104, 0], sizes = [8, 128], strides = [1, 1]} : vector<128x128xf32> to vector<8x128xf32>
    %62 = vector.extract_strided_slice %61 {offsets = [0, 127], sizes = [8, 1], strides = [1, 1]} : vector<8x128xf32> to vector<8x1xf32>
    %63 = vector.extract_strided_slice %61 {offsets = [0, 0], sizes = [8, 127], strides = [1, 1]} : vector<8x128xf32> to vector<8x127xf32>
    %64 = tpu.concatenate %62, %63 in 1 : vector<8x1xf32>, vector<8x127xf32> -> vector<8x128xf32>
    %c-1_i32 = arith.constant -1 : i32
    %65 = vector.broadcast %c-1_i32 : i32 to vector<1x128xi32>
    %66 = arith.addi %16, %65 : vector<1x128xi32>
    %c0_i32_19 = arith.constant 0 : i32
    %67 = vector.broadcast %c0_i32_19 : i32 to vector<1x128xi32>
    %68 = arith.cmpi sge, %66, %67 : vector<1x128xi32>
    %c-1_i32_20 = arith.constant -1 : i32
    %69 = vector.broadcast %c-1_i32_20 : i32 to vector<1x128xi32>
    %70 = arith.addi %16, %69 : vector<1x128xi32>
    %c15_i32 = arith.constant 15 : i32
    %71 = vector.broadcast %c15_i32 : i32 to vector<1x128xi32>
    %72 = arith.cmpi sle, %70, %71 : vector<1x128xi32>
    %73 = arith.andi %68, %72 : vector<1x128xi1>
    %cst_21 = arith.constant 0.000000e+00 : f32
    %74 = vector.shape_cast %73 : vector<1x128xi1> to vector<1x128xi1>
    %75 = vector.broadcast %74 : vector<1x128xi1> to vector<8x128xi1>
    %76 = vector.broadcast %cst_21 : f32 to vector<8x128xf32>
    %77 = arith.select %75, %64, %76 : vector<8x128xi1>, vector<8x128xf32>
    %78 = vector.extract_strided_slice %60 {offsets = [112, 0], sizes = [8, 128], strides = [1, 1]} : vector<128x128xf32> to vector<8x128xf32>
    %79 = vector.extract_strided_slice %78 {offsets = [0, 127], sizes = [8, 1], strides = [1, 1]} : vector<8x128xf32> to vector<8x1xf32>
    %80 = vector.extract_strided_slice %78 {offsets = [0, 0], sizes = [8, 127], strides = [1, 1]} : vector<8x128xf32> to vector<8x127xf32>
    %81 = tpu.concatenate %79, %80 in 1 : vector<8x1xf32>, vector<8x127xf32> -> vector<8x128xf32>
    %c-1_i32_22 = arith.constant -1 : i32
    %82 = vector.broadcast %c-1_i32_22 : i32 to vector<1x128xi32>
    %83 = arith.addi %16, %82 : vector<1x128xi32>
    %c0_i32_23 = arith.constant 0 : i32
    %84 = vector.broadcast %c0_i32_23 : i32 to vector<1x128xi32>
    %85 = arith.cmpi sge, %83, %84 : vector<1x128xi32>
    %c-1_i32_24 = arith.constant -1 : i32
    %86 = vector.broadcast %c-1_i32_24 : i32 to vector<1x128xi32>
    %87 = arith.addi %16, %86 : vector<1x128xi32>
    %c15_i32_25 = arith.constant 15 : i32
    %88 = vector.broadcast %c15_i32_25 : i32 to vector<1x128xi32>
    %89 = arith.cmpi sle, %87, %88 : vector<1x128xi32>
    %90 = arith.andi %85, %89 : vector<1x128xi1>
    %cst_26 = arith.constant 0.000000e+00 : f32
    %91 = vector.shape_cast %90 : vector<1x128xi1> to vector<1x128xi1>
    %92 = vector.broadcast %91 : vector<1x128xi1> to vector<8x128xi1>
    %93 = vector.broadcast %cst_26 : f32 to vector<8x128xf32>
    %94 = arith.select %92, %81, %93 : vector<8x128xi1>, vector<8x128xf32>
    %95 = vector.extract_strided_slice %60 {offsets = [120, 0], sizes = [8, 128], strides = [1, 1]} : vector<128x128xf32> to vector<8x128xf32>
    %96 = vector.extract_strided_slice %95 {offsets = [0, 127], sizes = [8, 1], strides = [1, 1]} : vector<8x128xf32> to vector<8x1xf32>
    %97 = vector.extract_strided_slice %95 {offsets = [0, 0], sizes = [8, 127], strides = [1, 1]} : vector<8x128xf32> to vector<8x127xf32>
    %98 = tpu.concatenate %96, %97 in 1 : vector<8x1xf32>, vector<8x127xf32> -> vector<8x128xf32>
    %c-1_i32_27 = arith.constant -1 : i32
    %99 = vector.broadcast %c-1_i32_27 : i32 to vector<1x128xi32>
    %100 = arith.addi %16, %99 : vector<1x128xi32>
    %c0_i32_28 = arith.constant 0 : i32
    %101 = vector.broadcast %c0_i32_28 : i32 to vector<1x128xi32>
    %102 = arith.cmpi sge, %100, %101 : vector<1x128xi32>
    %c-1_i32_29 = arith.constant -1 : i32
    %103 = vector.broadcast %c-1_i32_29 : i32 to vector<1x128xi32>
    %104 = arith.addi %16, %103 : vector<1x128xi32>
    %c15_i32_30 = arith.constant 15 : i32
    %105 = vector.broadcast %c15_i32_30 : i32 to vector<1x128xi32>
    %106 = arith.cmpi sle, %104, %105 : vector<1x128xi32>
    %107 = arith.andi %102, %106 : vector<1x128xi1>
    %cst_31 = arith.constant 0.000000e+00 : f32
    %108 = vector.shape_cast %107 : vector<1x128xi1> to vector<1x128xi1>
    %109 = vector.broadcast %108 : vector<1x128xi1> to vector<8x128xi1>
    %110 = vector.broadcast %cst_31 : f32 to vector<8x128xf32>
    %111 = arith.select %109, %98, %110 : vector<8x128xi1>, vector<8x128xf32>
    %112 = vector.extract_strided_slice %60 {offsets = [0, 0], sizes = [8, 128], strides = [1, 1]} : vector<128x128xf32> to vector<8x128xf32>
    %113 = vector.extract_strided_slice %60 {offsets = [8, 0], sizes = [8, 128], strides = [1, 1]} : vector<128x128xf32> to vector<8x128xf32>
    %114 = vector.extract_strided_slice %60 {offsets = [16, 0], sizes = [8, 128], strides = [1, 1]} : vector<128x128xf32> to vector<8x128xf32>
    %115 = vector.extract_strided_slice %60 {offsets = [24, 0], sizes = [8, 128], strides = [1, 1]} : vector<128x128xf32> to vector<8x128xf32>
    %116 = vector.extract_strided_slice %60 {offsets = [32, 0], sizes = [8, 128], strides = [1, 1]} : vector<128x128xf32> to vector<8x128xf32>
    %117 = vector.extract_strided_slice %60 {offsets = [40, 0], sizes = [8, 128], strides = [1, 1]} : vector<128x128xf32> to vector<8x128xf32>
    %118 = vector.extract_strided_slice %60 {offsets = [48, 0], sizes = [8, 128], strides = [1, 1]} : vector<128x128xf32> to vector<8x128xf32>
    %119 = vector.extract_strided_slice %60 {offsets = [56, 0], sizes = [8, 128], strides = [1, 1]} : vector<128x128xf32> to vector<8x128xf32>
    %120 = vector.extract_strided_slice %60 {offsets = [64, 0], sizes = [8, 128], strides = [1, 1]} : vector<128x128xf32> to vector<8x128xf32>
    %121 = vector.extract_strided_slice %60 {offsets = [72, 0], sizes = [8, 128], strides = [1, 1]} : vector<128x128xf32> to vector<8x128xf32>
    %122 = vector.extract_strided_slice %60 {offsets = [80, 0], sizes = [8, 128], strides = [1, 1]} : vector<128x128xf32> to vector<8x128xf32>
    %123 = vector.extract_strided_slice %60 {offsets = [88, 0], sizes = [8, 128], strides = [1, 1]} : vector<128x128xf32> to vector<8x128xf32>
    %124 = vector.extract_strided_slice %60 {offsets = [96, 0], sizes = [8, 128], strides = [1, 1]} : vector<128x128xf32> to vector<8x128xf32>
    %125 = vector.extract_strided_slice %60 {offsets = [104, 0], sizes = [8, 128], strides = [1, 1]} : vector<128x128xf32> to vector<8x128xf32>
    %126 = vector.extract_strided_slice %60 {offsets = [112, 0], sizes = [8, 128], strides = [1, 1]} : vector<128x128xf32> to vector<8x128xf32>
    %127 = vector.extract_strided_slice %60 {offsets = [120, 0], sizes = [8, 128], strides = [1, 1]} : vector<128x128xf32> to vector<8x128xf32>
    %128 = vector.extract_strided_slice %60 {offsets = [0, 0], sizes = [8, 128], strides = [1, 1]} : vector<128x128xf32> to vector<8x128xf32>
    %129 = vector.extract_strided_slice %128 {offsets = [0, 1], sizes = [8, 127], strides = [1, 1]} : vector<8x128xf32> to vector<8x127xf32>
    %130 = vector.extract_strided_slice %128 {offsets = [0, 0], sizes = [8, 1], strides = [1, 1]} : vector<8x128xf32> to vector<8x1xf32>
    %131 = tpu.concatenate %129, %130 in 1 : vector<8x127xf32>, vector<8x1xf32> -> vector<8x128xf32>
    %c1_i32_32 = arith.constant 1 : i32
    %132 = vector.broadcast %c1_i32_32 : i32 to vector<1x128xi32>
    %133 = arith.addi %16, %132 : vector<1x128xi32>
    %c0_i32_33 = arith.constant 0 : i32
    %134 = vector.broadcast %c0_i32_33 : i32 to vector<1x128xi32>
    %135 = arith.cmpi sge, %133, %134 : vector<1x128xi32>
    %c1_i32_34 = arith.constant 1 : i32
    %136 = vector.broadcast %c1_i32_34 : i32 to vector<1x128xi32>
    %137 = arith.addi %16, %136 : vector<1x128xi32>
    %c15_i32_35 = arith.constant 15 : i32
    %138 = vector.broadcast %c15_i32_35 : i32 to vector<1x128xi32>
    %139 = arith.cmpi sle, %137, %138 : vector<1x128xi32>
    %140 = arith.andi %135, %139 : vector<1x128xi1>
    %cst_36 = arith.constant 0.000000e+00 : f32
    %141 = vector.shape_cast %140 : vector<1x128xi1> to vector<1x128xi1>
    %142 = vector.broadcast %141 : vector<1x128xi1> to vector<8x128xi1>
    %143 = vector.broadcast %cst_36 : f32 to vector<8x128xf32>
    %144 = arith.select %142, %131, %143 : vector<8x128xi1>, vector<8x128xf32>
    %145 = vector.extract_strided_slice %60 {offsets = [8, 0], sizes = [8, 128], strides = [1, 1]} : vector<128x128xf32> to vector<8x128xf32>
    %146 = vector.extract_strided_slice %145 {offsets = [0, 1], sizes = [8, 127], strides = [1, 1]} : vector<8x128xf32> to vector<8x127xf32>
    %147 = vector.extract_strided_slice %145 {offsets = [0, 0], sizes = [8, 1], strides = [1, 1]} : vector<8x128xf32> to vector<8x1xf32>
    %148 = tpu.concatenate %146, %147 in 1 : vector<8x127xf32>, vector<8x1xf32> -> vector<8x128xf32>
    %c1_i32_37 = arith.constant 1 : i32
    %149 = vector.broadcast %c1_i32_37 : i32 to vector<1x128xi32>
    %150 = arith.addi %16, %149 : vector<1x128xi32>
    %c0_i32_38 = arith.constant 0 : i32
    %151 = vector.broadcast %c0_i32_38 : i32 to vector<1x128xi32>
    %152 = arith.cmpi sge, %150, %151 : vector<1x128xi32>
    %c1_i32_39 = arith.constant 1 : i32
    %153 = vector.broadcast %c1_i32_39 : i32 to vector<1x128xi32>
    %154 = arith.addi %16, %153 : vector<1x128xi32>
    %c15_i32_40 = arith.constant 15 : i32
    %155 = vector.broadcast %c15_i32_40 : i32 to vector<1x128xi32>
    %156 = arith.cmpi sle, %154, %155 : vector<1x128xi32>
    %157 = arith.andi %152, %156 : vector<1x128xi1>
    %cst_41 = arith.constant 0.000000e+00 : f32
    %158 = vector.shape_cast %157 : vector<1x128xi1> to vector<1x128xi1>
    %159 = vector.broadcast %158 : vector<1x128xi1> to vector<8x128xi1>
    %160 = vector.broadcast %cst_41 : f32 to vector<8x128xf32>
    %161 = arith.select %159, %148, %160 : vector<8x128xi1>, vector<8x128xf32>
    %162 = vector.extract_strided_slice %60 {offsets = [16, 0], sizes = [8, 128], strides = [1, 1]} : vector<128x128xf32> to vector<8x128xf32>
    %163 = vector.extract_strided_slice %162 {offsets = [0, 1], sizes = [8, 127], strides = [1, 1]} : vector<8x128xf32> to vector<8x127xf32>
    %164 = vector.extract_strided_slice %162 {offsets = [0, 0], sizes = [8, 1], strides = [1, 1]} : vector<8x128xf32> to vector<8x1xf32>
    %165 = tpu.concatenate %163, %164 in 1 : vector<8x127xf32>, vector<8x1xf32> -> vector<8x128xf32>
    %c1_i32_42 = arith.constant 1 : i32
    %166 = vector.broadcast %c1_i32_42 : i32 to vector<1x128xi32>
    %167 = arith.addi %16, %166 : vector<1x128xi32>
    %c0_i32_43 = arith.constant 0 : i32
    %168 = vector.broadcast %c0_i32_43 : i32 to vector<1x128xi32>
    %169 = arith.cmpi sge, %167, %168 : vector<1x128xi32>
    %c1_i32_44 = arith.constant 1 : i32
    %170 = vector.broadcast %c1_i32_44 : i32 to vector<1x128xi32>
    %171 = arith.addi %16, %170 : vector<1x128xi32>
    %c15_i32_45 = arith.constant 15 : i32
    %172 = vector.broadcast %c15_i32_45 : i32 to vector<1x128xi32>
    %173 = arith.cmpi sle, %171, %172 : vector<1x128xi32>
    %174 = arith.andi %169, %173 : vector<1x128xi1>
    %cst_46 = arith.constant 0.000000e+00 : f32
    %175 = vector.shape_cast %174 : vector<1x128xi1> to vector<1x128xi1>
    %176 = vector.broadcast %175 : vector<1x128xi1> to vector<8x128xi1>
    %177 = vector.broadcast %cst_46 : f32 to vector<8x128xf32>
    %178 = arith.select %176, %165, %177 : vector<8x128xi1>, vector<8x128xf32>
    %179 = tpu.concatenate %77, %94, %111, %112, %113, %114, %115, %116, %117, %118, %119, %120, %121, %122, %123, %124 in 0 : vector<8x128xf32>, vector<8x128xf32>, vector<8x128xf32>, vector<8x128xf32>, vector<8x128xf32>, vector<8x128xf32>, vector<8x128xf32>, vector<8x128xf32>, vector<8x128xf32>, vector<8x128xf32>, vector<8x128xf32>, vector<8x128xf32>, vector<8x128xf32>, vector<8x128xf32>, vector<8x128xf32>, vector<8x128xf32> -> vector<128x128xf32>
    %180 = tpu.concatenate %125, %126, %127, %144, %161, %178 in 0 : vector<8x128xf32>, vector<8x128xf32>, vector<8x128xf32>, vector<8x128xf32>, vector<8x128xf32>, vector<8x128xf32> -> vector<48x128xf32>
    %181 = tpu.concatenate %179, %180 in 0 : vector<128x128xf32>, vector<48x128xf32> -> vector<176x128xf32>
    %c0_47 = arith.constant 0 : index
    %c0_48 = arith.constant 0 : index
    %182 = vector.load %arg4[%c0_47, %c0_48] : memref<256x176xf32, #tpu.memory_space<vmem>>, vector<256x176xf32>
    %cst_49 = arith.constant dense<0.000000e+00> : vector<256x128xf32>
    %183 = tpu.matmul %182, %181, %cst_49 {dimension_numbers = #tpu.dot_dimension_numbers<[1], [0], [0], [1], [0, 0, 1, 1], [], []>} : vector<256x176xf32>, vector<176x128xf32>, vector<256x128xf32> -> vector<256x128xf32>
    %c0_50 = arith.constant 0 : index
    %c0_51 = arith.constant 0 : index
    %184 = vector.load %arg5[%c0_50, %c0_51] : memref<64x1xf32, #tpu.memory_space<vmem>>, vector<64x1xf32>
    %cst_52 = arith.constant 0.000000e+00 : f32
    %185 = vector.broadcast %cst_52 : f32 to vector<64x128xf32>
    %186 = vector.extract_strided_slice %183 {offsets = [0, 0], sizes = [64, 128], strides = [1, 1]} : vector<256x128xf32> to vector<64x128xf32>
    %187 = vector.broadcast %184 : vector<64x1xf32> to vector<64x128xf32>
    %188 = arith.addf %186, %187 : vector<64x128xf32>
    %cst_53 = arith.constant 0.000000e+00 : f32
    %189 = vector.broadcast %cst_53 : f32 to vector<64x128xf32>
    %190 = arith.cmpf oge, %188, %189 : vector<64x128xf32>
    %cst_54 = arith.constant 2.000000e-01 : f32
    %191 = vector.broadcast %cst_54 : f32 to vector<64x128xf32>
    %192 = arith.mulf %191, %188 : vector<64x128xf32>
    %193 = arith.select %190, %188, %192 : vector<64x128xi1>, vector<64x128xf32>
    %194 = arith.addf %185, %193 : vector<64x128xf32>
    %195 = vector.extract_strided_slice %183 {offsets = [64, 0], sizes = [64, 128], strides = [1, 1]} : vector<256x128xf32> to vector<64x128xf32>
    %196 = vector.broadcast %184 : vector<64x1xf32> to vector<64x128xf32>
    %197 = arith.addf %195, %196 : vector<64x128xf32>
    %cst_55 = arith.constant 0.000000e+00 : f32
    %198 = vector.broadcast %cst_55 : f32 to vector<64x128xf32>
    %199 = arith.cmpf oge, %197, %198 : vector<64x128xf32>
    %cst_56 = arith.constant 2.000000e-01 : f32
    %200 = vector.broadcast %cst_56 : f32 to vector<64x128xf32>
    %201 = arith.mulf %200, %197 : vector<64x128xf32>
    %202 = arith.select %199, %197, %201 : vector<64x128xi1>, vector<64x128xf32>
    %203 = arith.addf %194, %202 : vector<64x128xf32>
    %204 = vector.extract_strided_slice %183 {offsets = [128, 0], sizes = [64, 128], strides = [1, 1]} : vector<256x128xf32> to vector<64x128xf32>
    %205 = vector.broadcast %184 : vector<64x1xf32> to vector<64x128xf32>
    %206 = arith.addf %204, %205 : vector<64x128xf32>
    %cst_57 = arith.constant 0.000000e+00 : f32
    %207 = vector.broadcast %cst_57 : f32 to vector<64x128xf32>
    %208 = arith.cmpf oge, %206, %207 : vector<64x128xf32>
    %cst_58 = arith.constant 2.000000e-01 : f32
    %209 = vector.broadcast %cst_58 : f32 to vector<64x128xf32>
    %210 = arith.mulf %209, %206 : vector<64x128xf32>
    %211 = arith.select %208, %206, %210 : vector<64x128xi1>, vector<64x128xf32>
    %212 = arith.addf %203, %211 : vector<64x128xf32>
    %213 = vector.extract_strided_slice %183 {offsets = [192, 0], sizes = [64, 128], strides = [1, 1]} : vector<256x128xf32> to vector<64x128xf32>
    %214 = vector.broadcast %184 : vector<64x1xf32> to vector<64x128xf32>
    %215 = arith.addf %213, %214 : vector<64x128xf32>
    %cst_59 = arith.constant 0.000000e+00 : f32
    %216 = vector.broadcast %cst_59 : f32 to vector<64x128xf32>
    %217 = arith.cmpf oge, %215, %216 : vector<64x128xf32>
    %cst_60 = arith.constant 2.000000e-01 : f32
    %218 = vector.broadcast %cst_60 : f32 to vector<64x128xf32>
    %219 = arith.mulf %218, %215 : vector<64x128xf32>
    %220 = arith.select %217, %215, %219 : vector<64x128xi1>, vector<64x128xf32>
    %221 = arith.addf %212, %220 : vector<64x128xf32>
    %cst_61 = arith.constant 2.500000e-01 : f32
    %222 = vector.broadcast %cst_61 : f32 to vector<64x128xf32>
    %223 = arith.mulf %221, %222 : vector<64x128xf32>
    %224 = vector.extract_strided_slice %223 {offsets = [16, 0], sizes = [16, 128], strides = [1, 1]} : vector<64x128xf32> to vector<16x128xf32>
    %225 = vector.extract_strided_slice %224 {offsets = [0, 127], sizes = [16, 1], strides = [1, 1]} : vector<16x128xf32> to vector<16x1xf32>
    %226 = vector.extract_strided_slice %224 {offsets = [0, 0], sizes = [16, 127], strides = [1, 1]} : vector<16x128xf32> to vector<16x127xf32>
    %227 = tpu.concatenate %225, %226 in 1 : vector<16x1xf32>, vector<16x127xf32> -> vector<16x128xf32>
    %c-1_i32_62 = arith.constant -1 : i32
    %228 = vector.broadcast %c-1_i32_62 : i32 to vector<1x128xi32>
    %229 = arith.addi %16, %228 : vector<1x128xi32>
    %c0_i32_63 = arith.constant 0 : i32
    %230 = vector.broadcast %c0_i32_63 : i32 to vector<1x128xi32>
    %231 = arith.cmpi sge, %229, %230 : vector<1x128xi32>
    %c-1_i32_64 = arith.constant -1 : i32
    %232 = vector.broadcast %c-1_i32_64 : i32 to vector<1x128xi32>
    %233 = arith.addi %16, %232 : vector<1x128xi32>
    %c15_i32_65 = arith.constant 15 : i32
    %234 = vector.broadcast %c15_i32_65 : i32 to vector<1x128xi32>
    %235 = arith.cmpi sle, %233, %234 : vector<1x128xi32>
    %236 = arith.andi %231, %235 : vector<1x128xi1>
    %cst_66 = arith.constant 0.000000e+00 : f32
    %237 = vector.shape_cast %236 : vector<1x128xi1> to vector<1x128xi1>
    %238 = vector.broadcast %237 : vector<1x128xi1> to vector<16x128xi1>
    %239 = vector.broadcast %cst_66 : f32 to vector<16x128xf32>
    %240 = arith.select %238, %227, %239 : vector<16x128xi1>, vector<16x128xf32>
    %241 = vector.extract_strided_slice %223 {offsets = [32, 0], sizes = [16, 128], strides = [1, 1]} : vector<64x128xf32> to vector<16x128xf32>
    %242 = vector.extract_strided_slice %241 {offsets = [0, 127], sizes = [16, 1], strides = [1, 1]} : vector<16x128xf32> to vector<16x1xf32>
    %243 = vector.extract_strided_slice %241 {offsets = [0, 0], sizes = [16, 127], strides = [1, 1]} : vector<16x128xf32> to vector<16x127xf32>
    %244 = tpu.concatenate %242, %243 in 1 : vector<16x1xf32>, vector<16x127xf32> -> vector<16x128xf32>
    %c-1_i32_67 = arith.constant -1 : i32
    %245 = vector.broadcast %c-1_i32_67 : i32 to vector<1x128xi32>
    %246 = arith.addi %16, %245 : vector<1x128xi32>
    %c0_i32_68 = arith.constant 0 : i32
    %247 = vector.broadcast %c0_i32_68 : i32 to vector<1x128xi32>
    %248 = arith.cmpi sge, %246, %247 : vector<1x128xi32>
    %c-1_i32_69 = arith.constant -1 : i32
    %249 = vector.broadcast %c-1_i32_69 : i32 to vector<1x128xi32>
    %250 = arith.addi %16, %249 : vector<1x128xi32>
    %c15_i32_70 = arith.constant 15 : i32
    %251 = vector.broadcast %c15_i32_70 : i32 to vector<1x128xi32>
    %252 = arith.cmpi sle, %250, %251 : vector<1x128xi32>
    %253 = arith.andi %248, %252 : vector<1x128xi1>
    %cst_71 = arith.constant 0.000000e+00 : f32
    %254 = vector.shape_cast %253 : vector<1x128xi1> to vector<1x128xi1>
    %255 = vector.broadcast %254 : vector<1x128xi1> to vector<16x128xi1>
    %256 = vector.broadcast %cst_71 : f32 to vector<16x128xf32>
    %257 = arith.select %255, %244, %256 : vector<16x128xi1>, vector<16x128xf32>
    %258 = vector.extract_strided_slice %223 {offsets = [48, 0], sizes = [16, 128], strides = [1, 1]} : vector<64x128xf32> to vector<16x128xf32>
    %259 = vector.extract_strided_slice %258 {offsets = [0, 127], sizes = [16, 1], strides = [1, 1]} : vector<16x128xf32> to vector<16x1xf32>
    %260 = vector.extract_strided_slice %258 {offsets = [0, 0], sizes = [16, 127], strides = [1, 1]} : vector<16x128xf32> to vector<16x127xf32>
    %261 = tpu.concatenate %259, %260 in 1 : vector<16x1xf32>, vector<16x127xf32> -> vector<16x128xf32>
    %c-1_i32_72 = arith.constant -1 : i32
    %262 = vector.broadcast %c-1_i32_72 : i32 to vector<1x128xi32>
    %263 = arith.addi %16, %262 : vector<1x128xi32>
    %c0_i32_73 = arith.constant 0 : i32
    %264 = vector.broadcast %c0_i32_73 : i32 to vector<1x128xi32>
    %265 = arith.cmpi sge, %263, %264 : vector<1x128xi32>
    %c-1_i32_74 = arith.constant -1 : i32
    %266 = vector.broadcast %c-1_i32_74 : i32 to vector<1x128xi32>
    %267 = arith.addi %16, %266 : vector<1x128xi32>
    %c15_i32_75 = arith.constant 15 : i32
    %268 = vector.broadcast %c15_i32_75 : i32 to vector<1x128xi32>
    %269 = arith.cmpi sle, %267, %268 : vector<1x128xi32>
    %270 = arith.andi %265, %269 : vector<1x128xi1>
    %cst_76 = arith.constant 0.000000e+00 : f32
    %271 = vector.shape_cast %270 : vector<1x128xi1> to vector<1x128xi1>
    %272 = vector.broadcast %271 : vector<1x128xi1> to vector<16x128xi1>
    %273 = vector.broadcast %cst_76 : f32 to vector<16x128xf32>
    %274 = arith.select %272, %261, %273 : vector<16x128xi1>, vector<16x128xf32>
    %275 = vector.extract_strided_slice %223 {offsets = [0, 0], sizes = [16, 128], strides = [1, 1]} : vector<64x128xf32> to vector<16x128xf32>
    %276 = vector.extract_strided_slice %223 {offsets = [16, 0], sizes = [16, 128], strides = [1, 1]} : vector<64x128xf32> to vector<16x128xf32>
    %277 = vector.extract_strided_slice %223 {offsets = [32, 0], sizes = [16, 128], strides = [1, 1]} : vector<64x128xf32> to vector<16x128xf32>
    %278 = vector.extract_strided_slice %223 {offsets = [48, 0], sizes = [16, 128], strides = [1, 1]} : vector<64x128xf32> to vector<16x128xf32>
    %279 = vector.extract_strided_slice %223 {offsets = [0, 0], sizes = [16, 128], strides = [1, 1]} : vector<64x128xf32> to vector<16x128xf32>
    %280 = vector.extract_strided_slice %279 {offsets = [0, 1], sizes = [16, 127], strides = [1, 1]} : vector<16x128xf32> to vector<16x127xf32>
    %281 = vector.extract_strided_slice %279 {offsets = [0, 0], sizes = [16, 1], strides = [1, 1]} : vector<16x128xf32> to vector<16x1xf32>
    %282 = tpu.concatenate %280, %281 in 1 : vector<16x127xf32>, vector<16x1xf32> -> vector<16x128xf32>
    %c1_i32_77 = arith.constant 1 : i32
    %283 = vector.broadcast %c1_i32_77 : i32 to vector<1x128xi32>
    %284 = arith.addi %16, %283 : vector<1x128xi32>
    %c0_i32_78 = arith.constant 0 : i32
    %285 = vector.broadcast %c0_i32_78 : i32 to vector<1x128xi32>
    %286 = arith.cmpi sge, %284, %285 : vector<1x128xi32>
    %c1_i32_79 = arith.constant 1 : i32
    %287 = vector.broadcast %c1_i32_79 : i32 to vector<1x128xi32>
    %288 = arith.addi %16, %287 : vector<1x128xi32>
    %c15_i32_80 = arith.constant 15 : i32
    %289 = vector.broadcast %c15_i32_80 : i32 to vector<1x128xi32>
    %290 = arith.cmpi sle, %288, %289 : vector<1x128xi32>
    %291 = arith.andi %286, %290 : vector<1x128xi1>
    %cst_81 = arith.constant 0.000000e+00 : f32
    %292 = vector.shape_cast %291 : vector<1x128xi1> to vector<1x128xi1>
    %293 = vector.broadcast %292 : vector<1x128xi1> to vector<16x128xi1>
    %294 = vector.broadcast %cst_81 : f32 to vector<16x128xf32>
    %295 = arith.select %293, %282, %294 : vector<16x128xi1>, vector<16x128xf32>
    %296 = vector.extract_strided_slice %223 {offsets = [16, 0], sizes = [16, 128], strides = [1, 1]} : vector<64x128xf32> to vector<16x128xf32>
    %297 = vector.extract_strided_slice %296 {offsets = [0, 1], sizes = [16, 127], strides = [1, 1]} : vector<16x128xf32> to vector<16x127xf32>
    %298 = vector.extract_strided_slice %296 {offsets = [0, 0], sizes = [16, 1], strides = [1, 1]} : vector<16x128xf32> to vector<16x1xf32>
    %299 = tpu.concatenate %297, %298 in 1 : vector<16x127xf32>, vector<16x1xf32> -> vector<16x128xf32>
    %c1_i32_82 = arith.constant 1 : i32
    %300 = vector.broadcast %c1_i32_82 : i32 to vector<1x128xi32>
    %301 = arith.addi %16, %300 : vector<1x128xi32>
    %c0_i32_83 = arith.constant 0 : i32
    %302 = vector.broadcast %c0_i32_83 : i32 to vector<1x128xi32>
    %303 = arith.cmpi sge, %301, %302 : vector<1x128xi32>
    %c1_i32_84 = arith.constant 1 : i32
    %304 = vector.broadcast %c1_i32_84 : i32 to vector<1x128xi32>
    %305 = arith.addi %16, %304 : vector<1x128xi32>
    %c15_i32_85 = arith.constant 15 : i32
    %306 = vector.broadcast %c15_i32_85 : i32 to vector<1x128xi32>
    %307 = arith.cmpi sle, %305, %306 : vector<1x128xi32>
    %308 = arith.andi %303, %307 : vector<1x128xi1>
    %cst_86 = arith.constant 0.000000e+00 : f32
    %309 = vector.shape_cast %308 : vector<1x128xi1> to vector<1x128xi1>
    %310 = vector.broadcast %309 : vector<1x128xi1> to vector<16x128xi1>
    %311 = vector.broadcast %cst_86 : f32 to vector<16x128xf32>
    %312 = arith.select %310, %299, %311 : vector<16x128xi1>, vector<16x128xf32>
    %313 = vector.extract_strided_slice %223 {offsets = [32, 0], sizes = [16, 128], strides = [1, 1]} : vector<64x128xf32> to vector<16x128xf32>
    %314 = vector.extract_strided_slice %313 {offsets = [0, 1], sizes = [16, 127], strides = [1, 1]} : vector<16x128xf32> to vector<16x127xf32>
    %315 = vector.extract_strided_slice %313 {offsets = [0, 0], sizes = [16, 1], strides = [1, 1]} : vector<16x128xf32> to vector<16x1xf32>
    %316 = tpu.concatenate %314, %315 in 1 : vector<16x127xf32>, vector<16x1xf32> -> vector<16x128xf32>
    %c1_i32_87 = arith.constant 1 : i32
    %317 = vector.broadcast %c1_i32_87 : i32 to vector<1x128xi32>
    %318 = arith.addi %16, %317 : vector<1x128xi32>
    %c0_i32_88 = arith.constant 0 : i32
    %319 = vector.broadcast %c0_i32_88 : i32 to vector<1x128xi32>
    %320 = arith.cmpi sge, %318, %319 : vector<1x128xi32>
    %c1_i32_89 = arith.constant 1 : i32
    %321 = vector.broadcast %c1_i32_89 : i32 to vector<1x128xi32>
    %322 = arith.addi %16, %321 : vector<1x128xi32>
    %c15_i32_90 = arith.constant 15 : i32
    %323 = vector.broadcast %c15_i32_90 : i32 to vector<1x128xi32>
    %324 = arith.cmpi sle, %322, %323 : vector<1x128xi32>
    %325 = arith.andi %320, %324 : vector<1x128xi1>
    %cst_91 = arith.constant 0.000000e+00 : f32
    %326 = vector.shape_cast %325 : vector<1x128xi1> to vector<1x128xi1>
    %327 = vector.broadcast %326 : vector<1x128xi1> to vector<16x128xi1>
    %328 = vector.broadcast %cst_91 : f32 to vector<16x128xf32>
    %329 = arith.select %327, %316, %328 : vector<16x128xi1>, vector<16x128xf32>
    %330 = tpu.concatenate %240, %257, %274, %275, %276, %277, %278, %295, %312, %329 in 0 : vector<16x128xf32>, vector<16x128xf32>, vector<16x128xf32>, vector<16x128xf32>, vector<16x128xf32>, vector<16x128xf32>, vector<16x128xf32>, vector<16x128xf32>, vector<16x128xf32>, vector<16x128xf32> -> vector<160x128xf32>
    %c0_92 = arith.constant 0 : index
    %c0_93 = arith.constant 0 : index
    %331 = vector.load %arg6[%c0_92, %c0_93] : memref<128x160xf32, #tpu.memory_space<vmem>>, vector<128x160xf32>
    %cst_94 = arith.constant dense<0.000000e+00> : vector<128x128xf32>
    %332 = tpu.matmul %331, %330, %cst_94 {dimension_numbers = #tpu.dot_dimension_numbers<[1], [0], [0], [1], [0, 0, 1, 1], [], []>} : vector<128x160xf32>, vector<160x128xf32>, vector<128x128xf32> -> vector<128x128xf32>
    %c0_95 = arith.constant 0 : index
    %c0_96 = arith.constant 0 : index
    %333 = vector.load %arg7[%c0_95, %c0_96] : memref<32x1xf32, #tpu.memory_space<vmem>>, vector<32x1xf32>
    %cst_97 = arith.constant 0.000000e+00 : f32
    %334 = vector.broadcast %cst_97 : f32 to vector<32x128xf32>
    %335 = vector.extract_strided_slice %332 {offsets = [0, 0], sizes = [32, 128], strides = [1, 1]} : vector<128x128xf32> to vector<32x128xf32>
    %336 = vector.broadcast %333 : vector<32x1xf32> to vector<32x128xf32>
    %337 = arith.addf %335, %336 : vector<32x128xf32>
    %cst_98 = arith.constant 0.000000e+00 : f32
    %338 = vector.broadcast %cst_98 : f32 to vector<32x128xf32>
    %339 = arith.cmpf oge, %337, %338 : vector<32x128xf32>
    %cst_99 = arith.constant 2.000000e-01 : f32
    %340 = vector.broadcast %cst_99 : f32 to vector<32x128xf32>
    %341 = arith.mulf %340, %337 : vector<32x128xf32>
    %342 = arith.select %339, %337, %341 : vector<32x128xi1>, vector<32x128xf32>
    %343 = arith.addf %334, %342 : vector<32x128xf32>
    %344 = vector.extract_strided_slice %332 {offsets = [32, 0], sizes = [32, 128], strides = [1, 1]} : vector<128x128xf32> to vector<32x128xf32>
    %345 = vector.broadcast %333 : vector<32x1xf32> to vector<32x128xf32>
    %346 = arith.addf %344, %345 : vector<32x128xf32>
    %cst_100 = arith.constant 0.000000e+00 : f32
    %347 = vector.broadcast %cst_100 : f32 to vector<32x128xf32>
    %348 = arith.cmpf oge, %346, %347 : vector<32x128xf32>
    %cst_101 = arith.constant 2.000000e-01 : f32
    %349 = vector.broadcast %cst_101 : f32 to vector<32x128xf32>
    %350 = arith.mulf %349, %346 : vector<32x128xf32>
    %351 = arith.select %348, %346, %350 : vector<32x128xi1>, vector<32x128xf32>
    %352 = arith.addf %343, %351 : vector<32x128xf32>
    %353 = vector.extract_strided_slice %332 {offsets = [64, 0], sizes = [32, 128], strides = [1, 1]} : vector<128x128xf32> to vector<32x128xf32>
    %354 = vector.broadcast %333 : vector<32x1xf32> to vector<32x128xf32>
    %355 = arith.addf %353, %354 : vector<32x128xf32>
    %cst_102 = arith.constant 0.000000e+00 : f32
    %356 = vector.broadcast %cst_102 : f32 to vector<32x128xf32>
    %357 = arith.cmpf oge, %355, %356 : vector<32x128xf32>
    %cst_103 = arith.constant 2.000000e-01 : f32
    %358 = vector.broadcast %cst_103 : f32 to vector<32x128xf32>
    %359 = arith.mulf %358, %355 : vector<32x128xf32>
    %360 = arith.select %357, %355, %359 : vector<32x128xi1>, vector<32x128xf32>
    %361 = arith.addf %352, %360 : vector<32x128xf32>
    %362 = vector.extract_strided_slice %332 {offsets = [96, 0], sizes = [32, 128], strides = [1, 1]} : vector<128x128xf32> to vector<32x128xf32>
    %363 = vector.broadcast %333 : vector<32x1xf32> to vector<32x128xf32>
    %364 = arith.addf %362, %363 : vector<32x128xf32>
    %cst_104 = arith.constant 0.000000e+00 : f32
    %365 = vector.broadcast %cst_104 : f32 to vector<32x128xf32>
    %366 = arith.cmpf oge, %364, %365 : vector<32x128xf32>
    %cst_105 = arith.constant 2.000000e-01 : f32
    %367 = vector.broadcast %cst_105 : f32 to vector<32x128xf32>
    %368 = arith.mulf %367, %364 : vector<32x128xf32>
    %369 = arith.select %366, %364, %368 : vector<32x128xi1>, vector<32x128xf32>
    %370 = arith.addf %361, %369 : vector<32x128xf32>
    %cst_106 = arith.constant 2.500000e-01 : f32
    %371 = vector.broadcast %cst_106 : f32 to vector<32x128xf32>
    %372 = arith.mulf %370, %371 : vector<32x128xf32>
    %c0_107 = arith.constant 0 : index
    %c0_108 = arith.constant 0 : index
    %c0_109 = arith.constant 0 : index
    %373 = vector.load %arg8[%c0_107, %c0_108, %c0_109] : memref<1x32x128xf32, #tpu.memory_space<vmem>>, vector<1x32x128xf32>
    %374 = vector.shape_cast %373 : vector<1x32x128xf32> to vector<32x128xf32>
    %375 = vector.shape_cast %372 : vector<32x128xf32> to vector<1x32x128xf32>
    tpu.vector_store %arg8[%c0_107, %c0_108, %c0_109], %375 {strides = array<i32>} : memref<1x32x128xf32, #tpu.memory_space<vmem>>, vector<1x32x128xf32>,
    return
  }
  func.func @transform_0(%arg0: i32) -> (i32, i32, i32) {
    %c0_i32 = arith.constant 0 : i32
    %c0_i32_0 = arith.constant 0 : i32
    %c0_i32_1 = arith.constant 0 : i32
    return %arg0, %c0_i32, %c0_i32_0 : i32, i32, i32
  }
  func.func @transform_1(%arg0: i32) -> (i32, i32) {
    %c0_i32 = arith.constant 0 : i32
    %c0_i32_0 = arith.constant 0 : i32
    %c0_i32_1 = arith.constant 0 : i32
    return %c0_i32, %c0_i32_0 : i32, i32
  }
  func.func @transform_2(%arg0: i32) -> (i32, i32) {
    %c0_i32 = arith.constant 0 : i32
    %c0_i32_0 = arith.constant 0 : i32
    %c0_i32_1 = arith.constant 0 : i32
    return %c0_i32, %c0_i32_0 : i32, i32
  }
  func.func @transform_3(%arg0: i32) -> (i32, i32) {
    %c0_i32 = arith.constant 0 : i32
    %c0_i32_0 = arith.constant 0 : i32
    %c0_i32_1 = arith.constant 0 : i32
    return %c0_i32, %c0_i32_0 : i32, i32
  }
  func.func @transform_4(%arg0: i32) -> (i32, i32) {
    %c0_i32 = arith.constant 0 : i32
    %c0_i32_0 = arith.constant 0 : i32
    %c0_i32_1 = arith.constant 0 : i32
    return %c0_i32, %c0_i32_0 : i32, i32
  }
  func.func @transform_5(%arg0: i32) -> (i32, i32) {
    %c0_i32 = arith.constant 0 : i32
    %c0_i32_0 = arith.constant 0 : i32
    %c0_i32_1 = arith.constant 0 : i32
    return %c0_i32, %c0_i32_0 : i32, i32
  }
  func.func @transform_6(%arg0: i32) -> (i32, i32) {
    %c0_i32 = arith.constant 0 : i32
    %c0_i32_0 = arith.constant 0 : i32
    %c0_i32_1 = arith.constant 0 : i32
    return %c0_i32, %c0_i32_0 : i32, i32
  }
  func.func @transform_7(%arg0: i32) -> (i32, i32, i32) {
    %c0_i32 = arith.constant 0 : i32
    %c0_i32_0 = arith.constant 0 : i32
    %c0_i32_1 = arith.constant 0 : i32
    return %arg0, %c0_i32, %c0_i32_0 : i32, i32, i32
  }
}

module attributes {stable_mosaic.version = 11 : i64} {
  func.func @fc_bn_kernel(%arg0: i32, %arg1: memref<16x512xf32, #tpu.memory_space<vmem>>, %arg2: memref<512x256xf32, #tpu.memory_space<vmem>>, %arg3: memref<1x256xf32, #tpu.memory_space<vmem>>, %arg4: memref<1x256xf32, #tpu.memory_space<vmem>>, %arg5: memref<1x256xf32, #tpu.memory_space<vmem>>, %arg6: memref<16x256xf32, #tpu.memory_space<vmem>>) attributes {dimension_semantics = [#tpu.dimension_semantics<parallel>], iteration_bounds = array<i64: 4>, scalar_prefetch = 0 : i64, scratch_operands = 0 : i64, tpu.core_type = #tpu.core_type<tc>, window_params = [{pipeline_mode = #tpu.pipeline_mode<synchronous>, transform_indices = @transform_0, window_bounds = array<i64: 16, 512>}, {transform_indices = @transform_1, window_bounds = array<i64: 512, 256>}, {transform_indices = @transform_2, window_bounds = array<i64: 1, 256>}, {transform_indices = @transform_3, window_bounds = array<i64: 1, 256>}, {transform_indices = @transform_4, window_bounds = array<i64: 1, 256>}, {transform_indices = @transform_5, window_bounds = array<i64: 16, 256>}]} {
    %c0 = arith.constant 0 : index
    %c0_0 = arith.constant 0 : index
    %0 = vector.load %arg1[%c0, %c0_0] : memref<16x512xf32, #tpu.memory_space<vmem>>, vector<16x512xf32>
    %c0_1 = arith.constant 0 : index
    %c0_2 = arith.constant 0 : index
    %1 = vector.load %arg2[%c0_1, %c0_2] : memref<512x256xf32, #tpu.memory_space<vmem>>, vector<512x256xf32>
    %cst = arith.constant dense<0.000000e+00> : vector<16x256xf32>
    %2 = tpu.matmul %0, %1, %cst {dimension_numbers = #tpu.dot_dimension_numbers<[1], [0], [0], [1], [0, 0, 1, 1], [], []>} : vector<16x512xf32>, vector<512x256xf32>, vector<16x256xf32> -> vector<16x256xf32>
    %c0_3 = arith.constant 0 : index
    %c0_4 = arith.constant 0 : index
    %3 = vector.load %arg3[%c0_3, %c0_4] : memref<1x256xf32, #tpu.memory_space<vmem>>, vector<1x256xf32>
    %4 = vector.broadcast %3 : vector<1x256xf32> to vector<16x256xf32>
    %5 = arith.addf %2, %4 : vector<16x256xf32>
    %cst_5 = arith.constant dense<0.000000e+00> : vector<256xf32>
    %6 = vector.multi_reduction <add>, %5, %cst_5 [0] : vector<16x256xf32> to vector<256xf32>
    %7 = vector.shape_cast %6 : vector<256xf32> to vector<1x256xf32>
    %cst_6 = arith.constant 1.600000e+01 : f32
    %8 = vector.broadcast %cst_6 : f32 to vector<1x256xf32>
    %9 = arith.divf %7, %8 : vector<1x256xf32>
    %10 = vector.broadcast %9 : vector<1x256xf32> to vector<16x256xf32>
    %11 = arith.subf %5, %10 : vector<16x256xf32>
    %12 = arith.mulf %11, %11 : vector<16x256xf32>
    %cst_7 = arith.constant dense<0.000000e+00> : vector<256xf32>
    %13 = vector.multi_reduction <add>, %12, %cst_7 [0] : vector<16x256xf32> to vector<256xf32>
    %14 = vector.shape_cast %13 : vector<256xf32> to vector<1x256xf32>
    %cst_8 = arith.constant 1.600000e+01 : f32
    %15 = vector.broadcast %cst_8 : f32 to vector<1x256xf32>
    %16 = arith.divf %14, %15 : vector<1x256xf32>
    %17 = vector.broadcast %9 : vector<1x256xf32> to vector<16x256xf32>
    %18 = arith.subf %5, %17 : vector<16x256xf32>
    %cst_9 = arith.constant 9.99999974E-6 : f32
    %19 = vector.broadcast %cst_9 : f32 to vector<1x256xf32>
    %20 = arith.addf %16, %19 : vector<1x256xf32>
    %21 = math.rsqrt %20 : vector<1x256xf32>
    %22 = vector.broadcast %21 : vector<1x256xf32> to vector<16x256xf32>
    %23 = arith.mulf %18, %22 : vector<16x256xf32>
    %c0_10 = arith.constant 0 : index
    %c0_11 = arith.constant 0 : index
    %24 = vector.load %arg4[%c0_10, %c0_11] : memref<1x256xf32, #tpu.memory_space<vmem>>, vector<1x256xf32>
    %25 = vector.broadcast %24 : vector<1x256xf32> to vector<16x256xf32>
    %26 = arith.mulf %23, %25 : vector<16x256xf32>
    %c0_12 = arith.constant 0 : index
    %c0_13 = arith.constant 0 : index
    %27 = vector.load %arg5[%c0_12, %c0_13] : memref<1x256xf32, #tpu.memory_space<vmem>>, vector<1x256xf32>
    %28 = vector.broadcast %27 : vector<1x256xf32> to vector<16x256xf32>
    %29 = arith.addf %26, %28 : vector<16x256xf32>
    %c0_14 = arith.constant 0 : index
    %c0_15 = arith.constant 0 : index
    %30 = vector.load %arg6[%c0_14, %c0_15] : memref<16x256xf32, #tpu.memory_space<vmem>>, vector<16x256xf32>
    tpu.vector_store %arg6[%c0_14, %c0_15], %29 {strides = array<i32>} : memref<16x256xf32, #tpu.memory_space<vmem>>, vector<16x256xf32>,
    return
  }
  func.func @transform_0(%arg0: i32) -> (i32, i32) {
    %c0_i32 = arith.constant 0 : i32
    %c0_i32_0 = arith.constant 0 : i32
    %c0_i32_1 = arith.constant 0 : i32
    return %c0_i32, %c0_i32_0 : i32, i32
  }
  func.func @transform_1(%arg0: i32) -> (i32, i32) {
    %c0_i32 = arith.constant 0 : i32
    %c0_i32_0 = arith.constant 0 : i32
    return %c0_i32, %arg0 : i32, i32
  }
  func.func @transform_2(%arg0: i32) -> (i32, i32) {
    %c0_i32 = arith.constant 0 : i32
    %c0_i32_0 = arith.constant 0 : i32
    return %c0_i32, %arg0 : i32, i32
  }
  func.func @transform_3(%arg0: i32) -> (i32, i32) {
    %c0_i32 = arith.constant 0 : i32
    %c0_i32_0 = arith.constant 0 : i32
    return %c0_i32, %arg0 : i32, i32
  }
  func.func @transform_4(%arg0: i32) -> (i32, i32) {
    %c0_i32 = arith.constant 0 : i32
    %c0_i32_0 = arith.constant 0 : i32
    return %c0_i32, %arg0 : i32, i32
  }
  func.func @transform_5(%arg0: i32) -> (i32, i32) {
    %c0_i32 = arith.constant 0 : i32
    %c0_i32_0 = arith.constant 0 : i32
    return %c0_i32, %arg0 : i32, i32
  }
}

</mosaic_0001>

<llo_original>
// kernel: tile.13
$region0: #{tile.13}
  #allocation0 [shape = 's32[1]{0}', space=sflag, size = 0x4, scoped, tag = 'scoped memory for tile.13']
  %s0 = inlined_call_operand.vmem [shape: f32[8], index: 0, kind: input, shape index: {}]
  %s1 = inlined_call_operand.vmem [shape: f32[16,8], index: 1, kind: output, shape index: {}]
  // Predicated region
  $region2: #{tile.13} parent=0 // pred_check
    _
  $region3: #{tile.13} parent=0 // pred_check_branch
    %3 = sbr.rel (0) target = $region5
  $region4: #{tile.13} parent=0 // pred_region
    _
  $region5: #{tile.13} parent=0 // pred_fallthru
    _
  %v4 = vld [vmem:[%s0] ss:$0 sm:$0xff]
  %5 = vst [vmem:[%s1] sm:$0xff] %v4
  %s6 = scalar_lea.vmem %s1, 8
  %7 = vst [vmem:[%s6] sm:$0xff] %v4

// kernel: tile.0
$region0: #{tile.0}
  %s0 = inlined_call_operand.vmem [shape: f32[16,8], index: 0, kind: input, shape index: {}]
  %s1 = inlined_call_operand.vmem [shape: f32[128,1], index: 1, kind: output, shape index: {}]
  %v2 = vld [vmem:[%s0] sm:$0xff]
  %vm3 = vcmask 7168
  %4 = vst.msk [vmem:[%s1] ss:$8 sm:$0xf] %vm3, %v2
  %5 = vst.msk [vmem:[%s1] ss:$8 sm:$0xf0] %vm3, %v2
  %s6 = scalar_lea.vmem %s0, 8
  %v7 = vld [vmem:[%s6] sm:$0xff]
  %vm8 = vcmask 7168
  %s9 = scalar_lea.vmem %s1, 64
  %10 = vst.msk [vmem:[%s9] ss:$8 sm:$0xf] %vm8, %v7
  %s11 = scalar_lea.vmem %s1, 64
  %12 = vst.msk [vmem:[%s11] ss:$8 sm:$0xf0] %vm8, %v7
  %v13 = vld [vmem:[%s0] sm:$0xff]
  %14 = vrot.lane.b32.xlu0 %v13, 127
  %v15 = vpop.permute.xlu0 %14
  %vm16 = vcmask 7168
  %s17 = scalar_lea.vmem %s1, 1
  %18 = vst.msk [vmem:[%s17] ss:$8 sm:$0xf] %vm16, %v15
  %s19 = scalar_lea.vmem %s1, 1
  %20 = vst.msk [vmem:[%s19] ss:$8 sm:$0xf0] %vm16, %v15
  %s21 = scalar_lea.vmem %s0, 8
  %v22 = vld [vmem:[%s21] sm:$0xff]
  %23 = vrot.lane.b32.xlu0 %v22, 127
  %v24 = vpop.permute.xlu0 %23
  %vm25 = vcmask 7168
  %s26 = scalar_lea.vmem %s1, 65
  %27 = vst.msk [vmem:[%s26] ss:$8 sm:$0xf] %vm25, %v24
  %s28 = scalar_lea.vmem %s1, 65
  %29 = vst.msk [vmem:[%s28] ss:$8 sm:$0xf0] %vm25, %v24
  %v30 = vld [vmem:[%s0] sm:$0xff]
  %31 = vrot.lane.b32.xlu0 %v30, 126
  %v32 = vpop.permute.xlu0 %31
  %vm33 = vcmask 7168
  %s34 = scalar_lea.vmem %s1, 2
  %35 = vst.msk [vmem:[%s34] ss:$8 sm:$0xf] %vm33, %v32
  %s36 = scalar_lea.vmem %s1, 2
  %37 = vst.msk [vmem:[%s36] ss:$8 sm:$0xf0] %vm33, %v32
  %s38 = scalar_lea.vmem %s0, 8
  %v39 = vld [vmem:[%s38] sm:$0xff]
  %40 = vrot.lane.b32.xlu0 %v39, 126
  %v41 = vpop.permute.xlu0 %40
  %vm42 = vcmask 7168
  %s43 = scalar_lea.vmem %s1, 66
  %44 = vst.msk [vmem:[%s43] ss:$8 sm:$0xf] %vm42, %v41
  %s45 = scalar_lea.vmem %s1, 66
  %46 = vst.msk [vmem:[%s45] ss:$8 sm:$0xf0] %vm42, %v41
  %v47 = vld [vmem:[%s0] sm:$0xff]
  %48 = vrot.lane.b32.xlu0 %v47, 125
  %v49 = vpop.permute.xlu0 %48
  %vm50 = vcmask 7168
  %s51 = scalar_lea.vmem %s1, 3
  %52 = vst.msk [vmem:[%s51] ss:$8 sm:$0xf] %vm50, %v49
  %s53 = scalar_lea.vmem %s1, 3
  %54 = vst.msk [vmem:[%s53] ss:$8 sm:$0xf0] %vm50, %v49
  %s55 = scalar_lea.vmem %s0, 8
  %v56 = vld [vmem:[%s55] sm:$0xff]
  %57 = vrot.lane.b32.xlu0 %v56, 125
  %v58 = vpop.permute.xlu0 %57
  %vm59 = vcmask 7168
  %s60 = scalar_lea.vmem %s1, 67
  %61 = vst.msk [vmem:[%s60] ss:$8 sm:$0xf] %vm59, %v58
  %s62 = scalar_lea.vmem %s1, 67
  %63 = vst.msk [vmem:[%s62] ss:$8 sm:$0xf0] %vm59, %v58
  %v64 = vld [vmem:[%s0] sm:$0xff]
  %65 = vrot.lane.b32.xlu0 %v64, 124
  %v66 = vpop.permute.xlu0 %65
  %vm67 = vcmask 7168
  %s68 = scalar_lea.vmem %s1, 4
  %69 = vst.msk [vmem:[%s68] ss:$8 sm:$0xf] %vm67, %v66
  %s70 = scalar_lea.vmem %s1, 4
  %71 = vst.msk [vmem:[%s70] ss:$8 sm:$0xf0] %vm67, %v66
  %s72 = scalar_lea.vmem %s0, 8
  %v73 = vld [vmem:[%s72] sm:$0xff]
  %74 = vrot.lane.b32.xlu0 %v73, 124
  %v75 = vpop.permute.xlu0 %74
  %vm76 = vcmask 7168
  %s77 = scalar_lea.vmem %s1, 68
  %78 = vst.msk [vmem:[%s77] ss:$8 sm:$0xf] %vm76, %v75
  %s79 = scalar_lea.vmem %s1, 68
  %80 = vst.msk [vmem:[%s79] ss:$8 sm:$0xf0] %vm76, %v75
  %v81 = vld [vmem:[%s0] sm:$0xff]
  %82 = vrot.lane.b32.xlu0 %v81, 123
  %v83 = vpop.permute.xlu0 %82
  %vm84 = vcmask 7168
  %s85 = scalar_lea.vmem %s1, 5
  %86 = vst.msk [vmem:[%s85] ss:$8 sm:$0xf] %vm84, %v83
  %s87 = scalar_lea.vmem %s1, 5
  %88 = vst.msk [vmem:[%s87] ss:$8 sm:$0xf0] %vm84, %v83
  %s89 = scalar_lea.vmem %s0, 8
  %v90 = vld [vmem:[%s89] sm:$0xff]
  %91 = vrot.lane.b32.xlu0 %v90, 123
  %v92 = vpop.permute.xlu0 %91
  %vm93 = vcmask 7168
  %s94 = scalar_lea.vmem %s1, 69
  %95 = vst.msk [vmem:[%s94] ss:$8 sm:$0xf] %vm93, %v92
  %s96 = scalar_lea.vmem %s1, 69
  %97 = vst.msk [vmem:[%s96] ss:$8 sm:$0xf0] %vm93, %v92
  %v98 = vld [vmem:[%s0] sm:$0xff]
  %99 = vrot.lane.b32.xlu0 %v98, 122
  %v100 = vpop.permute.xlu0 %99
  %vm101 = vcmask 7168
  %s102 = scalar_lea.vmem %s1, 6
  %103 = vst.msk [vmem:[%s102] ss:$8 sm:$0xf] %vm101, %v100
  %s104 = scalar_lea.vmem %s1, 6
  %105 = vst.msk [vmem:[%s104] ss:$8 sm:$0xf0] %vm101, %v100
  %s106 = scalar_lea.vmem %s0, 8
  %v107 = vld [vmem:[%s106] sm:$0xff]
  %108 = vrot.lane.b32.xlu0 %v107, 122
  %v109 = vpop.permute.xlu0 %108
  %vm110 = vcmask 7168
  %s111 = scalar_lea.vmem %s1, 70
  %112 = vst.msk [vmem:[%s111] ss:$8 sm:$0xf] %vm110, %v109
  %s113 = scalar_lea.vmem %s1, 70
  %114 = vst.msk [vmem:[%s113] ss:$8 sm:$0xf0] %vm110, %v109
  %v115 = vld [vmem:[%s0] sm:$0xff]
  %116 = vrot.lane.b32.xlu0 %v115, 121
  %v117 = vpop.permute.xlu0 %116
  %vm118 = vcmask 7168
  %s119 = scalar_lea.vmem %s1, 7
  %120 = vst.msk [vmem:[%s119] ss:$8 sm:$0xf] %vm118, %v117
  %s121 = scalar_lea.vmem %s1, 7
  %122 = vst.msk [vmem:[%s121] ss:$8 sm:$0xf0] %vm118, %v117
  %s123 = scalar_lea.vmem %s0, 8
  %v124 = vld [vmem:[%s123] sm:$0xff]
  %125 = vrot.lane.b32.xlu0 %v124, 121
  %v126 = vpop.permute.xlu0 %125
  %vm127 = vcmask 7168
  %s128 = scalar_lea.vmem %s1, 71
  %129 = vst.msk [vmem:[%s128] ss:$8 sm:$0xf] %vm127, %v126
  %s130 = scalar_lea.vmem %s1, 71
  %131 = vst.msk [vmem:[%s130] ss:$8 sm:$0xf0] %vm127, %v126

// kernel: tile.18
$region0: #{tile.18}
  #allocation0 [shape = 's32[1]{0}', space=sflag, size = 0x4, scoped, tag = 'scoped memory for tile.18']
  %s0 = inlined_call_operand.vmem [shape: f32[16], index: 0, kind: input, shape index: {}]
  %s1 = inlined_call_operand.vmem [shape: f32[4,16], index: 1, kind: output, shape index: {}]
  // Predicated region
  $region2: #{tile.18} parent=0 // pred_check
    _
  $region3: #{tile.18} parent=0 // pred_check_branch
    %3 = sbr.rel (0) target = $region5
  $region4: #{tile.18} parent=0 // pred_region
    _
  $region5: #{tile.18} parent=0 // pred_fallthru
    _
  %v4 = vld [vmem:[%s0] ss:$0 sm:$0xff]
  %5 = vst [vmem:[%s1] sm:$0xf] %v4

// kernel: tile.1
$region0: #{tile.1}
  %s0 = inlined_call_operand.vmem [shape: f32[4,16], index: 0, kind: input, shape index: {}]
  %s1 = inlined_call_operand.vmem [shape: f32[64,1], index: 1, kind: output, shape index: {}]
  $region1: #{tile.1} parent=0
    #allocation0 [shape = 'u8[4096]{0}', space=vmem, size = 0x1000, scoped, tag = 'scoped mem for input reshape']
    %s3 = sshll.u32 1, 4
    %s4 = ssub.s32 %s3, 1
    %v5 = vld [vmem:[%s0] sm:%s4]
    %6 = vst [vmem:[#allocation0] sm:%s4] %v5
    %v7 = vld [vmem:[#allocation0] sm:$0xf]
    %vm8 = vcmask 7168
    %9 = vst.msk [vmem:[%s1] ss:$16 sm:$0x3] %vm8, %v7
    %10 = vst.msk [vmem:[%s1] ss:$16 sm:$0xc] %vm8, %v7
    %v11 = vld [vmem:[#allocation0] sm:$0xf]
    %12 = vrot.lane.b32.xlu0 %v11, 127
    %v13 = vpop.permute.xlu0 %12
    %vm14 = vcmask 7168
    %s15 = scalar_lea.vmem %s1, 1
    %16 = vst.msk [vmem:[%s15] ss:$16 sm:$0x3] %vm14, %v13
    %s17 = scalar_lea.vmem %s1, 1
    %18 = vst.msk [vmem:[%s17] ss:$16 sm:$0xc] %vm14, %v13
    %v19 = vld [vmem:[#allocation0] sm:$0xf]
    %20 = vrot.lane.b32.xlu0 %v19, 126
    %v21 = vpop.permute.xlu0 %20
    %vm22 = vcmask 7168
    %s23 = scalar_lea.vmem %s1, 2
    %24 = vst.msk [vmem:[%s23] ss:$16 sm:$0x3] %vm22, %v21
    %s25 = scalar_lea.vmem %s1, 2
    %26 = vst.msk [vmem:[%s25] ss:$16 sm:$0xc] %vm22, %v21
    %v27 = vld [vmem:[#allocation0] sm:$0xf]
    %28 = vrot.lane.b32.xlu0 %v27, 125
    %v29 = vpop.permute.xlu0 %28
    %vm30 = vcmask 7168
    %s31 = scalar_lea.vmem %s1, 3
    %32 = vst.msk [vmem:[%s31] ss:$16 sm:$0x3] %vm30, %v29
    %s33 = scalar_lea.vmem %s1, 3
    %34 = vst.msk [vmem:[%s33] ss:$16 sm:$0xc] %vm30, %v29
    %v35 = vld [vmem:[#allocation0] sm:$0xf]
    %36 = vrot.lane.b32.xlu0 %v35, 124
    %v37 = vpop.permute.xlu0 %36
    %vm38 = vcmask 7168
    %s39 = scalar_lea.vmem %s1, 4
    %40 = vst.msk [vmem:[%s39] ss:$16 sm:$0x3] %vm38, %v37
    %s41 = scalar_lea.vmem %s1, 4
    %42 = vst.msk [vmem:[%s41] ss:$16 sm:$0xc] %vm38, %v37
    %v43 = vld [vmem:[#allocation0] sm:$0xf]
    %44 = vrot.lane.b32.xlu0 %v43, 123
    %v45 = vpop.permute.xlu0 %44
    %vm46 = vcmask 7168
    %s47 = scalar_lea.vmem %s1, 5
    %48 = vst.msk [vmem:[%s47] ss:$16 sm:$0x3] %vm46, %v45
    %s49 = scalar_lea.vmem %s1, 5
    %50 = vst.msk [vmem:[%s49] ss:$16 sm:$0xc] %vm46, %v45
    %v51 = vld [vmem:[#allocation0] sm:$0xf]
    %52 = vrot.lane.b32.xlu0 %v51, 122
    %v53 = vpop.permute.xlu0 %52
    %vm54 = vcmask 7168
    %s55 = scalar_lea.vmem %s1, 6
    %56 = vst.msk [vmem:[%s55] ss:$16 sm:$0x3] %vm54, %v53
    %s57 = scalar_lea.vmem %s1, 6
    %58 = vst.msk [vmem:[%s57] ss:$16 sm:$0xc] %vm54, %v53
    %v59 = vld [vmem:[#allocation0] sm:$0xf]
    %60 = vrot.lane.b32.xlu0 %v59, 121
    %v61 = vpop.permute.xlu0 %60
    %vm62 = vcmask 7168
    %s63 = scalar_lea.vmem %s1, 7
    %64 = vst.msk [vmem:[%s63] ss:$16 sm:$0x3] %vm62, %v61
    %s65 = scalar_lea.vmem %s1, 7
    %66 = vst.msk [vmem:[%s65] ss:$16 sm:$0xc] %vm62, %v61
    %v67 = vld [vmem:[#allocation0] sm:$0xf]
    %68 = vrot.lane.b32.xlu0 %v67, 120
    %v69 = vpop.permute.xlu0 %68
    %vm70 = vcmask 7168
    %s71 = scalar_lea.vmem %s1, 8
    %72 = vst.msk [vmem:[%s71] ss:$16 sm:$0x3] %vm70, %v69
    %s73 = scalar_lea.vmem %s1, 8
    %74 = vst.msk [vmem:[%s73] ss:$16 sm:$0xc] %vm70, %v69
    %v75 = vld [vmem:[#allocation0] sm:$0xf]
    %76 = vrot.lane.b32.xlu0 %v75, 119
    %v77 = vpop.permute.xlu0 %76
    %vm78 = vcmask 7168
    %s79 = scalar_lea.vmem %s1, 9
    %80 = vst.msk [vmem:[%s79] ss:$16 sm:$0x3] %vm78, %v77
    %s81 = scalar_lea.vmem %s1, 9
    %82 = vst.msk [vmem:[%s81] ss:$16 sm:$0xc] %vm78, %v77
    %v83 = vld [vmem:[#allocation0] sm:$0xf]
    %84 = vrot.lane.b32.xlu0 %v83, 118
    %v85 = vpop.permute.xlu0 %84
    %vm86 = vcmask 7168
    %s87 = scalar_lea.vmem %s1, 10
    %88 = vst.msk [vmem:[%s87] ss:$16 sm:$0x3] %vm86, %v85
    %s89 = scalar_lea.vmem %s1, 10
    %90 = vst.msk [vmem:[%s89] ss:$16 sm:$0xc] %vm86, %v85
    %v91 = vld [vmem:[#allocation0] sm:$0xf]
    %92 = vrot.lane.b32.xlu0 %v91, 117
    %v93 = vpop.permute.xlu0 %92
    %vm94 = vcmask 7168
    %s95 = scalar_lea.vmem %s1, 11
    %96 = vst.msk [vmem:[%s95] ss:$16 sm:$0x3] %vm94, %v93
    %s97 = scalar_lea.vmem %s1, 11
    %98 = vst.msk [vmem:[%s97] ss:$16 sm:$0xc] %vm94, %v93
    %v99 = vld [vmem:[#allocation0] sm:$0xf]
    %100 = vrot.lane.b32.xlu0 %v99, 116
    %v101 = vpop.permute.xlu0 %100
    %vm102 = vcmask 7168
    %s103 = scalar_lea.vmem %s1, 12
    %104 = vst.msk [vmem:[%s103] ss:$16 sm:$0x3] %vm102, %v101
    %s105 = scalar_lea.vmem %s1, 12
    %106 = vst.msk [vmem:[%s105] ss:$16 sm:$0xc] %vm102, %v101
    %v107 = vld [vmem:[#allocation0] sm:$0xf]
    %108 = vrot.lane.b32.xlu0 %v107, 115
    %v109 = vpop.permute.xlu0 %108
    %vm110 = vcmask 7168
    %s111 = scalar_lea.vmem %s1, 13
    %112 = vst.msk [vmem:[%s111] ss:$16 sm:$0x3] %vm110, %v109
    %s113 = scalar_lea.vmem %s1, 13
    %114 = vst.msk [vmem:[%s113] ss:$16 sm:$0xc] %vm110, %v109
    %v115 = vld [vmem:[#allocation0] sm:$0xf]
    %116 = vrot.lane.b32.xlu0 %v115, 114
    %v117 = vpop.permute.xlu0 %116
    %vm118 = vcmask 7168
    %s119 = scalar_lea.vmem %s1, 14
    %120 = vst.msk [vmem:[%s119] ss:$16 sm:$0x3] %vm118, %v117
    %s121 = scalar_lea.vmem %s1, 14
    %122 = vst.msk [vmem:[%s121] ss:$16 sm:$0xc] %vm118, %v117
    %v123 = vld [vmem:[#allocation0] sm:$0xf]
    %124 = vrot.lane.b32.xlu0 %v123, 113
    %v125 = vpop.permute.xlu0 %124
    %vm126 = vcmask 7168
    %s127 = scalar_lea.vmem %s1, 15
    %128 = vst.msk [vmem:[%s127] ss:$16 sm:$0x3] %vm126, %v125
    %s129 = scalar_lea.vmem %s1, 15
    %130 = vst.msk [vmem:[%s129] ss:$16 sm:$0xc] %vm126, %v125

// kernel: _lambda_.2
$region0: #{_lambda_.2}
  #allocation0 [shape = 'u32[]', space=smem, size = 0x4, offset = 0x4, fixed_abs, tag = 'smem constant byte address 0x4 - core index']
  #allocation1 [shape = 'u32[144,128]{1,0:T(1,128)}', space=vmem, size = 0x12000, scoped, tag = 'internal scratch']
  %s0 = inlined_call_operand.vmem [shape: f32[2,88,128], index: 0, kind: input, shape index: {}]
  %s1 = inlined_call_operand.vmem [shape: f32[512,88], index: 1, kind: input, shape index: {}]
  %s2 = inlined_call_operand.vmem [shape: f32[128,1], index: 2, kind: input, shape index: {}]
  %s3 = inlined_call_operand.vmem [shape: f32[256,176], index: 3, kind: input, shape index: {}]
  %s4 = inlined_call_operand.vmem [shape: f32[64,1], index: 4, kind: input, shape index: {}]
  %s5 = inlined_call_operand.vmem [shape: f32[128,160], index: 5, kind: input, shape index: {}]
  %s6 = inlined_call_operand.vmem [shape: f32[32,1], index: 6, kind: input, shape index: {}]
  %s7 = inlined_call_operand.vmem [shape: f32[2,32,128], index: 7, kind: output, shape index: {}]
  %s8 = sld [smem:[#allocation0]]
  $region61: #{_lambda_.2} parent=0
    _
  %s10 = ssub.s32 1, %s8
  %s11 = scalar_select 0, %s10, %s8
  loop: start=0, step=1, limit=4
  $region2: #{_lambda_.2} parent=0 // loop_pre_header
    _
  $region3: #{_lambda_.2} parent=0 // loop_header
    %s13 = sphi 0, %s17
    %p14 = scmp.ge.s32.totalorder %s13, 4
    %s23 = sphi 0, %s25
    %s26 = sphi 0, %s23
    %s27 = sphi 0, %s26
    %s43 = sphi 0, %s27
    %s47 = sphi 0, %s47
    %s49 = sphi 0, %s47
    %s50 = sphi 0, %s49
    %s64 = sphi 0, %s50
    %s68 = sphi 0, %s68
    %s70 = sphi 0, %s68
    %s71 = sphi 0, %s70
    %s85 = sphi 0, %s71
    %s89 = sphi 0, %s89
    %s91 = sphi 0, %s89
    %s92 = sphi 0, %s91
    %s106 = sphi 0, %s92
    %s110 = sphi 0, %s110
    %s112 = sphi 0, %s110
    %s113 = sphi 0, %s112
    %s127 = sphi 0, %s113
    %s131 = sphi 0, %s131
    %s133 = sphi 0, %s131
    %s134 = sphi 0, %s133
    %s148 = sphi 0, %s134
    %s152 = sphi 0, %s152
    %s154 = sphi 0, %s152
    %s155 = sphi 0, %s154
    %s169 = sphi 0, %s155
    %s175 = sphi 0, %s177
    %s178 = sphi 0, %s175
    %s179 = sphi 0, %s178
    %s195 = sphi 0, %s179
  $region4: #{_lambda_.2} parent=0 // loop_header_branch
    %16 = sbr.rel (%p14) target = $region8
  $region5: #{_lambda_.2} parent=0 // loop_body
    %s18 = ssub.s32 %s13, 1
    %s19 = ssub.s32 %s13, 2
    %s20 = sadd.s32 %s13, 1
    %s21 = ssub.s32 %s13, %s20
    %p22 = scmp.eq.s32.totalorder %s21, 0
    %s24 = sadd.s32 %s23, 1
    %s25 = scalar_select %p22, %s23, %s24
    %p28 = pneg %p22
    %p29 = scmp.eq.s32.totalorder %s13, 1
    %p30 = por %p28, %p29
    %p31 = scmp.ne.s32.totalorder %s23, %s26
    %p32 = scmp.eq.s32.totalorder %s13, 0
    %p33 = por %p31, %p32
    %p34 = scmp.ne.s32.totalorder %s23, %s26
    %p35 = scmp.eq.s32.totalorder %s18, 1
    %p36 = por %p34, %p35
    %p37 = scmp.ne.s32.totalorder %s26, %s27
    %p38 = scmp.eq.s32.totalorder %s18, 0
    %p39 = por %p37, %p38
    %p40 = scmp.ne.s32.totalorder %s26, %s27
    %p41 = scmp.eq.s32.totalorder %s19, 1
    %p42 = por %p40, %p41
    %p44 = scmp.ne.s32.totalorder %s27, %s43
    %p45 = scmp.eq.s32.totalorder %s19, 0
    %p46 = por %p44, %p45
    %s48 = sadd.s32 %s47, 1
    %p51 = scmp.eq.s32.totalorder %s13, 1
    %p52 = scmp.ne.s32.totalorder %s47, %s49
    %p53 = scmp.eq.s32.totalorder %s13, 0
    %p54 = por %p52, %p53
    %p55 = scmp.ne.s32.totalorder %s47, %s49
    %p56 = scmp.eq.s32.totalorder %s18, 1
    %p57 = por %p55, %p56
    %p58 = scmp.ne.s32.totalorder %s49, %s50
    %p59 = scmp.eq.s32.totalorder %s18, 0
    %p60 = por %p58, %p59
    %p61 = scmp.ne.s32.totalorder %s49, %s50
    %p62 = scmp.eq.s32.totalorder %s19, 1
    %p63 = por %p61, %p62
    %p65 = scmp.ne.s32.totalorder %s50, %s64
    %p66 = scmp.eq.s32.totalorder %s19, 0
    %p67 = por %p65, %p66
    %s69 = sadd.s32 %s68, 1
    %p72 = scmp.eq.s32.totalorder %s13, 1
    %p73 = scmp.ne.s32.totalorder %s68, %s70
    %p74 = scmp.eq.s32.totalorder %s13, 0
    %p75 = por %p73, %p74
    %p76 = scmp.ne.s32.totalorder %s68, %s70
    %p77 = scmp.eq.s32.totalorder %s18, 1
    %p78 = por %p76, %p77
    %p79 = scmp.ne.s32.totalorder %s70, %s71
    %p80 = scmp.eq.s32.totalorder %s18, 0
    %p81 = por %p79, %p80
    %p82 = scmp.ne.s32.totalorder %s70, %s71
    %p83 = scmp.eq.s32.totalorder %s19, 1
    %p84 = por %p82, %p83
    %p86 = scmp.ne.s32.totalorder %s71, %s85
    %p87 = scmp.eq.s32.totalorder %s19, 0
    %p88 = por %p86, %p87
    %s90 = sadd.s32 %s89, 1
    %p93 = scmp.eq.s32.totalorder %s13, 1
    %p94 = scmp.ne.s32.totalorder %s89, %s91
    %p95 = scmp.eq.s32.totalorder %s13, 0
    %p96 = por %p94, %p95
    %p97 = scmp.ne.s32.totalorder %s89, %s91
    %p98 = scmp.eq.s32.totalorder %s18, 1
    %p99 = por %p97, %p98
    %p100 = scmp.ne.s32.totalorder %s91, %s92
    %p101 = scmp.eq.s32.totalorder %s18, 0
    %p102 = por %p100, %p101
    %p103 = scmp.ne.s32.totalorder %s91, %s92
    %p104 = scmp.eq.s32.totalorder %s19, 1
    %p105 = por %p103, %p104
    %p107 = scmp.ne.s32.totalorder %s92, %s106
    %p108 = scmp.eq.s32.totalorder %s19, 0
    %p109 = por %p107, %p108
    %s111 = sadd.s32 %s110, 1
    %p114 = scmp.eq.s32.totalorder %s13, 1
    %p115 = scmp.ne.s32.totalorder %s110, %s112
    %p116 = scmp.eq.s32.totalorder %s13, 0
    %p117 = por %p115, %p116
    %p118 = scmp.ne.s32.totalorder %s110, %s112
    %p119 = scmp.eq.s32.totalorder %s18, 1
    %p120 = por %p118, %p119
    %p121 = scmp.ne.s32.totalorder %s112, %s113
    %p122 = scmp.eq.s32.totalorder %s18, 0
    %p123 = por %p121, %p122
    %p124 = scmp.ne.s32.totalorder %s112, %s113
    %p125 = scmp.eq.s32.totalorder %s19, 1
    %p126 = por %p124, %p125
    %p128 = scmp.ne.s32.totalorder %s113, %s127
    %p129 = scmp.eq.s32.totalorder %s19, 0
    %p130 = por %p128, %p129
    %s132 = sadd.s32 %s131, 1
    %p135 = scmp.eq.s32.totalorder %s13, 1
    %p136 = scmp.ne.s32.totalorder %s131, %s133
    %p137 = scmp.eq.s32.totalorder %s13, 0
    %p138 = por %p136, %p137
    %p139 = scmp.ne.s32.totalorder %s131, %s133
    %p140 = scmp.eq.s32.totalorder %s18, 1
    %p141 = por %p139, %p140
    %p142 = scmp.ne.s32.totalorder %s133, %s134
    %p143 = scmp.eq.s32.totalorder %s18, 0
    %p144 = por %p142, %p143
    %p145 = scmp.ne.s32.totalorder %s133, %s134
    %p146 = scmp.eq.s32.totalorder %s19, 1
    %p147 = por %p145, %p146
    %p149 = scmp.ne.s32.totalorder %s134, %s148
    %p150 = scmp.eq.s32.totalorder %s19, 0
    %p151 = por %p149, %p150
    %s153 = sadd.s32 %s152, 1
    %p156 = scmp.eq.s32.totalorder %s13, 1
    %p157 = scmp.ne.s32.totalorder %s152, %s154
    %p158 = scmp.eq.s32.totalorder %s13, 0
    %p159 = por %p157, %p158
    %p160 = scmp.ne.s32.totalorder %s152, %s154
    %p161 = scmp.eq.s32.totalorder %s18, 1
    %p162 = por %p160, %p161
    %p163 = scmp.ne.s32.totalorder %s154, %s155
    %p164 = scmp.eq.s32.totalorder %s18, 0
    %p165 = por %p163, %p164
    %p166 = scmp.ne.s32.totalorder %s154, %s155
    %p167 = scmp.eq.s32.totalorder %s19, 1
    %p168 = por %p166, %p167
    %p170 = scmp.ne.s32.totalorder %s155, %s169
    %p171 = scmp.eq.s32.totalorder %s19, 0
    %p172 = por %p170, %p171
    %s173 = ssub.s32 %s13, %s20
    %p174 = scmp.eq.s32.totalorder %s173, 0
    %s176 = sadd.s32 %s175, 1
    %s177 = scalar_select %p174, %s175, %s176
    %p180 = pneg %p174
    %p181 = scmp.eq.s32.totalorder %s13, 1
    %p182 = por %p180, %p181
    %p183 = scmp.ne.s32.totalorder %s175, %s178
    %p184 = scmp.eq.s32.totalorder %s13, 0
    %p185 = por %p183, %p184
    %p186 = scmp.ne.s32.totalorder %s175, %s178
    %p187 = scmp.eq.s32.totalorder %s18, 1
    %p188 = por %p186, %p187
    %p189 = scmp.ne.s32.totalorder %s178, %s179
    %p190 = scmp.eq.s32.totalorder %s18, 0
    %p191 = por %p189, %p190
    %p192 = scmp.ne.s32.totalorder %s178, %s179
    %p193 = scmp.eq.s32.totalorder %s19, 1
    %p194 = por %p192, %p193
    %p196 = scmp.ne.s32.totalorder %s179, %s195
    %p197 = scmp.eq.s32.totalorder %s19, 0
    %p198 = por %p196, %p197
    %p199 = scmp.le.s32.totalorder 1, %s13
    %p200 = scmp.lt.s32.totalorder %s13, 3
    %p201 = pnand %p199, %p200
    %p202 = pneg %p201
    // Predicated region
    $region9: #{_lambda_.2} parent=5 // pred_check
      _
    $region10: #{_lambda_.2} parent=5 // pred_check_branch
      %204 = sbr.rel (%p201) target = $region12
    $region11: #{_lambda_.2} parent=5 // pred_region
      %s205 = ssub.s32 %s13, 1
      // Predicated region
      $region13: #{_lambda_.2} parent=11 // pred_check
        %p206 = pneg %p60
      $region14: #{_lambda_.2} parent=11 // pred_check_branch
        %208 = sbr.rel (%p206) target = $region16
      $region15: #{_lambda_.2} parent=11 // pred_region
        _
      $region16: #{_lambda_.2} parent=11 // pred_fallthru
        _
      // Predicated region
      $region17: #{_lambda_.2} parent=11 // pred_check
        %p209 = pneg %p81
      $region18: #{_lambda_.2} parent=11 // pred_check_branch
        %211 = sbr.rel (%p209) target = $region20
      $region19: #{_lambda_.2} parent=11 // pred_region
        _
      $region20: #{_lambda_.2} parent=11 // pred_fallthru
        _
      // Predicated region
      $region21: #{_lambda_.2} parent=11 // pred_check
        %p212 = pneg %p102
      $region22: #{_lambda_.2} parent=11 // pred_check_branch
        %214 = sbr.rel (%p212) target = $region24
      $region23: #{_lambda_.2} parent=11 // pred_region
        _
      $region24: #{_lambda_.2} parent=11 // pred_fallthru
        _
      // Predicated region
      $region25: #{_lambda_.2} parent=11 // pred_check
        %p215 = pneg %p123
      $region26: #{_lambda_.2} parent=11 // pred_check_branch
        %217 = sbr.rel (%p215) target = $region28
      $region27: #{_lambda_.2} parent=11 // pred_region
        _
      $region28: #{_lambda_.2} parent=11 // pred_fallthru
        _
      // Predicated region
      $region29: #{_lambda_.2} parent=11 // pred_check
        %p218 = pneg %p144
      $region30: #{_lambda_.2} parent=11 // pred_check_branch
        %220 = sbr.rel (%p218) target = $region32
      $region31: #{_lambda_.2} parent=11 // pred_region
        _
      $region32: #{_lambda_.2} parent=11 // pred_fallthru
        _
      // Predicated region
      $region33: #{_lambda_.2} parent=11 // pred_check
        %p221 = pneg %p165
      $region34: #{_lambda_.2} parent=11 // pred_check_branch
        %223 = sbr.rel (%p221) target = $region36
      $region35: #{_lambda_.2} parent=11 // pred_region
        _
      $region36: #{_lambda_.2} parent=11 // pred_fallthru
        _
    $region12: #{_lambda_.2} parent=5 // pred_fallthru
      _
    %p224 = scmp.lt.s32.totalorder %s13, 2
    // Predicated region
    $region37: #{_lambda_.2} parent=5 // pred_check
      %p225 = pneg %p224
    $region38: #{_lambda_.2} parent=5 // pred_check_branch
      %227 = sbr.rel (%p225) target = $region40
    $region39: #{_lambda_.2} parent=5 // pred_region
      // Predicated region
      $region41: #{_lambda_.2} parent=39 // pred_check
        %p228 = pneg %p33
      $region42: #{_lambda_.2} parent=39 // pred_check_branch
        %230 = sbr.rel (%p228) target = $region44
      $region43: #{_lambda_.2} parent=39 // pred_region
        %p231 = scmp.lt.s32.totalorder %s13, 1
        %s232 = scalar_select %p231, %s13, 1
        %s233 = smul.addr %s232, 11
        %s234 = smul.addr %s233, 8
        %s235 = scalar_lea.vmem %s0, %s234
      $region44: #{_lambda_.2} parent=39 // pred_fallthru
        _
    $region40: #{_lambda_.2} parent=5 // pred_fallthru
      _
    %p236 = scmp.le.s32.totalorder 1, %s13
    %p237 = scmp.lt.s32.totalorder %s13, 3
    %p238 = pnand %p236, %p237
    %p239 = pneg %p238
    // Predicated region
    $region45: #{_lambda_.2} parent=5 // pred_check
      _
    $region46: #{_lambda_.2} parent=5 // pred_check_branch
      %241 = sbr.rel (%p238) target = $region48
    $region47: #{_lambda_.2} parent=5 // pred_region
      %s242 = ssub.s32 %s13, 1
      %p243 = scmp.lt.s32.totalorder %s18, 1
      %s244 = scalar_select %p243, %s18, 1
      %s245 = smul.addr %s244, 11
      %s246 = smul.addr %s245, 8
      %s247 = scalar_lea.vmem %s0, %s246
      %p248 = pneg %p39
      %p249 = pneg %p36
      %p250 = pneg %p60
      %p251 = pneg %p57
      %p252 = pneg %p81
      %p253 = pneg %p78
      %p254 = pneg %p102
      %p255 = pneg %p99
      %p256 = pneg %p123
      %p257 = pneg %p120
      %p258 = pneg %p144
      %p259 = pneg %p141
      %p260 = pneg %p165
      %p261 = pneg %p162
      %p262 = pneg %p191
      %p263 = pneg %p188
      %p264 = scmp.lt.s32.totalorder %s18, 1
      %s265 = scalar_select %p264, %s18, 1
      %s266 = smul.addr %s265, 4
      %s267 = smul.addr %s266, 8
      %s268 = scalar_lea.vmem %s7, %s267
      %p269 = scmp.lt.s32.totalorder %s18, 1
      %s270 = scalar_select %p269, %s18, 1
      %s271 = smul.addr %s270, 11
      %s272 = smul.addr %s271, 8
      %s273 = scalar_lea.vmem %s0, %s272
      %p274 = scmp.lt.s32.totalorder %s18, 1
      %s275 = scalar_select %p274, %s18, 1
      %s276 = smul.addr %s275, 4
      %s277 = smul.addr %s276, 8
      %s278 = scalar_lea.vmem %s7, %s277
      %v279 = vlaneseq
      %v280 = vand.u32 %v279, 127
      %vm281 = vcmp.lt.s32.totalorder %v280, 0
      %v282 = vsub.s32 0, %v280
      %v283 = vsel %vm281, %v282, %v280
      %v284 = vshrl.u32 %v283, 4
      %v285 = vand.u32 %v283, 15
      %v286 = vsub.s32 0, %v285
      %v287 = vsel %vm281, %v286, %v285
      %vm288 = vcmp.ne.s32.totalorder %v287, 0
      %vm289 = vcmp.lt.s32.totalorder %v287, 0
      %vm290 = vmand %vm289, %vm288
      %v291 = vadd.s32 %v287, 16
      %v292 = vsel %vm290, %v291, %v287
      %v293 = vld [vmem:[%s1] sm:$0xff]
      %v294 = vld [vmem:[%s1 + $0x8] sm:$0xff]
      %v295 = vld [vmem:[%s1 + $0x10] sm:$0xff]
      %v296 = vld [vmem:[%s1 + $0x18] sm:$0xff]
      %v297 = vld [vmem:[%s1 + $0x20] sm:$0xff]
      %v298 = vld [vmem:[%s1 + $0x28] sm:$0xff]
      %v299 = vld [vmem:[%s1 + $0x30] sm:$0xff]
      %v300 = vld [vmem:[%s1 + $0x38] sm:$0xff]
      %v301 = vld [vmem:[%s1 + $0x40] sm:$0xff]
      %v302 = vld [vmem:[%s1 + $0x48] sm:$0xff]
      %v303 = vld [vmem:[%s1 + $0x50] sm:$0xff]
      %v304 = vld [vmem:[%s1 + $0x58] sm:$0xff]
      %v305 = vld [vmem:[%s1 + $0x60] sm:$0xff]
      %v306 = vld [vmem:[%s1 + $0x68] sm:$0xff]
      %v307 = vld [vmem:[%s1 + $0x70] sm:$0xff]
      %v308 = vld [vmem:[%s1 + $0x78] sm:$0xff]
      %v309 = vld [vmem:[%s1 + $0x80] sm:$0xff]
      %v310 = vld [vmem:[%s1 + $0x88] sm:$0xff]
      %v311 = vld [vmem:[%s1 + $0x90] sm:$0xff]
      %v312 = vld [vmem:[%s1 + $0x98] sm:$0xff]
      %v313 = vld [vmem:[%s1 + $0xa0] sm:$0xff]
      %v314 = vld [vmem:[%s1 + $0xa8] sm:$0xff]
      %v315 = vld [vmem:[%s1 + $0xb0] sm:$0xff]
      %v316 = vld [vmem:[%s1 + $0xb8] sm:$0xff]
      %v317 = vld [vmem:[%s1 + $0xc0] sm:$0xff]
      %v318 = vld [vmem:[%s1 + $0xc8] sm:$0xff]
      %v319 = vld [vmem:[%s1 + $0xd0] sm:$0xff]
      %v320 = vld [vmem:[%s1 + $0xd8] sm:$0xff]
      %v321 = vld [vmem:[%s1 + $0xe0] sm:$0xff]
      %v322 = vld [vmem:[%s1 + $0xe8] sm:$0xff]
      %v323 = vld [vmem:[%s1 + $0xf0] sm:$0xff]
      %v324 = vld [vmem:[%s1 + $0xf8] sm:$0xff]
      %v325 = vld [vmem:[%s1 + $0x100] sm:$0xff]
      %v326 = vld [vmem:[%s1 + $0x108] sm:$0xff]
      %v327 = vld [vmem:[%s1 + $0x110] sm:$0xff]
      %v328 = vld [vmem:[%s1 + $0x118] sm:$0xff]
      %v329 = vld [vmem:[%s1 + $0x120] sm:$0xff]
      %v330 = vld [vmem:[%s1 + $0x128] sm:$0xff]
      %v331 = vld [vmem:[%s1 + $0x130] sm:$0xff]
      %v332 = vld [vmem:[%s1 + $0x138] sm:$0xff]
      %v333 = vld [vmem:[%s1 + $0x140] sm:$0xff]
      %v334 = vld [vmem:[%s1 + $0x148] sm:$0xff]
      %v335 = vld [vmem:[%s1 + $0x150] sm:$0xff]
      %v336 = vld [vmem:[%s1 + $0x158] sm:$0xff]
      %v337 = vld [vmem:[%s1 + $0x160] sm:$0xff]
      %v338 = vld [vmem:[%s1 + $0x168] sm:$0xff]
      %v339 = vld [vmem:[%s1 + $0x170] sm:$0xff]
      %v340 = vld [vmem:[%s1 + $0x178] sm:$0xff]
      %v341 = vld [vmem:[%s1 + $0x180] sm:$0xff]
      %v342 = vld [vmem:[%s1 + $0x188] sm:$0xff]
      %v343 = vld [vmem:[%s1 + $0x190] sm:$0xff]
      %v344 = vld [vmem:[%s1 + $0x198] sm:$0xff]
      %v345 = vld [vmem:[%s1 + $0x1a0] sm:$0xff]
      %v346 = vld [vmem:[%s1 + $0x1a8] sm:$0xff]
      %v347 = vld [vmem:[%s1 + $0x1b0] sm:$0xff]
      %v348 = vld [vmem:[%s1 + $0x1b8] sm:$0xff]
      %v349 = vld [vmem:[%s1 + $0x1c0] sm:$0xff]
      %v350 = vld [vmem:[%s1 + $0x1c8] sm:$0xff]
      %v351 = vld [vmem:[%s1 + $0x1d0] sm:$0xff]
      %v352 = vld [vmem:[%s1 + $0x1d8] sm:$0xff]
      %v353 = vld [vmem:[%s1 + $0x1e0] sm:$0xff]
      %v354 = vld [vmem:[%s1 + $0x1e8] sm:$0xff]
      %v355 = vld [vmem:[%s1 + $0x1f0] sm:$0xff]
      %v356 = vld [vmem:[%s1 + $0x1f8] sm:$0xff]
      %v357 = vld [vmem:[%s273] sm:$0xff]
      %v358 = vld [vmem:[%s273 + $0x8] sm:$0xff]
      %v359 = vld [vmem:[%s273 + $0x10] sm:$0xff]
      %v360 = vld [vmem:[%s273 + $0x18] sm:$0xff]
      %v361 = vld [vmem:[%s273 + $0x20] sm:$0xff]
      %v362 = vld [vmem:[%s273 + $0x28] sm:$0xff]
      %v363 = vld [vmem:[%s273 + $0x30] sm:$0xff]
      %v364 = vld [vmem:[%s273 + $0x38] sm:$0xff]
      %v365 = vld [vmem:[%s273 + $0x40] sm:$0xff]
      %v366 = vld [vmem:[%s273 + $0x48] sm:$0xff]
      %v367 = vld [vmem:[%s273 + $0x50] sm:$0xff]
      %vm368 = vcmask 719872
      %v370 = vsel %vm368, %v293, 0
      %v373 = vsel %vm368, %v294, 0
      %v376 = vsel %vm368, %v295, 0
      %v379 = vsel %vm368, %v296, 0
      %v382 = vsel %vm368, %v297, 0
      %v385 = vsel %vm368, %v298, 0
      %v388 = vsel %vm368, %v299, 0
      %v391 = vsel %vm368, %v300, 0
      %v394 = vsel %vm368, %v301, 0
      %v397 = vsel %vm368, %v302, 0
      %v400 = vsel %vm368, %v303, 0
      %v403 = vsel %vm368, %v304, 0
      %v406 = vsel %vm368, %v305, 0
      %v409 = vsel %vm368, %v306, 0
      %v412 = vsel %vm368, %v307, 0
      %v415 = vsel %vm368, %v308, 0
      %v418 = vsel %vm368, %v309, 0
      %v421 = vsel %vm368, %v310, 0
      %v424 = vsel %vm368, %v311, 0
      %v427 = vsel %vm368, %v312, 0
      %v430 = vsel %vm368, %v313, 0
      %v433 = vsel %vm368, %v314, 0
      %v436 = vsel %vm368, %v315, 0
      %v439 = vsel %vm368, %v316, 0
      %v442 = vsel %vm368, %v317, 0
      %v445 = vsel %vm368, %v318, 0
      %v448 = vsel %vm368, %v319, 0
      %v451 = vsel %vm368, %v320, 0
      %v454 = vsel %vm368, %v321, 0
      %v457 = vsel %vm368, %v322, 0
      %v460 = vsel %vm368, %v323, 0
      %v463 = vsel %vm368, %v324, 0
      %v466 = vsel %vm368, %v325, 0
      %v469 = vsel %vm368, %v326, 0
      %v472 = vsel %vm368, %v327, 0
      %v475 = vsel %vm368, %v328, 0
      %v478 = vsel %vm368, %v329, 0
      %v481 = vsel %vm368, %v330, 0
      %v484 = vsel %vm368, %v331, 0
      %v487 = vsel %vm368, %v332, 0
      %v490 = vsel %vm368, %v333, 0
      %v493 = vsel %vm368, %v334, 0
      %v496 = vsel %vm368, %v335, 0
      %v499 = vsel %vm368, %v336, 0
      %v502 = vsel %vm368, %v337, 0
      %v505 = vsel %vm368, %v338, 0
      %v508 = vsel %vm368, %v339, 0
      %v511 = vsel %vm368, %v340, 0
      %v514 = vsel %vm368, %v341, 0
      %v517 = vsel %vm368, %v342, 0
      %v520 = vsel %vm368, %v343, 0
      %v523 = vsel %vm368, %v344, 0
      %v526 = vsel %vm368, %v345, 0
      %v529 = vsel %vm368, %v346, 0
      %v532 = vsel %vm368, %v347, 0
      %v535 = vsel %vm368, %v348, 0
      %v538 = vsel %vm368, %v349, 0
      %v541 = vsel %vm368, %v350, 0
      %v544 = vsel %vm368, %v351, 0
      %v547 = vsel %vm368, %v352, 0
      %v550 = vsel %vm368, %v353, 0
      %v553 = vsel %vm368, %v354, 0
      %v556 = vsel %vm368, %v355, 0
      %v559 = vsel %vm368, %v356, 0
      %561 = vmatprep.subr.mxu0 0.0
      %562 = vmatpush1.msra.mxu0 0.0
      %563 = vmatprep.subr.mxu0 0.0
      %564 = vmatpush1.msra.mxu0 0.0
      %565 = vmatprep.subr.mxu0 0.0
      %566 = vmatpush1.msra.mxu0 0.0
      %567 = vmatprep.subr.mxu0 0.0
      %568 = vmatpush1.msra.mxu0 0.0
      %569 = vmatprep.subr.mxu0 0.0
      %570 = vmatpush1.msra.mxu0 0.0
      %571 = vmatprep.subr.mxu0 0.0
      %572 = vmatpush1.msra.mxu0 %v367
      %573 = vmatprep.subr.mxu0 0.0
      %574 = vmatpush1.msra.mxu0 %v366
      %575 = vmatprep.subr.mxu0 0.0
      %576 = vmatpush1.msra.mxu0 %v365
      %577 = vmatprep.subr.mxu0 0.0
      %578 = vmatpush1.msra.mxu0 %v364
      %579 = vmatprep.subr.mxu0 0.0
      %580 = vmatpush1.msra.mxu0 %v363
      %581 = vmatprep.subr.mxu0 0.0
      %582 = vmatpush1.msra.mxu0 %v362
      %583 = vmatprep.subr.mxu0 0.0
      %584 = vmatpush1.msra.mxu0 %v361
      %585 = vmatprep.subr.mxu0 0.0
      %586 = vmatpush1.msra.mxu0 %v360
      %587 = vmatprep.subr.mxu0 0.0
      %588 = vmatpush1.msra.mxu0 %v359
      %589 = vmatprep.subr.mxu0 0.0
      %590 = vmatpush1.msra.mxu0 %v358
      %591 = vmatprep.subr.mxu0 0.0
      %592 = vmatpush1.msra.mxu0 %v357
      %593 = vmatprep.subr.mxu0 0.0
      %594 = vmatpush2.msra.mxu0 0.0
      %595 = vmatprep.subr.mxu0 0.0
      %596 = vmatpush2.msra.mxu0 0.0
      %597 = vmatprep.subr.mxu0 0.0
      %598 = vmatpush2.msra.mxu0 0.0
      %599 = vmatprep.subr.mxu0 0.0
      %600 = vmatpush2.msra.mxu0 0.0
      %601 = vmatprep.subr.mxu0 0.0
      %602 = vmatpush2.msra.mxu0 0.0
      %603 = vmatprep.subr.mxu0 0.0
      %604 = vmatpush2.msra.mxu0 0.0
      %605 = vmatprep.subr.mxu0 0.0
      %606 = vmatpush2.msra.mxu0 0.0
      %607 = vmatprep.subr.mxu0 0.0
      %608 = vmatpush2.msra.mxu0 0.0
      %609 = vmatprep.subr.mxu0 0.0
      %610 = vmatpush2.msra.mxu0 0.0
      %611 = vmatprep.subr.mxu0 0.0
      %612 = vmatpush2.msra.mxu0 0.0
      %613 = vmatprep.subr.mxu0 0.0
      %614 = vmatpush2.msra.mxu0 0.0
      %615 = vmatprep.subr.mxu0 0.0
      %616 = vmatpush2.msra.mxu0 0.0
      %617 = vmatprep.subr.mxu0 0.0
      %618 = vmatpush2.msra.mxu0 0.0
      %619 = vmatprep.subr.mxu0 0.0
      %620 = vmatpush2.msra.mxu0 0.0
      %621 = vmatprep.subr.mxu0 0.0
      %622 = vmatpush2.msra.mxu0 0.0
      %623 = vmatprep.subr.mxu0 0.0
      %624 = vmatpush2.msra.mxu0 0.0
      %625 = vmatprep.mubr.f32.mxu0 0.0
      %626 = vmatmul.mubr.f32.gmra.mxu0 %v370
      %v627 = vpop.f32.mrf.mxu0
      %v628 = vadd.f32 0.0, %v627
      %v629 = vpop.f32.mrf.mxu0
      %630 = vmatprep.mubr.f32.mxu0 0.0
      %631 = vmatmul.mubr.f32.gmra.mxu0 %v373
      %v632 = vpop.f32.mrf.mxu0
      %v633 = vadd.f32 0.0, %v632
      %v634 = vpop.f32.mrf.mxu0
      %635 = vmatprep.mubr.f32.mxu0 0.0
      %636 = vmatmul.mubr.f32.gmra.mxu0 %v376
      %v637 = vpop.f32.mrf.mxu0
      %v638 = vadd.f32 0.0, %v637
      %v639 = vpop.f32.mrf.mxu0
      %640 = vmatprep.mubr.f32.mxu0 0.0
      %641 = vmatmul.mubr.f32.gmra.mxu0 %v379
      %v642 = vpop.f32.mrf.mxu0
      %v643 = vadd.f32 0.0, %v642
      %v644 = vpop.f32.mrf.mxu0
      %645 = vmatprep.mubr.f32.mxu0 0.0
      %646 = vmatmul.mubr.f32.gmra.mxu0 %v382
      %v647 = vpop.f32.mrf.mxu0
      %v648 = vadd.f32 0.0, %v647
      %v649 = vpop.f32.mrf.mxu0
      %650 = vmatprep.mubr.f32.mxu0 0.0
      %651 = vmatmul.mubr.f32.gmra.mxu0 %v385
      %v652 = vpop.f32.mrf.mxu0
      %v653 = vadd.f32 0.0, %v652
      %v654 = vpop.f32.mrf.mxu0
      %655 = vmatprep.mubr.f32.mxu0 0.0
      %656 = vmatmul.mubr.f32.gmra.mxu0 %v388
      %v657 = vpop.f32.mrf.mxu0
      %v658 = vadd.f32 0.0, %v657
      %v659 = vpop.f32.mrf.mxu0
      %660 = vmatprep.mubr.f32.mxu0 0.0
      %661 = vmatmul.mubr.f32.gmra.mxu0 %v391
      %v662 = vpop.f32.mrf.mxu0
      %v663 = vadd.f32 0.0, %v662
      %v664 = vpop.f32.mrf.mxu0
      %665 = vmatprep.mubr.f32.mxu0 0.0
      %666 = vmatmul.mubr.f32.gmra.mxu0 %v394
      %v667 = vpop.f32.mrf.mxu0
      %v668 = vadd.f32 0.0, %v667
      %v669 = vpop.f32.mrf.mxu0
      %670 = vmatprep.mubr.f32.mxu0 0.0
      %671 = vmatmul.mubr.f32.gmra.mxu0 %v397
      %v672 = vpop.f32.mrf.mxu0
      %v673 = vadd.f32 0.0, %v672
      %v674 = vpop.f32.mrf.mxu0
      %675 = vmatprep.mubr.f32.mxu0 0.0
      %676 = vmatmul.mubr.f32.gmra.mxu0 %v400
      %v677 = vpop.f32.mrf.mxu0
      %v678 = vadd.f32 0.0, %v677
      %v679 = vpop.f32.mrf.mxu0
      %680 = vmatprep.mubr.f32.mxu0 0.0
      %681 = vmatmul.mubr.f32.gmra.mxu0 %v403
      %v682 = vpop.f32.mrf.mxu0
      %v683 = vadd.f32 0.0, %v682
      %v684 = vpop.f32.mrf.mxu0
      %685 = vmatprep.mubr.f32.mxu0 0.0
      %686 = vmatmul.mubr.f32.gmra.mxu0 %v406
      %v687 = vpop.f32.mrf.mxu0
      %v688 = vadd.f32 0.0, %v687
      %v689 = vpop.f32.mrf.mxu0
      %690 = vmatprep.mubr.f32.mxu0 0.0
      %691 = vmatmul.mubr.f32.gmra.mxu0 %v409
      %v692 = vpop.f32.mrf.mxu0
      %v693 = vadd.f32 0.0, %v692
      %v694 = vpop.f32.mrf.mxu0
      %695 = vmatprep.mubr.f32.mxu0 0.0
      %696 = vmatmul.mubr.f32.gmra.mxu0 %v412
      %v697 = vpop.f32.mrf.mxu0
      %v698 = vadd.f32 0.0, %v697
      %v699 = vpop.f32.mrf.mxu0
      %700 = vmatprep.mubr.f32.mxu0 0.0
      %701 = vmatmul.mubr.f32.gmra.mxu0 %v415
      %v702 = vpop.f32.mrf.mxu0
      %v703 = vadd.f32 0.0, %v702
      %v704 = vpop.f32.mrf.mxu0
      %705 = vmatprep.mubr.f32.mxu0 0.0
      %706 = vmatmul.mubr.f32.gmra.mxu0 %v418
      %v707 = vpop.f32.mrf.mxu0
      %v708 = vadd.f32 0.0, %v707
      %v709 = vpop.f32.mrf.mxu0
      %710 = vmatprep.mubr.f32.mxu0 0.0
      %711 = vmatmul.mubr.f32.gmra.mxu0 %v421
      %v712 = vpop.f32.mrf.mxu0
      %v713 = vadd.f32 0.0, %v712
      %v714 = vpop.f32.mrf.mxu0
      %715 = vmatprep.mubr.f32.mxu0 0.0
      %716 = vmatmul.mubr.f32.gmra.mxu0 %v424
      %v717 = vpop.f32.mrf.mxu0
      %v718 = vadd.f32 0.0, %v717
      %v719 = vpop.f32.mrf.mxu0
      %720 = vmatprep.mubr.f32.mxu0 0.0
      %721 = vmatmul.mubr.f32.gmra.mxu0 %v427
      %v722 = vpop.f32.mrf.mxu0
      %v723 = vadd.f32 0.0, %v722
      %v724 = vpop.f32.mrf.mxu0
      %725 = vmatprep.mubr.f32.mxu0 0.0
      %726 = vmatmul.mubr.f32.gmra.mxu0 %v430
      %v727 = vpop.f32.mrf.mxu0
      %v728 = vadd.f32 0.0, %v727
      %v729 = vpop.f32.mrf.mxu0
      %730 = vmatprep.mubr.f32.mxu0 0.0
      %731 = vmatmul.mubr.f32.gmra.mxu0 %v433
      %v732 = vpop.f32.mrf.mxu0
      %v733 = vadd.f32 0.0, %v732
      %v734 = vpop.f32.mrf.mxu0
      %735 = vmatprep.mubr.f32.mxu0 0.0
      %736 = vmatmul.mubr.f32.gmra.mxu0 %v436
      %v737 = vpop.f32.mrf.mxu0
      %v738 = vadd.f32 0.0, %v737
      %v739 = vpop.f32.mrf.mxu0
      %740 = vmatprep.mubr.f32.mxu0 0.0
      %741 = vmatmul.mubr.f32.gmra.mxu0 %v439
      %v742 = vpop.f32.mrf.mxu0
      %v743 = vadd.f32 0.0, %v742
      %v744 = vpop.f32.mrf.mxu0
      %745 = vmatprep.mubr.f32.mxu0 0.0
      %746 = vmatmul.mubr.f32.gmra.mxu0 %v442
      %v747 = vpop.f32.mrf.mxu0
      %v748 = vadd.f32 0.0, %v747
      %v749 = vpop.f32.mrf.mxu0
      %750 = vmatprep.mubr.f32.mxu0 0.0
      %751 = vmatmul.mubr.f32.gmra.mxu0 %v445
      %v752 = vpop.f32.mrf.mxu0
      %v753 = vadd.f32 0.0, %v752
      %v754 = vpop.f32.mrf.mxu0
      %755 = vmatprep.mubr.f32.mxu0 0.0
      %756 = vmatmul.mubr.f32.gmra.mxu0 %v448
      %v757 = vpop.f32.mrf.mxu0
      %v758 = vadd.f32 0.0, %v757
      %v759 = vpop.f32.mrf.mxu0
      %760 = vmatprep.mubr.f32.mxu0 0.0
      %761 = vmatmul.mubr.f32.gmra.mxu0 %v451
      %v762 = vpop.f32.mrf.mxu0
      %v763 = vadd.f32 0.0, %v762
      %v764 = vpop.f32.mrf.mxu0
      %765 = vmatprep.mubr.f32.mxu0 0.0
      %766 = vmatmul.mubr.f32.gmra.mxu0 %v454
      %v767 = vpop.f32.mrf.mxu0
      %v768 = vadd.f32 0.0, %v767
      %v769 = vpop.f32.mrf.mxu0
      %770 = vmatprep.mubr.f32.mxu0 0.0
      %771 = vmatmul.mubr.f32.gmra.mxu0 %v457
      %v772 = vpop.f32.mrf.mxu0
      %v773 = vadd.f32 0.0, %v772
      %v774 = vpop.f32.mrf.mxu0
      %775 = vmatprep.mubr.f32.mxu0 0.0
      %776 = vmatmul.mubr.f32.gmra.mxu0 %v460
      %v777 = vpop.f32.mrf.mxu0
      %v778 = vadd.f32 0.0, %v777
      %v779 = vpop.f32.mrf.mxu0
      %780 = vmatprep.mubr.f32.mxu0 0.0
      %781 = vmatmul.mubr.f32.gmra.mxu0 %v463
      %v782 = vpop.f32.mrf.mxu0
      %v783 = vadd.f32 0.0, %v782
      %v784 = vpop.f32.mrf.mxu0
      %785 = vmatprep.mubr.f32.mxu0 0.0
      %786 = vmatmul.mubr.f32.gmra.mxu0 %v466
      %v787 = vpop.f32.mrf.mxu0
      %v788 = vadd.f32 0.0, %v787
      %v789 = vpop.f32.mrf.mxu0
      %790 = vmatprep.mubr.f32.mxu0 0.0
      %791 = vmatmul.mubr.f32.gmra.mxu0 %v469
      %v792 = vpop.f32.mrf.mxu0
      %v793 = vadd.f32 0.0, %v792
      %v794 = vpop.f32.mrf.mxu0
      %795 = vmatprep.mubr.f32.mxu0 0.0
      %796 = vmatmul.mubr.f32.gmra.mxu0 %v472
      %v797 = vpop.f32.mrf.mxu0
      %v798 = vadd.f32 0.0, %v797
      %v799 = vpop.f32.mrf.mxu0
      %800 = vmatprep.mubr.f32.mxu0 0.0
      %801 = vmatmul.mubr.f32.gmra.mxu0 %v475
      %v802 = vpop.f32.mrf.mxu0
      %v803 = vadd.f32 0.0, %v802
      %v804 = vpop.f32.mrf.mxu0
      %805 = vmatprep.mubr.f32.mxu0 0.0
      %806 = vmatmul.mubr.f32.gmra.mxu0 %v478
      %v807 = vpop.f32.mrf.mxu0
      %v808 = vadd.f32 0.0, %v807
      %v809 = vpop.f32.mrf.mxu0
      %810 = vmatprep.mubr.f32.mxu0 0.0
      %811 = vmatmul.mubr.f32.gmra.mxu0 %v481
      %v812 = vpop.f32.mrf.mxu0
      %v813 = vadd.f32 0.0, %v812
      %v814 = vpop.f32.mrf.mxu0
      %815 = vmatprep.mubr.f32.mxu0 0.0
      %816 = vmatmul.mubr.f32.gmra.mxu0 %v484
      %v817 = vpop.f32.mrf.mxu0
      %v818 = vadd.f32 0.0, %v817
      %v819 = vpop.f32.mrf.mxu0
      %820 = vmatprep.mubr.f32.mxu0 0.0
      %821 = vmatmul.mubr.f32.gmra.mxu0 %v487
      %v822 = vpop.f32.mrf.mxu0
      %v823 = vadd.f32 0.0, %v822
      %v824 = vpop.f32.mrf.mxu0
      %825 = vmatprep.mubr.f32.mxu0 0.0
      %826 = vmatmul.mubr.f32.gmra.mxu0 %v490
      %v827 = vpop.f32.mrf.mxu0
      %v828 = vadd.f32 0.0, %v827
      %v829 = vpop.f32.mrf.mxu0
      %830 = vmatprep.mubr.f32.mxu0 0.0
      %831 = vmatmul.mubr.f32.gmra.mxu0 %v493
      %v832 = vpop.f32.mrf.mxu0
      %v833 = vadd.f32 0.0, %v832
      %v834 = vpop.f32.mrf.mxu0
      %835 = vmatprep.mubr.f32.mxu0 0.0
      %836 = vmatmul.mubr.f32.gmra.mxu0 %v496
      %v837 = vpop.f32.mrf.mxu0
      %v838 = vadd.f32 0.0, %v837
      %v839 = vpop.f32.mrf.mxu0
      %840 = vmatprep.mubr.f32.mxu0 0.0
      %841 = vmatmul.mubr.f32.gmra.mxu0 %v499
      %v842 = vpop.f32.mrf.mxu0
      %v843 = vadd.f32 0.0, %v842
      %v844 = vpop.f32.mrf.mxu0
      %845 = vmatprep.mubr.f32.mxu0 0.0
      %846 = vmatmul.mubr.f32.gmra.mxu0 %v502
      %v847 = vpop.f32.mrf.mxu0
      %v848 = vadd.f32 0.0, %v847
      %v849 = vpop.f32.mrf.mxu0
      %850 = vmatprep.mubr.f32.mxu0 0.0
      %851 = vmatmul.mubr.f32.gmra.mxu0 %v505
      %v852 = vpop.f32.mrf.mxu0
      %v853 = vadd.f32 0.0, %v852
      %v854 = vpop.f32.mrf.mxu0
      %855 = vmatprep.mubr.f32.mxu0 0.0
      %856 = vmatmul.mubr.f32.gmra.mxu0 %v508
      %v857 = vpop.f32.mrf.mxu0
      %v858 = vadd.f32 0.0, %v857
      %v859 = vpop.f32.mrf.mxu0
      %860 = vmatprep.mubr.f32.mxu0 0.0
      %861 = vmatmul.mubr.f32.gmra.mxu0 %v511
      %v862 = vpop.f32.mrf.mxu0
      %v863 = vadd.f32 0.0, %v862
      %v864 = vpop.f32.mrf.mxu0
      %865 = vmatprep.mubr.f32.mxu0 0.0
      %866 = vmatmul.mubr.f32.gmra.mxu0 %v514
      %v867 = vpop.f32.mrf.mxu0
      %v868 = vadd.f32 0.0, %v867
      %v869 = vpop.f32.mrf.mxu0
      %870 = vmatprep.mubr.f32.mxu0 0.0
      %871 = vmatmul.mubr.f32.gmra.mxu0 %v517
      %v872 = vpop.f32.mrf.mxu0
      %v873 = vadd.f32 0.0, %v872
      %v874 = vpop.f32.mrf.mxu0
      %875 = vmatprep.mubr.f32.mxu0 0.0
      %876 = vmatmul.mubr.f32.gmra.mxu0 %v520
      %v877 = vpop.f32.mrf.mxu0
      %v878 = vadd.f32 0.0, %v877
      %v879 = vpop.f32.mrf.mxu0
      %880 = vmatprep.mubr.f32.mxu0 0.0
      %881 = vmatmul.mubr.f32.gmra.mxu0 %v523
      %v882 = vpop.f32.mrf.mxu0
      %v883 = vadd.f32 0.0, %v882
      %v884 = vpop.f32.mrf.mxu0
      %885 = vmatprep.mubr.f32.mxu0 0.0
      %886 = vmatmul.mubr.f32.gmra.mxu0 %v526
      %v887 = vpop.f32.mrf.mxu0
      %v888 = vadd.f32 0.0, %v887
      %v889 = vpop.f32.mrf.mxu0
      %890 = vmatprep.mubr.f32.mxu0 0.0
      %891 = vmatmul.mubr.f32.gmra.mxu0 %v529
      %v892 = vpop.f32.mrf.mxu0
      %v893 = vadd.f32 0.0, %v892
      %v894 = vpop.f32.mrf.mxu0
      %895 = vmatprep.mubr.f32.mxu0 0.0
      %896 = vmatmul.mubr.f32.gmra.mxu0 %v532
      %v897 = vpop.f32.mrf.mxu0
      %v898 = vadd.f32 0.0, %v897
      %v899 = vpop.f32.mrf.mxu0
      %900 = vmatprep.mubr.f32.mxu0 0.0
      %901 = vmatmul.mubr.f32.gmra.mxu0 %v535
      %v902 = vpop.f32.mrf.mxu0
      %v903 = vadd.f32 0.0, %v902
      %v904 = vpop.f32.mrf.mxu0
      %905 = vmatprep.mubr.f32.mxu0 0.0
      %906 = vmatmul.mubr.f32.gmra.mxu0 %v538
      %v907 = vpop.f32.mrf.mxu0
      %v908 = vadd.f32 0.0, %v907
      %v909 = vpop.f32.mrf.mxu0
      %910 = vmatprep.mubr.f32.mxu0 0.0
      %911 = vmatmul.mubr.f32.gmra.mxu0 %v541
      %v912 = vpop.f32.mrf.mxu0
      %v913 = vadd.f32 0.0, %v912
      %v914 = vpop.f32.mrf.mxu0
      %915 = vmatprep.mubr.f32.mxu0 0.0
      %916 = vmatmul.mubr.f32.gmra.mxu0 %v544
      %v917 = vpop.f32.mrf.mxu0
      %v918 = vadd.f32 0.0, %v917
      %v919 = vpop.f32.mrf.mxu0
      %920 = vmatprep.mubr.f32.mxu0 0.0
      %921 = vmatmul.mubr.f32.gmra.mxu0 %v547
      %v922 = vpop.f32.mrf.mxu0
      %v923 = vadd.f32 0.0, %v922
      %v924 = vpop.f32.mrf.mxu0
      %925 = vmatprep.mubr.f32.mxu0 0.0
      %926 = vmatmul.mubr.f32.gmra.mxu0 %v550
      %v927 = vpop.f32.mrf.mxu0
      %v928 = vadd.f32 0.0, %v927
      %v929 = vpop.f32.mrf.mxu0
      %930 = vmatprep.mubr.f32.mxu0 0.0
      %931 = vmatmul.mubr.f32.gmra.mxu0 %v553
      %v932 = vpop.f32.mrf.mxu0
      %v933 = vadd.f32 0.0, %v932
      %v934 = vpop.f32.mrf.mxu0
      %935 = vmatprep.mubr.f32.mxu0 0.0
      %936 = vmatmul.mubr.f32.gmra.mxu0 %v556
      %v937 = vpop.f32.mrf.mxu0
      %v938 = vadd.f32 0.0, %v937
      %v939 = vpop.f32.mrf.mxu0
      %940 = vmatprep.mubr.f32.mxu0 0.0
      %941 = vmatmul.mubr.f32.gmra.mxu0 %v559
      %v942 = vpop.f32.mrf.mxu0
      %v943 = vadd.f32 0.0, %v942
      %v944 = vpop.f32.mrf.mxu0
      %945 = vdwg.mxu0
      %v946 = vld [vmem:[%s2] sm:$0xff]
      %v947 = vld [vmem:[%s2 + $0x8] sm:$0xff]
      %v948 = vld [vmem:[%s2 + $0x10] sm:$0xff]
      %v949 = vld [vmem:[%s2 + $0x18] sm:$0xff]
      %v950 = vld [vmem:[%s2 + $0x20] sm:$0xff]
      %v951 = vld [vmem:[%s2 + $0x28] sm:$0xff]
      %v952 = vld [vmem:[%s2 + $0x30] sm:$0xff]
      %v953 = vld [vmem:[%s2 + $0x38] sm:$0xff]
      %v954 = vld [vmem:[%s2 + $0x40] sm:$0xff]
      %v955 = vld [vmem:[%s2 + $0x48] sm:$0xff]
      %v956 = vld [vmem:[%s2 + $0x50] sm:$0xff]
      %v957 = vld [vmem:[%s2 + $0x58] sm:$0xff]
      %v958 = vld [vmem:[%s2 + $0x60] sm:$0xff]
      %v959 = vld [vmem:[%s2 + $0x68] sm:$0xff]
      %v960 = vld [vmem:[%s2 + $0x70] sm:$0xff]
      %v961 = vld [vmem:[%s2 + $0x78] sm:$0xff]
      %963 = vset.pattern.permute.xlu0 0
      %964 = vperm.xlu0 %963, %v946
      %v965 = vpop.permute.xlu0 %964
      %968 = vset.pattern.permute.xlu0 0
      %969 = vperm.xlu0 %968, %v947
      %v970 = vpop.permute.xlu0 %969
      %973 = vset.pattern.permute.xlu0 0
      %974 = vperm.xlu0 %973, %v948
      %v975 = vpop.permute.xlu0 %974
      %978 = vset.pattern.permute.xlu0 0
      %979 = vperm.xlu0 %978, %v949
      %v980 = vpop.permute.xlu0 %979
      %983 = vset.pattern.permute.xlu0 0
      %984 = vperm.xlu0 %983, %v950
      %v985 = vpop.permute.xlu0 %984
      %988 = vset.pattern.permute.xlu0 0
      %989 = vperm.xlu0 %988, %v951
      %v990 = vpop.permute.xlu0 %989
      %993 = vset.pattern.permute.xlu0 0
      %994 = vperm.xlu0 %993, %v952
      %v995 = vpop.permute.xlu0 %994
      %998 = vset.pattern.permute.xlu0 0
      %999 = vperm.xlu0 %998, %v953
      %v1000 = vpop.permute.xlu0 %999
      %1003 = vset.pattern.permute.xlu0 0
      %1004 = vperm.xlu0 %1003, %v954
      %v1005 = vpop.permute.xlu0 %1004
      %1008 = vset.pattern.permute.xlu0 0
      %1009 = vperm.xlu0 %1008, %v955
      %v1010 = vpop.permute.xlu0 %1009
      %1013 = vset.pattern.permute.xlu0 0
      %1014 = vperm.xlu0 %1013, %v956
      %v1015 = vpop.permute.xlu0 %1014
      %1018 = vset.pattern.permute.xlu0 0
      %1019 = vperm.xlu0 %1018, %v957
      %v1020 = vpop.permute.xlu0 %1019
      %1023 = vset.pattern.permute.xlu0 0
      %1024 = vperm.xlu0 %1023, %v958
      %v1025 = vpop.permute.xlu0 %1024
      %1028 = vset.pattern.permute.xlu0 0
      %1029 = vperm.xlu0 %1028, %v959
      %v1030 = vpop.permute.xlu0 %1029
      %1033 = vset.pattern.permute.xlu0 0
      %1034 = vperm.xlu0 %1033, %v960
      %v1035 = vpop.permute.xlu0 %1034
      %1038 = vset.pattern.permute.xlu0 0
      %1039 = vperm.xlu0 %1038, %v961
      %v1040 = vpop.permute.xlu0 %1039
      %v1042 = vadd.f32 %v628, %v965
      %v1043 = vadd.f32 %v633, %v970
      %v1044 = vadd.f32 %v638, %v975
      %v1045 = vadd.f32 %v643, %v980
      %v1046 = vadd.f32 %v648, %v985
      %v1047 = vadd.f32 %v653, %v990
      %v1048 = vadd.f32 %v658, %v995
      %v1049 = vadd.f32 %v663, %v1000
      %v1050 = vadd.f32 %v668, %v1005
      %v1051 = vadd.f32 %v673, %v1010
      %v1052 = vadd.f32 %v678, %v1015
      %v1053 = vadd.f32 %v683, %v1020
      %v1054 = vadd.f32 %v688, %v1025
      %v1055 = vadd.f32 %v693, %v1030
      %v1056 = vadd.f32 %v698, %v1035
      %v1057 = vadd.f32 %v703, %v1040
      %vm1058 = vcmp.ge.f32.partialorder %v1042, 0.0
      %vm1059 = vcmp.ge.f32.partialorder %v1043, 0.0
      %vm1060 = vcmp.ge.f32.partialorder %v1044, 0.0
      %vm1061 = vcmp.ge.f32.partialorder %v1045, 0.0
      %vm1062 = vcmp.ge.f32.partialorder %v1046, 0.0
      %vm1063 = vcmp.ge.f32.partialorder %v1047, 0.0
      %vm1064 = vcmp.ge.f32.partialorder %v1048, 0.0
      %vm1065 = vcmp.ge.f32.partialorder %v1049, 0.0
      %vm1066 = vcmp.ge.f32.partialorder %v1050, 0.0
      %vm1067 = vcmp.ge.f32.partialorder %v1051, 0.0
      %vm1068 = vcmp.ge.f32.partialorder %v1052, 0.0
      %vm1069 = vcmp.ge.f32.partialorder %v1053, 0.0
      %vm1070 = vcmp.ge.f32.partialorder %v1054, 0.0
      %vm1071 = vcmp.ge.f32.partialorder %v1055, 0.0
      %vm1072 = vcmp.ge.f32.partialorder %v1056, 0.0
      %vm1073 = vcmp.ge.f32.partialorder %v1057, 0.0
      %v1074 = vmul.f32 %v1042, 0.2
      %v1075 = vmul.f32 %v1043, 0.2
      %v1076 = vmul.f32 %v1044, 0.2
      %v1077 = vmul.f32 %v1045, 0.2
      %v1078 = vmul.f32 %v1046, 0.2
      %v1079 = vmul.f32 %v1047, 0.2
      %v1080 = vmul.f32 %v1048, 0.2
      %v1081 = vmul.f32 %v1049, 0.2
      %v1082 = vmul.f32 %v1050, 0.2
      %v1083 = vmul.f32 %v1051, 0.2
      %v1084 = vmul.f32 %v1052, 0.2
      %v1085 = vmul.f32 %v1053, 0.2
      %v1086 = vmul.f32 %v1054, 0.2
      %v1087 = vmul.f32 %v1055, 0.2
      %v1088 = vmul.f32 %v1056, 0.2
      %v1089 = vmul.f32 %v1057, 0.2
      %v1090 = vsel %vm1058, %v1042, %v1074
      %v1091 = vsel %vm1059, %v1043, %v1075
      %v1092 = vsel %vm1060, %v1044, %v1076
      %v1093 = vsel %vm1061, %v1045, %v1077
      %v1094 = vsel %vm1062, %v1046, %v1078
      %v1095 = vsel %vm1063, %v1047, %v1079
      %v1096 = vsel %vm1064, %v1048, %v1080
      %v1097 = vsel %vm1065, %v1049, %v1081
      %v1098 = vsel %vm1066, %v1050, %v1082
      %v1099 = vsel %vm1067, %v1051, %v1083
      %v1100 = vsel %vm1068, %v1052, %v1084
      %v1101 = vsel %vm1069, %v1053, %v1085
      %v1102 = vsel %vm1070, %v1054, %v1086
      %v1103 = vsel %vm1071, %v1055, %v1087
      %v1104 = vsel %vm1072, %v1056, %v1088
      %v1105 = vsel %vm1073, %v1057, %v1089
      %v1106 = vadd.f32 %v1090, 0.0
      %v1107 = vadd.f32 %v1091, 0.0
      %v1108 = vadd.f32 %v1092, 0.0
      %v1109 = vadd.f32 %v1093, 0.0
      %v1110 = vadd.f32 %v1094, 0.0
      %v1111 = vadd.f32 %v1095, 0.0
      %v1112 = vadd.f32 %v1096, 0.0
      %v1113 = vadd.f32 %v1097, 0.0
      %v1114 = vadd.f32 %v1098, 0.0
      %v1115 = vadd.f32 %v1099, 0.0
      %v1116 = vadd.f32 %v1100, 0.0
      %v1117 = vadd.f32 %v1101, 0.0
      %v1118 = vadd.f32 %v1102, 0.0
      %v1119 = vadd.f32 %v1103, 0.0
      %v1120 = vadd.f32 %v1104, 0.0
      %v1121 = vadd.f32 %v1105, 0.0
      %v1122 = vadd.f32 %v708, %v965
      %v1123 = vadd.f32 %v713, %v970
      %v1124 = vadd.f32 %v718, %v975
      %v1125 = vadd.f32 %v723, %v980
      %v1126 = vadd.f32 %v728, %v985
      %v1127 = vadd.f32 %v733, %v990
      %v1128 = vadd.f32 %v738, %v995
      %v1129 = vadd.f32 %v743, %v1000
      %v1130 = vadd.f32 %v748, %v1005
      %v1131 = vadd.f32 %v753, %v1010
      %v1132 = vadd.f32 %v758, %v1015
      %v1133 = vadd.f32 %v763, %v1020
      %v1134 = vadd.f32 %v768, %v1025
      %v1135 = vadd.f32 %v773, %v1030
      %v1136 = vadd.f32 %v778, %v1035
      %v1137 = vadd.f32 %v783, %v1040
      %vm1138 = vcmp.ge.f32.partialorder %v1122, 0.0
      %vm1139 = vcmp.ge.f32.partialorder %v1123, 0.0
      %vm1140 = vcmp.ge.f32.partialorder %v1124, 0.0
      %vm1141 = vcmp.ge.f32.partialorder %v1125, 0.0
      %vm1142 = vcmp.ge.f32.partialorder %v1126, 0.0
      %vm1143 = vcmp.ge.f32.partialorder %v1127, 0.0
      %vm1144 = vcmp.ge.f32.partialorder %v1128, 0.0
      %vm1145 = vcmp.ge.f32.partialorder %v1129, 0.0
      %vm1146 = vcmp.ge.f32.partialorder %v1130, 0.0
      %vm1147 = vcmp.ge.f32.partialorder %v1131, 0.0
      %vm1148 = vcmp.ge.f32.partialorder %v1132, 0.0
      %vm1149 = vcmp.ge.f32.partialorder %v1133, 0.0
      %vm1150 = vcmp.ge.f32.partialorder %v1134, 0.0
      %vm1151 = vcmp.ge.f32.partialorder %v1135, 0.0
      %vm1152 = vcmp.ge.f32.partialorder %v1136, 0.0
      %vm1153 = vcmp.ge.f32.partialorder %v1137, 0.0
      %v1154 = vmul.f32 %v1122, 0.2
      %v1155 = vmul.f32 %v1123, 0.2
      %v1156 = vmul.f32 %v1124, 0.2
      %v1157 = vmul.f32 %v1125, 0.2
      %v1158 = vmul.f32 %v1126, 0.2
      %v1159 = vmul.f32 %v1127, 0.2
      %v1160 = vmul.f32 %v1128, 0.2
      %v1161 = vmul.f32 %v1129, 0.2
      %v1162 = vmul.f32 %v1130, 0.2
      %v1163 = vmul.f32 %v1131, 0.2
      %v1164 = vmul.f32 %v1132, 0.2
      %v1165 = vmul.f32 %v1133, 0.2
      %v1166 = vmul.f32 %v1134, 0.2
      %v1167 = vmul.f32 %v1135, 0.2
      %v1168 = vmul.f32 %v1136, 0.2
      %v1169 = vmul.f32 %v1137, 0.2
      %v1170 = vsel %vm1138, %v1122, %v1154
      %v1171 = vsel %vm1139, %v1123, %v1155
      %v1172 = vsel %vm1140, %v1124, %v1156
      %v1173 = vsel %vm1141, %v1125, %v1157
      %v1174 = vsel %vm1142, %v1126, %v1158
      %v1175 = vsel %vm1143, %v1127, %v1159
      %v1176 = vsel %vm1144, %v1128, %v1160
      %v1177 = vsel %vm1145, %v1129, %v1161
      %v1178 = vsel %vm1146, %v1130, %v1162
      %v1179 = vsel %vm1147, %v1131, %v1163
      %v1180 = vsel %vm1148, %v1132, %v1164
      %v1181 = vsel %vm1149, %v1133, %v1165
      %v1182 = vsel %vm1150, %v1134, %v1166
      %v1183 = vsel %vm1151, %v1135, %v1167
      %v1184 = vsel %vm1152, %v1136, %v1168
      %v1185 = vsel %vm1153, %v1137, %v1169
      %v1186 = vadd.f32 %v1106, %v1170
      %v1187 = vadd.f32 %v1107, %v1171
      %v1188 = vadd.f32 %v1108, %v1172
      %v1189 = vadd.f32 %v1109, %v1173
      %v1190 = vadd.f32 %v1110, %v1174
      %v1191 = vadd.f32 %v1111, %v1175
      %v1192 = vadd.f32 %v1112, %v1176
      %v1193 = vadd.f32 %v1113, %v1177
      %v1194 = vadd.f32 %v1114, %v1178
      %v1195 = vadd.f32 %v1115, %v1179
      %v1196 = vadd.f32 %v1116, %v1180
      %v1197 = vadd.f32 %v1117, %v1181
      %v1198 = vadd.f32 %v1118, %v1182
      %v1199 = vadd.f32 %v1119, %v1183
      %v1200 = vadd.f32 %v1120, %v1184
      %v1201 = vadd.f32 %v1121, %v1185
      %v1202 = vadd.f32 %v788, %v965
      %v1203 = vadd.f32 %v793, %v970
      %v1204 = vadd.f32 %v798, %v975
      %v1205 = vadd.f32 %v803, %v980
      %v1206 = vadd.f32 %v808, %v985
      %v1207 = vadd.f32 %v813, %v990
      %v1208 = vadd.f32 %v818, %v995
      %v1209 = vadd.f32 %v823, %v1000
      %v1210 = vadd.f32 %v828, %v1005
      %v1211 = vadd.f32 %v833, %v1010
      %v1212 = vadd.f32 %v838, %v1015
      %v1213 = vadd.f32 %v843, %v1020
      %v1214 = vadd.f32 %v848, %v1025
      %v1215 = vadd.f32 %v853, %v1030
      %v1216 = vadd.f32 %v858, %v1035
      %v1217 = vadd.f32 %v863, %v1040
      %vm1218 = vcmp.ge.f32.partialorder %v1202, 0.0
      %vm1219 = vcmp.ge.f32.partialorder %v1203, 0.0
      %vm1220 = vcmp.ge.f32.partialorder %v1204, 0.0
      %vm1221 = vcmp.ge.f32.partialorder %v1205, 0.0
      %vm1222 = vcmp.ge.f32.partialorder %v1206, 0.0
      %vm1223 = vcmp.ge.f32.partialorder %v1207, 0.0
      %vm1224 = vcmp.ge.f32.partialorder %v1208, 0.0
      %vm1225 = vcmp.ge.f32.partialorder %v1209, 0.0
      %vm1226 = vcmp.ge.f32.partialorder %v1210, 0.0
      %vm1227 = vcmp.ge.f32.partialorder %v1211, 0.0
      %vm1228 = vcmp.ge.f32.partialorder %v1212, 0.0
      %vm1229 = vcmp.ge.f32.partialorder %v1213, 0.0
      %vm1230 = vcmp.ge.f32.partialorder %v1214, 0.0
      %vm1231 = vcmp.ge.f32.partialorder %v1215, 0.0
      %vm1232 = vcmp.ge.f32.partialorder %v1216, 0.0
      %vm1233 = vcmp.ge.f32.partialorder %v1217, 0.0
      %v1234 = vmul.f32 %v1202, 0.2
      %v1235 = vmul.f32 %v1203, 0.2
      %v1236 = vmul.f32 %v1204, 0.2
      %v1237 = vmul.f32 %v1205, 0.2
      %v1238 = vmul.f32 %v1206, 0.2
      %v1239 = vmul.f32 %v1207, 0.2
      %v1240 = vmul.f32 %v1208, 0.2
      %v1241 = vmul.f32 %v1209, 0.2
      %v1242 = vmul.f32 %v1210, 0.2
      %v1243 = vmul.f32 %v1211, 0.2
      %v1244 = vmul.f32 %v1212, 0.2
      %v1245 = vmul.f32 %v1213, 0.2
      %v1246 = vmul.f32 %v1214, 0.2
      %v1247 = vmul.f32 %v1215, 0.2
      %v1248 = vmul.f32 %v1216, 0.2
      %v1249 = vmul.f32 %v1217, 0.2
      %v1250 = vsel %vm1218, %v1202, %v1234
      %v1251 = vsel %vm1219, %v1203, %v1235
      %v1252 = vsel %vm1220, %v1204, %v1236
      %v1253 = vsel %vm1221, %v1205, %v1237
      %v1254 = vsel %vm1222, %v1206, %v1238
      %v1255 = vsel %vm1223, %v1207, %v1239
      %v1256 = vsel %vm1224, %v1208, %v1240
      %v1257 = vsel %vm1225, %v1209, %v1241
      %v1258 = vsel %vm1226, %v1210, %v1242
      %v1259 = vsel %vm1227, %v1211, %v1243
      %v1260 = vsel %vm1228, %v1212, %v1244
      %v1261 = vsel %vm1229, %v1213, %v1245
      %v1262 = vsel %vm1230, %v1214, %v1246
      %v1263 = vsel %vm1231, %v1215, %v1247
      %v1264 = vsel %vm1232, %v1216, %v1248
      %v1265 = vsel %vm1233, %v1217, %v1249
      %v1266 = vadd.f32 %v1186, %v1250
      %v1267 = vadd.f32 %v1187, %v1251
      %v1268 = vadd.f32 %v1188, %v1252
      %v1269 = vadd.f32 %v1189, %v1253
      %v1270 = vadd.f32 %v1190, %v1254
      %v1271 = vadd.f32 %v1191, %v1255
      %v1272 = vadd.f32 %v1192, %v1256
      %v1273 = vadd.f32 %v1193, %v1257
      %v1274 = vadd.f32 %v1194, %v1258
      %v1275 = vadd.f32 %v1195, %v1259
      %v1276 = vadd.f32 %v1196, %v1260
      %v1277 = vadd.f32 %v1197, %v1261
      %v1278 = vadd.f32 %v1198, %v1262
      %v1279 = vadd.f32 %v1199, %v1263
      %v1280 = vadd.f32 %v1200, %v1264
      %v1281 = vadd.f32 %v1201, %v1265
      %v1282 = vadd.f32 %v868, %v965
      %v1283 = vadd.f32 %v873, %v970
      %v1284 = vadd.f32 %v878, %v975
      %v1285 = vadd.f32 %v883, %v980
      %v1286 = vadd.f32 %v888, %v985
      %v1287 = vadd.f32 %v893, %v990
      %v1288 = vadd.f32 %v898, %v995
      %v1289 = vadd.f32 %v903, %v1000
      %v1290 = vadd.f32 %v908, %v1005
      %v1291 = vadd.f32 %v913, %v1010
      %v1292 = vadd.f32 %v918, %v1015
      %v1293 = vadd.f32 %v923, %v1020
      %v1294 = vadd.f32 %v928, %v1025
      %v1295 = vadd.f32 %v933, %v1030
      %v1296 = vadd.f32 %v938, %v1035
      %v1297 = vadd.f32 %v943, %v1040
      %vm1298 = vcmp.ge.f32.partialorder %v1282, 0.0
      %vm1299 = vcmp.ge.f32.partialorder %v1283, 0.0
      %vm1300 = vcmp.ge.f32.partialorder %v1284, 0.0
      %vm1301 = vcmp.ge.f32.partialorder %v1285, 0.0
      %vm1302 = vcmp.ge.f32.partialorder %v1286, 0.0
      %vm1303 = vcmp.ge.f32.partialorder %v1287, 0.0
      %vm1304 = vcmp.ge.f32.partialorder %v1288, 0.0
      %vm1305 = vcmp.ge.f32.partialorder %v1289, 0.0
      %vm1306 = vcmp.ge.f32.partialorder %v1290, 0.0
      %vm1307 = vcmp.ge.f32.partialorder %v1291, 0.0
      %vm1308 = vcmp.ge.f32.partialorder %v1292, 0.0
      %vm1309 = vcmp.ge.f32.partialorder %v1293, 0.0
      %vm1310 = vcmp.ge.f32.partialorder %v1294, 0.0
      %vm1311 = vcmp.ge.f32.partialorder %v1295, 0.0
      %vm1312 = vcmp.ge.f32.partialorder %v1296, 0.0
      %vm1313 = vcmp.ge.f32.partialorder %v1297, 0.0
      %v1314 = vmul.f32 %v1282, 0.2
      %v1315 = vmul.f32 %v1283, 0.2
      %v1316 = vmul.f32 %v1284, 0.2
      %v1317 = vmul.f32 %v1285, 0.2
      %v1318 = vmul.f32 %v1286, 0.2
      %v1319 = vmul.f32 %v1287, 0.2
      %v1320 = vmul.f32 %v1288, 0.2
      %v1321 = vmul.f32 %v1289, 0.2
      %v1322 = vmul.f32 %v1290, 0.2
      %v1323 = vmul.f32 %v1291, 0.2
      %v1324 = vmul.f32 %v1292, 0.2
      %v1325 = vmul.f32 %v1293, 0.2
      %v1326 = vmul.f32 %v1294, 0.2
      %v1327 = vmul.f32 %v1295, 0.2
      %v1328 = vmul.f32 %v1296, 0.2
      %v1329 = vmul.f32 %v1297, 0.2
      %v1330 = vsel %vm1298, %v1282, %v1314
      %v1331 = vsel %vm1299, %v1283, %v1315
      %v1332 = vsel %vm1300, %v1284, %v1316
      %v1333 = vsel %vm1301, %v1285, %v1317
      %v1334 = vsel %vm1302, %v1286, %v1318
      %v1335 = vsel %vm1303, %v1287, %v1319
      %v1336 = vsel %vm1304, %v1288, %v1320
      %v1337 = vsel %vm1305, %v1289, %v1321
      %v1338 = vsel %vm1306, %v1290, %v1322
      %v1339 = vsel %vm1307, %v1291, %v1323
      %v1340 = vsel %vm1308, %v1292, %v1324
      %v1341 = vsel %vm1309, %v1293, %v1325
      %v1342 = vsel %vm1310, %v1294, %v1326
      %v1343 = vsel %vm1311, %v1295, %v1327
      %v1344 = vsel %vm1312, %v1296, %v1328
      %v1345 = vsel %vm1313, %v1297, %v1329
      %v1346 = vadd.f32 %v1266, %v1330
      %v1347 = vadd.f32 %v1267, %v1331
      %v1348 = vadd.f32 %v1268, %v1332
      %v1349 = vadd.f32 %v1269, %v1333
      %v1350 = vadd.f32 %v1270, %v1334
      %v1351 = vadd.f32 %v1271, %v1335
      %v1352 = vadd.f32 %v1272, %v1336
      %v1353 = vadd.f32 %v1273, %v1337
      %v1354 = vadd.f32 %v1274, %v1338
      %v1355 = vadd.f32 %v1275, %v1339
      %v1356 = vadd.f32 %v1276, %v1340
      %v1357 = vadd.f32 %v1277, %v1341
      %v1358 = vadd.f32 %v1278, %v1342
      %v1359 = vadd.f32 %v1279, %v1343
      %v1360 = vadd.f32 %v1280, %v1344
      %v1361 = vadd.f32 %v1281, %v1345
      %v1362 = vmul.f32 %v1346, 0.25
      %v1363 = vmul.f32 %v1347, 0.25
      %v1364 = vmul.f32 %v1348, 0.25
      %v1365 = vmul.f32 %v1349, 0.25
      %v1366 = vmul.f32 %v1350, 0.25
      %v1367 = vmul.f32 %v1351, 0.25
      %v1368 = vmul.f32 %v1352, 0.25
      %v1369 = vmul.f32 %v1353, 0.25
      %v1370 = vmul.f32 %v1354, 0.25
      %v1371 = vmul.f32 %v1355, 0.25
      %v1372 = vmul.f32 %v1356, 0.25
      %v1373 = vmul.f32 %v1357, 0.25
      %v1374 = vmul.f32 %v1358, 0.25
      %v1375 = vmul.f32 %v1359, 0.25
      %v1376 = vmul.f32 %v1360, 0.25
      %v1377 = vmul.f32 %v1361, 0.25
      %1379 = vrot.lane.b32.xlu0 %v1375, 1
      %v1380 = vpop.permute.xlu0 %1379
      %v1382 = vadd.s32 %v292, 4294967295
      %vm1383 = vcmp.ge.s32.totalorder %v1382, 0
      %vm1384 = vcmp.le.s32.totalorder %v1382, 15
      %vm1385 = vmand %vm1383, %vm1384
      %v1386 = vsel %vm1385, 1, 0
      %vm1387 = vcmp.eq.s32.totalorder %v1386, 1
      %v1388 = vsel %vm1387, %v1380, 0.0
      %1390 = vrot.lane.b32.xlu0 %v1376, 1
      %v1391 = vpop.permute.xlu0 %1390
      %v1393 = vsel %vm1387, %v1391, 0.0
      %1395 = vrot.lane.b32.xlu0 %v1377, 1
      %v1396 = vpop.permute.xlu0 %1395
      %v1398 = vsel %vm1387, %v1396, 0.0
      %1400 = vrot.lane.b32.xlu0 %v1362, 127
      %v1401 = vpop.permute.xlu0 %1400
      %v1403 = vadd.s32 %v292, 1
      %vm1404 = vcmp.ge.s32.totalorder %v1403, 0
      %vm1405 = vcmp.le.s32.totalorder %v1403, 15
      %vm1406 = vmand %vm1404, %vm1405
      %v1407 = vsel %vm1406, 1, 0
      %vm1408 = vcmp.eq.s32.totalorder %v1407, 1
      %v1409 = vsel %vm1408, %v1401, 0.0
      %1411 = vrot.lane.b32.xlu0 %v1363, 127
      %v1412 = vpop.permute.xlu0 %1411
      %v1414 = vsel %vm1408, %v1412, 0.0
      %1416 = vrot.lane.b32.xlu0 %v1364, 127
      %v1417 = vpop.permute.xlu0 %1416
      %v1419 = vsel %vm1408, %v1417, 0.0
      %v1420 = vld [vmem:[%s3] sm:$0xff]
      %v1421 = vld [vmem:[%s3 + $0x8] sm:$0xff]
      %v1422 = vld [vmem:[%s3 + $0x10] sm:$0xff]
      %v1423 = vld [vmem:[%s3 + $0x18] sm:$0xff]
      %v1424 = vld [vmem:[%s3 + $0x20] sm:$0xff]
      %v1425 = vld [vmem:[%s3 + $0x28] sm:$0xff]
      %v1426 = vld [vmem:[%s3 + $0x30] sm:$0xff]
      %v1427 = vld [vmem:[%s3 + $0x38] sm:$0xff]
      %v1428 = vld [vmem:[%s3 + $0x40] sm:$0xff]
      %v1429 = vld [vmem:[%s3 + $0x48] sm:$0xff]
      %v1430 = vld [vmem:[%s3 + $0x50] sm:$0xff]
      %v1431 = vld [vmem:[%s3 + $0x58] sm:$0xff]
      %v1432 = vld [vmem:[%s3 + $0x60] sm:$0xff]
      %v1433 = vld [vmem:[%s3 + $0x68] sm:$0xff]
      %v1434 = vld [vmem:[%s3 + $0x70] sm:$0xff]
      %v1435 = vld [vmem:[%s3 + $0x78] sm:$0xff]
      %v1436 = vld [vmem:[%s3 + $0x80] sm:$0xff]
      %v1437 = vld [vmem:[%s3 + $0x88] sm:$0xff]
      %v1438 = vld [vmem:[%s3 + $0x90] sm:$0xff]
      %v1439 = vld [vmem:[%s3 + $0x98] sm:$0xff]
      %v1440 = vld [vmem:[%s3 + $0xa0] sm:$0xff]
      %v1441 = vld [vmem:[%s3 + $0xa8] sm:$0xff]
      %v1442 = vld [vmem:[%s3 + $0xb0] sm:$0xff]
      %v1443 = vld [vmem:[%s3 + $0xb8] sm:$0xff]
      %v1444 = vld [vmem:[%s3 + $0xc0] sm:$0xff]
      %v1445 = vld [vmem:[%s3 + $0xc8] sm:$0xff]
      %v1446 = vld [vmem:[%s3 + $0xd0] sm:$0xff]
      %v1447 = vld [vmem:[%s3 + $0xd8] sm:$0xff]
      %v1448 = vld [vmem:[%s3 + $0xe0] sm:$0xff]
      %v1449 = vld [vmem:[%s3 + $0xe8] sm:$0xff]
      %v1450 = vld [vmem:[%s3 + $0xf0] sm:$0xff]
      %v1451 = vld [vmem:[%s3 + $0xf8] sm:$0xff]
      %v1452 = vld [vmem:[%s3 + $0x100] sm:$0xff]
      %v1453 = vld [vmem:[%s3 + $0x108] sm:$0xff]
      %v1454 = vld [vmem:[%s3 + $0x110] sm:$0xff]
      %v1455 = vld [vmem:[%s3 + $0x118] sm:$0xff]
      %v1456 = vld [vmem:[%s3 + $0x120] sm:$0xff]
      %v1457 = vld [vmem:[%s3 + $0x128] sm:$0xff]
      %v1458 = vld [vmem:[%s3 + $0x130] sm:$0xff]
      %v1459 = vld [vmem:[%s3 + $0x138] sm:$0xff]
      %v1460 = vld [vmem:[%s3 + $0x140] sm:$0xff]
      %v1461 = vld [vmem:[%s3 + $0x148] sm:$0xff]
      %v1462 = vld [vmem:[%s3 + $0x150] sm:$0xff]
      %v1463 = vld [vmem:[%s3 + $0x158] sm:$0xff]
      %v1464 = vld [vmem:[%s3 + $0x160] sm:$0xff]
      %v1465 = vld [vmem:[%s3 + $0x168] sm:$0xff]
      %v1466 = vld [vmem:[%s3 + $0x170] sm:$0xff]
      %v1467 = vld [vmem:[%s3 + $0x178] sm:$0xff]
      %v1468 = vld [vmem:[%s3 + $0x180] sm:$0xff]
      %v1469 = vld [vmem:[%s3 + $0x188] sm:$0xff]
      %v1470 = vld [vmem:[%s3 + $0x190] sm:$0xff]
      %v1471 = vld [vmem:[%s3 + $0x198] sm:$0xff]
      %v1472 = vld [vmem:[%s3 + $0x1a0] sm:$0xff]
      %v1473 = vld [vmem:[%s3 + $0x1a8] sm:$0xff]
      %v1474 = vld [vmem:[%s3 + $0x1b0] sm:$0xff]
      %v1475 = vld [vmem:[%s3 + $0x1b8] sm:$0xff]
      %v1476 = vld [vmem:[%s3 + $0x1c0] sm:$0xff]
      %v1477 = vld [vmem:[%s3 + $0x1c8] sm:$0xff]
      %v1478 = vld [vmem:[%s3 + $0x1d0] sm:$0xff]
      %v1479 = vld [vmem:[%s3 + $0x1d8] sm:$0xff]
      %v1480 = vld [vmem:[%s3 + $0x1e0] sm:$0xff]
      %v1481 = vld [vmem:[%s3 + $0x1e8] sm:$0xff]
      %v1482 = vld [vmem:[%s3 + $0x1f0] sm:$0xff]
      %v1483 = vld [vmem:[%s3 + $0x1f8] sm:$0xff]
      %vm1484 = vcmask 392192
      %v1486 = vsel %vm1484, %v1421, 0
      %v1489 = vsel %vm1484, %v1423, 0
      %v1492 = vsel %vm1484, %v1425, 0
      %v1495 = vsel %vm1484, %v1427, 0
      %v1498 = vsel %vm1484, %v1429, 0
      %v1501 = vsel %vm1484, %v1431, 0
      %v1504 = vsel %vm1484, %v1433, 0
      %v1507 = vsel %vm1484, %v1435, 0
      %v1510 = vsel %vm1484, %v1437, 0
      %v1513 = vsel %vm1484, %v1439, 0
      %v1516 = vsel %vm1484, %v1441, 0
      %v1519 = vsel %vm1484, %v1443, 0
      %v1522 = vsel %vm1484, %v1445, 0
      %v1525 = vsel %vm1484, %v1447, 0
      %v1528 = vsel %vm1484, %v1449, 0
      %v1531 = vsel %vm1484, %v1451, 0
      %v1534 = vsel %vm1484, %v1453, 0
      %v1537 = vsel %vm1484, %v1455, 0
      %v1540 = vsel %vm1484, %v1457, 0
      %v1543 = vsel %vm1484, %v1459, 0
      %v1546 = vsel %vm1484, %v1461, 0
      %v1549 = vsel %vm1484, %v1463, 0
      %v1552 = vsel %vm1484, %v1465, 0
      %v1555 = vsel %vm1484, %v1467, 0
      %v1558 = vsel %vm1484, %v1469, 0
      %v1561 = vsel %vm1484, %v1471, 0
      %v1564 = vsel %vm1484, %v1473, 0
      %v1567 = vsel %vm1484, %v1475, 0
      %v1570 = vsel %vm1484, %v1477, 0
      %v1573 = vsel %vm1484, %v1479, 0
      %v1576 = vsel %vm1484, %v1481, 0
      %v1579 = vsel %vm1484, %v1483, 0
      %1581 = vmatprep.subr.mxu0 0.0
      %1582 = vmatpush1.msra.mxu0 %v1374
      %1583 = vmatprep.subr.mxu0 0.0
      %1584 = vmatpush1.msra.mxu0 %v1373
      %1585 = vmatprep.subr.mxu0 0.0
      %1586 = vmatpush1.msra.mxu0 %v1372
      %1587 = vmatprep.subr.mxu0 0.0
      %1588 = vmatpush1.msra.mxu0 %v1371
      %1589 = vmatprep.subr.mxu0 0.0
      %1590 = vmatpush1.msra.mxu0 %v1370
      %1591 = vmatprep.subr.mxu0 0.0
      %1592 = vmatpush1.msra.mxu0 %v1369
      %1593 = vmatprep.subr.mxu0 0.0
      %1594 = vmatpush1.msra.mxu0 %v1368
      %1595 = vmatprep.subr.mxu0 0.0
      %1596 = vmatpush1.msra.mxu0 %v1367
      %1597 = vmatprep.subr.mxu0 0.0
      %1598 = vmatpush1.msra.mxu0 %v1366
      %1599 = vmatprep.subr.mxu0 0.0
      %1600 = vmatpush1.msra.mxu0 %v1365
      %1601 = vmatprep.subr.mxu0 0.0
      %1602 = vmatpush1.msra.mxu0 %v1364
      %1603 = vmatprep.subr.mxu0 0.0
      %1604 = vmatpush1.msra.mxu0 %v1363
      %1605 = vmatprep.subr.mxu0 0.0
      %1606 = vmatpush1.msra.mxu0 %v1362
      %1607 = vmatprep.subr.mxu0 0.0
      %1608 = vmatpush1.msra.mxu0 %v1398
      %1609 = vmatprep.subr.mxu0 0.0
      %1610 = vmatpush1.msra.mxu0 %v1393
      %1611 = vmatprep.subr.mxu0 0.0
      %1612 = vmatpush1.msra.mxu0 %v1388
      %1613 = vmatprep.subr.mxu0 0.0
      %1614 = vmatpush2.msra.mxu0 0.0
      %1615 = vmatprep.subr.mxu0 0.0
      %1616 = vmatpush2.msra.mxu0 0.0
      %1617 = vmatprep.subr.mxu0 0.0
      %1618 = vmatpush2.msra.mxu0 0.0
      %1619 = vmatprep.subr.mxu0 0.0
      %1620 = vmatpush2.msra.mxu0 0.0
      %1621 = vmatprep.subr.mxu0 0.0
      %1622 = vmatpush2.msra.mxu0 0.0
      %1623 = vmatprep.subr.mxu0 0.0
      %1624 = vmatpush2.msra.mxu0 0.0
      %1625 = vmatprep.subr.mxu0 0.0
      %1626 = vmatpush2.msra.mxu0 0.0
      %1627 = vmatprep.subr.mxu0 0.0
      %1628 = vmatpush2.msra.mxu0 0.0
      %1629 = vmatprep.subr.mxu0 0.0
      %1630 = vmatpush2.msra.mxu0 0.0
      %1631 = vmatprep.subr.mxu0 0.0
      %1632 = vmatpush2.msra.mxu0 0.0
      %1633 = vmatprep.subr.mxu0 0.0
      %1634 = vmatpush2.msra.mxu0 %v1419
      %1635 = vmatprep.subr.mxu0 0.0
      %1636 = vmatpush2.msra.mxu0 %v1414
      %1637 = vmatprep.subr.mxu0 0.0
      %1638 = vmatpush2.msra.mxu0 %v1409
      %1639 = vmatprep.subr.mxu0 0.0
      %1640 = vmatpush2.msra.mxu0 %v1377
      %1641 = vmatprep.subr.mxu0 0.0
      %1642 = vmatpush2.msra.mxu0 %v1376
      %1643 = vmatprep.subr.mxu0 0.0
      %1644 = vmatpush2.msra.mxu0 %v1375
      %1645 = vmatprep.mubr.f32.mxu0 %v1486
      %1646 = vmatmul.mubr.f32.gmra.mxu0 %v1420
      %v1647 = vpop.f32.mrf.mxu0
      %v1648 = vadd.f32 0.0, %v1647
      %v1649 = vpop.f32.mrf.mxu0
      %1650 = vmatprep.mubr.f32.mxu0 %v1489
      %1651 = vmatmul.mubr.f32.gmra.mxu0 %v1422
      %v1652 = vpop.f32.mrf.mxu0
      %v1653 = vadd.f32 0.0, %v1652
      %v1654 = vpop.f32.mrf.mxu0
      %1655 = vmatprep.mubr.f32.mxu0 %v1492
      %1656 = vmatmul.mubr.f32.gmra.mxu0 %v1424
      %v1657 = vpop.f32.mrf.mxu0
      %v1658 = vadd.f32 0.0, %v1657
      %v1659 = vpop.f32.mrf.mxu0
      %1660 = vmatprep.mubr.f32.mxu0 %v1495
      %1661 = vmatmul.mubr.f32.gmra.mxu0 %v1426
      %v1662 = vpop.f32.mrf.mxu0
      %v1663 = vadd.f32 0.0, %v1662
      %v1664 = vpop.f32.mrf.mxu0
      %1665 = vmatprep.mubr.f32.mxu0 %v1498
      %1666 = vmatmul.mubr.f32.gmra.mxu0 %v1428
      %v1667 = vpop.f32.mrf.mxu0
      %v1668 = vadd.f32 0.0, %v1667
      %v1669 = vpop.f32.mrf.mxu0
      %1670 = vmatprep.mubr.f32.mxu0 %v1501
      %1671 = vmatmul.mubr.f32.gmra.mxu0 %v1430
      %v1672 = vpop.f32.mrf.mxu0
      %v1673 = vadd.f32 0.0, %v1672
      %v1674 = vpop.f32.mrf.mxu0
      %1675 = vmatprep.mubr.f32.mxu0 %v1504
      %1676 = vmatmul.mubr.f32.gmra.mxu0 %v1432
      %v1677 = vpop.f32.mrf.mxu0
      %v1678 = vadd.f32 0.0, %v1677
      %v1679 = vpop.f32.mrf.mxu0
      %1680 = vmatprep.mubr.f32.mxu0 %v1507
      %1681 = vmatmul.mubr.f32.gmra.mxu0 %v1434
      %v1682 = vpop.f32.mrf.mxu0
      %v1683 = vadd.f32 0.0, %v1682
      %v1684 = vpop.f32.mrf.mxu0
      %1685 = vmatprep.mubr.f32.mxu0 %v1510
      %1686 = vmatmul.mubr.f32.gmra.mxu0 %v1436
      %v1687 = vpop.f32.mrf.mxu0
      %v1688 = vadd.f32 0.0, %v1687
      %v1689 = vpop.f32.mrf.mxu0
      %1690 = vmatprep.mubr.f32.mxu0 %v1513
      %1691 = vmatmul.mubr.f32.gmra.mxu0 %v1438
      %v1692 = vpop.f32.mrf.mxu0
      %v1693 = vadd.f32 0.0, %v1692
      %v1694 = vpop.f32.mrf.mxu0
      %1695 = vmatprep.mubr.f32.mxu0 %v1516
      %1696 = vmatmul.mubr.f32.gmra.mxu0 %v1440
      %v1697 = vpop.f32.mrf.mxu0
      %v1698 = vadd.f32 0.0, %v1697
      %v1699 = vpop.f32.mrf.mxu0
      %1700 = vmatprep.mubr.f32.mxu0 %v1519
      %1701 = vmatmul.mubr.f32.gmra.mxu0 %v1442
      %v1702 = vpop.f32.mrf.mxu0
      %v1703 = vadd.f32 0.0, %v1702
      %v1704 = vpop.f32.mrf.mxu0
      %1705 = vmatprep.mubr.f32.mxu0 %v1522
      %1706 = vmatmul.mubr.f32.gmra.mxu0 %v1444
      %v1707 = vpop.f32.mrf.mxu0
      %v1708 = vadd.f32 0.0, %v1707
      %v1709 = vpop.f32.mrf.mxu0
      %1710 = vmatprep.mubr.f32.mxu0 %v1525
      %1711 = vmatmul.mubr.f32.gmra.mxu0 %v1446
      %v1712 = vpop.f32.mrf.mxu0
      %v1713 = vadd.f32 0.0, %v1712
      %v1714 = vpop.f32.mrf.mxu0
      %1715 = vmatprep.mubr.f32.mxu0 %v1528
      %1716 = vmatmul.mubr.f32.gmra.mxu0 %v1448
      %v1717 = vpop.f32.mrf.mxu0
      %v1718 = vadd.f32 0.0, %v1717
      %v1719 = vpop.f32.mrf.mxu0
      %1720 = vmatprep.mubr.f32.mxu0 %v1531
      %1721 = vmatmul.mubr.f32.gmra.mxu0 %v1450
      %v1722 = vpop.f32.mrf.mxu0
      %v1723 = vadd.f32 0.0, %v1722
      %v1724 = vpop.f32.mrf.mxu0
      %1725 = vmatprep.mubr.f32.mxu0 %v1534
      %1726 = vmatmul.mubr.f32.gmra.mxu0 %v1452
      %v1727 = vpop.f32.mrf.mxu0
      %v1728 = vadd.f32 0.0, %v1727
      %v1729 = vpop.f32.mrf.mxu0
      %1730 = vmatprep.mubr.f32.mxu0 %v1537
      %1731 = vmatmul.mubr.f32.gmra.mxu0 %v1454
      %v1732 = vpop.f32.mrf.mxu0
      %v1733 = vadd.f32 0.0, %v1732
      %v1734 = vpop.f32.mrf.mxu0
      %1735 = vmatprep.mubr.f32.mxu0 %v1540
      %1736 = vmatmul.mubr.f32.gmra.mxu0 %v1456
      %v1737 = vpop.f32.mrf.mxu0
      %v1738 = vadd.f32 0.0, %v1737
      %v1739 = vpop.f32.mrf.mxu0
      %1740 = vmatprep.mubr.f32.mxu0 %v1543
      %1741 = vmatmul.mubr.f32.gmra.mxu0 %v1458
      %v1742 = vpop.f32.mrf.mxu0
      %v1743 = vadd.f32 0.0, %v1742
      %v1744 = vpop.f32.mrf.mxu0
      %1745 = vmatprep.mubr.f32.mxu0 %v1546
      %1746 = vmatmul.mubr.f32.gmra.mxu0 %v1460
      %v1747 = vpop.f32.mrf.mxu0
      %v1748 = vadd.f32 0.0, %v1747
      %v1749 = vpop.f32.mrf.mxu0
      %1750 = vmatprep.mubr.f32.mxu0 %v1549
      %1751 = vmatmul.mubr.f32.gmra.mxu0 %v1462
      %v1752 = vpop.f32.mrf.mxu0
      %v1753 = vadd.f32 0.0, %v1752
      %v1754 = vpop.f32.mrf.mxu0
      %1755 = vmatprep.mubr.f32.mxu0 %v1552
      %1756 = vmatmul.mubr.f32.gmra.mxu0 %v1464
      %v1757 = vpop.f32.mrf.mxu0
      %v1758 = vadd.f32 0.0, %v1757
      %v1759 = vpop.f32.mrf.mxu0
      %1760 = vmatprep.mubr.f32.mxu0 %v1555
      %1761 = vmatmul.mubr.f32.gmra.mxu0 %v1466
      %v1762 = vpop.f32.mrf.mxu0
      %v1763 = vadd.f32 0.0, %v1762
      %v1764 = vpop.f32.mrf.mxu0
      %1765 = vmatprep.mubr.f32.mxu0 %v1558
      %1766 = vmatmul.mubr.f32.gmra.mxu0 %v1468
      %v1767 = vpop.f32.mrf.mxu0
      %v1768 = vadd.f32 0.0, %v1767
      %v1769 = vpop.f32.mrf.mxu0
      %1770 = vmatprep.mubr.f32.mxu0 %v1561
      %1771 = vmatmul.mubr.f32.gmra.mxu0 %v1470
      %v1772 = vpop.f32.mrf.mxu0
      %v1773 = vadd.f32 0.0, %v1772
      %v1774 = vpop.f32.mrf.mxu0
      %1775 = vmatprep.mubr.f32.mxu0 %v1564
      %1776 = vmatmul.mubr.f32.gmra.mxu0 %v1472
      %v1777 = vpop.f32.mrf.mxu0
      %v1778 = vadd.f32 0.0, %v1777
      %v1779 = vpop.f32.mrf.mxu0
      %1780 = vmatprep.mubr.f32.mxu0 %v1567
      %1781 = vmatmul.mubr.f32.gmra.mxu0 %v1474
      %v1782 = vpop.f32.mrf.mxu0
      %v1783 = vadd.f32 0.0, %v1782
      %v1784 = vpop.f32.mrf.mxu0
      %1785 = vmatprep.mubr.f32.mxu0 %v1570
      %1786 = vmatmul.mubr.f32.gmra.mxu0 %v1476
      %v1787 = vpop.f32.mrf.mxu0
      %v1788 = vadd.f32 0.0, %v1787
      %v1789 = vpop.f32.mrf.mxu0
      %1790 = vmatprep.mubr.f32.mxu0 %v1573
      %1791 = vmatmul.mubr.f32.gmra.mxu0 %v1478
      %v1792 = vpop.f32.mrf.mxu0
      %v1793 = vadd.f32 0.0, %v1792
      %v1794 = vpop.f32.mrf.mxu0
      %1795 = vmatprep.mubr.f32.mxu0 %v1576
      %1796 = vmatmul.mubr.f32.gmra.mxu0 %v1480
      %v1797 = vpop.f32.mrf.mxu0
      %v1798 = vadd.f32 0.0, %v1797
      %v1799 = vpop.f32.mrf.mxu0
      %1800 = vmatprep.mubr.f32.mxu0 %v1579
      %1801 = vmatmul.mubr.f32.gmra.mxu0 %v1482
      %v1802 = vpop.f32.mrf.mxu0
      %v1803 = vadd.f32 0.0, %v1802
      %v1804 = vpop.f32.mrf.mxu0
      %1805 = vdwg.mxu0
      %v1806 = vld [vmem:[%s4] sm:$0xff]
      %v1807 = vld [vmem:[%s4 + $0x8] sm:$0xff]
      %v1808 = vld [vmem:[%s4 + $0x10] sm:$0xff]
      %v1809 = vld [vmem:[%s4 + $0x18] sm:$0xff]
      %v1810 = vld [vmem:[%s4 + $0x20] sm:$0xff]
      %v1811 = vld [vmem:[%s4 + $0x28] sm:$0xff]
      %v1812 = vld [vmem:[%s4 + $0x30] sm:$0xff]
      %v1813 = vld [vmem:[%s4 + $0x38] sm:$0xff]
      %1815 = vset.pattern.permute.xlu0 0
      %1816 = vperm.xlu0 %1815, %v1806
      %v1817 = vpop.permute.xlu0 %1816
      %1820 = vset.pattern.permute.xlu0 0
      %1821 = vperm.xlu0 %1820, %v1807
      %v1822 = vpop.permute.xlu0 %1821
      %1825 = vset.pattern.permute.xlu0 0
      %1826 = vperm.xlu0 %1825, %v1808
      %v1827 = vpop.permute.xlu0 %1826
      %1830 = vset.pattern.permute.xlu0 0
      %1831 = vperm.xlu0 %1830, %v1809
      %v1832 = vpop.permute.xlu0 %1831
      %1835 = vset.pattern.permute.xlu0 0
      %1836 = vperm.xlu0 %1835, %v1810
      %v1837 = vpop.permute.xlu0 %1836
      %1840 = vset.pattern.permute.xlu0 0
      %1841 = vperm.xlu0 %1840, %v1811
      %v1842 = vpop.permute.xlu0 %1841
      %1845 = vset.pattern.permute.xlu0 0
      %1846 = vperm.xlu0 %1845, %v1812
      %v1847 = vpop.permute.xlu0 %1846
      %1850 = vset.pattern.permute.xlu0 0
      %1851 = vperm.xlu0 %1850, %v1813
      %v1852 = vpop.permute.xlu0 %1851
      %v1854 = vadd.f32 %v1648, %v1817
      %v1855 = vadd.f32 %v1653, %v1822
      %v1856 = vadd.f32 %v1658, %v1827
      %v1857 = vadd.f32 %v1663, %v1832
      %v1858 = vadd.f32 %v1668, %v1837
      %v1859 = vadd.f32 %v1673, %v1842
      %v1860 = vadd.f32 %v1678, %v1847
      %v1861 = vadd.f32 %v1683, %v1852
      %vm1862 = vcmp.ge.f32.partialorder %v1854, 0.0
      %vm1863 = vcmp.ge.f32.partialorder %v1855, 0.0
      %vm1864 = vcmp.ge.f32.partialorder %v1856, 0.0
      %vm1865 = vcmp.ge.f32.partialorder %v1857, 0.0
      %vm1866 = vcmp.ge.f32.partialorder %v1858, 0.0
      %vm1867 = vcmp.ge.f32.partialorder %v1859, 0.0
      %vm1868 = vcmp.ge.f32.partialorder %v1860, 0.0
      %vm1869 = vcmp.ge.f32.partialorder %v1861, 0.0
      %v1870 = vmul.f32 %v1854, 0.2
      %v1871 = vmul.f32 %v1855, 0.2
      %v1872 = vmul.f32 %v1856, 0.2
      %v1873 = vmul.f32 %v1857, 0.2
      %v1874 = vmul.f32 %v1858, 0.2
      %v1875 = vmul.f32 %v1859, 0.2
      %v1876 = vmul.f32 %v1860, 0.2
      %v1877 = vmul.f32 %v1861, 0.2
      %v1878 = vsel %vm1862, %v1854, %v1870
      %v1879 = vsel %vm1863, %v1855, %v1871
      %v1880 = vsel %vm1864, %v1856, %v1872
      %v1881 = vsel %vm1865, %v1857, %v1873
      %v1882 = vsel %vm1866, %v1858, %v1874
      %v1883 = vsel %vm1867, %v1859, %v1875
      %v1884 = vsel %vm1868, %v1860, %v1876
      %v1885 = vsel %vm1869, %v1861, %v1877
      %v1886 = vadd.f32 %v1878, 0.0
      %v1887 = vadd.f32 %v1879, 0.0
      %v1888 = vadd.f32 %v1880, 0.0
      %v1889 = vadd.f32 %v1881, 0.0
      %v1890 = vadd.f32 %v1882, 0.0
      %v1891 = vadd.f32 %v1883, 0.0
      %v1892 = vadd.f32 %v1884, 0.0
      %v1893 = vadd.f32 %v1885, 0.0
      %v1894 = vadd.f32 %v1688, %v1817
      %v1895 = vadd.f32 %v1693, %v1822
      %v1896 = vadd.f32 %v1698, %v1827
      %v1897 = vadd.f32 %v1703, %v1832
      %v1898 = vadd.f32 %v1708, %v1837
      %v1899 = vadd.f32 %v1713, %v1842
      %v1900 = vadd.f32 %v1718, %v1847
      %v1901 = vadd.f32 %v1723, %v1852
      %vm1902 = vcmp.ge.f32.partialorder %v1894, 0.0
      %vm1903 = vcmp.ge.f32.partialorder %v1895, 0.0
      %vm1904 = vcmp.ge.f32.partialorder %v1896, 0.0
      %vm1905 = vcmp.ge.f32.partialorder %v1897, 0.0
      %vm1906 = vcmp.ge.f32.partialorder %v1898, 0.0
      %vm1907 = vcmp.ge.f32.partialorder %v1899, 0.0
      %vm1908 = vcmp.ge.f32.partialorder %v1900, 0.0
      %vm1909 = vcmp.ge.f32.partialorder %v1901, 0.0
      %v1910 = vmul.f32 %v1894, 0.2
      %v1911 = vmul.f32 %v1895, 0.2
      %v1912 = vmul.f32 %v1896, 0.2
      %v1913 = vmul.f32 %v1897, 0.2
      %v1914 = vmul.f32 %v1898, 0.2
      %v1915 = vmul.f32 %v1899, 0.2
      %v1916 = vmul.f32 %v1900, 0.2
      %v1917 = vmul.f32 %v1901, 0.2
      %v1918 = vsel %vm1902, %v1894, %v1910
      %v1919 = vsel %vm1903, %v1895, %v1911
      %v1920 = vsel %vm1904, %v1896, %v1912
      %v1921 = vsel %vm1905, %v1897, %v1913
      %v1922 = vsel %vm1906, %v1898, %v1914
      %v1923 = vsel %vm1907, %v1899, %v1915
      %v1924 = vsel %vm1908, %v1900, %v1916
      %v1925 = vsel %vm1909, %v1901, %v1917
      %v1926 = vadd.f32 %v1886, %v1918
      %v1927 = vadd.f32 %v1887, %v1919
      %v1928 = vadd.f32 %v1888, %v1920
      %v1929 = vadd.f32 %v1889, %v1921
      %v1930 = vadd.f32 %v1890, %v1922
      %v1931 = vadd.f32 %v1891, %v1923
      %v1932 = vadd.f32 %v1892, %v1924
      %v1933 = vadd.f32 %v1893, %v1925
      %v1934 = vadd.f32 %v1728, %v1817
      %v1935 = vadd.f32 %v1733, %v1822
      %v1936 = vadd.f32 %v1738, %v1827
      %v1937 = vadd.f32 %v1743, %v1832
      %v1938 = vadd.f32 %v1748, %v1837
      %v1939 = vadd.f32 %v1753, %v1842
      %v1940 = vadd.f32 %v1758, %v1847
      %v1941 = vadd.f32 %v1763, %v1852
      %vm1942 = vcmp.ge.f32.partialorder %v1934, 0.0
      %vm1943 = vcmp.ge.f32.partialorder %v1935, 0.0
      %vm1944 = vcmp.ge.f32.partialorder %v1936, 0.0
      %vm1945 = vcmp.ge.f32.partialorder %v1937, 0.0
      %vm1946 = vcmp.ge.f32.partialorder %v1938, 0.0
      %vm1947 = vcmp.ge.f32.partialorder %v1939, 0.0
      %vm1948 = vcmp.ge.f32.partialorder %v1940, 0.0
      %vm1949 = vcmp.ge.f32.partialorder %v1941, 0.0
      %v1950 = vmul.f32 %v1934, 0.2
      %v1951 = vmul.f32 %v1935, 0.2
      %v1952 = vmul.f32 %v1936, 0.2
      %v1953 = vmul.f32 %v1937, 0.2
      %v1954 = vmul.f32 %v1938, 0.2
      %v1955 = vmul.f32 %v1939, 0.2
      %v1956 = vmul.f32 %v1940, 0.2
      %v1957 = vmul.f32 %v1941, 0.2
      %v1958 = vsel %vm1942, %v1934, %v1950
      %v1959 = vsel %vm1943, %v1935, %v1951
      %v1960 = vsel %vm1944, %v1936, %v1952
      %v1961 = vsel %vm1945, %v1937, %v1953
      %v1962 = vsel %vm1946, %v1938, %v1954
      %v1963 = vsel %vm1947, %v1939, %v1955
      %v1964 = vsel %vm1948, %v1940, %v1956
      %v1965 = vsel %vm1949, %v1941, %v1957
      %v1966 = vadd.f32 %v1926, %v1958
      %v1967 = vadd.f32 %v1927, %v1959
      %v1968 = vadd.f32 %v1928, %v1960
      %v1969 = vadd.f32 %v1929, %v1961
      %v1970 = vadd.f32 %v1930, %v1962
      %v1971 = vadd.f32 %v1931, %v1963
      %v1972 = vadd.f32 %v1932, %v1964
      %v1973 = vadd.f32 %v1933, %v1965
      %v1974 = vadd.f32 %v1768, %v1817
      %v1975 = vadd.f32 %v1773, %v1822
      %v1976 = vadd.f32 %v1778, %v1827
      %v1977 = vadd.f32 %v1783, %v1832
      %v1978 = vadd.f32 %v1788, %v1837
      %v1979 = vadd.f32 %v1793, %v1842
      %v1980 = vadd.f32 %v1798, %v1847
      %v1981 = vadd.f32 %v1803, %v1852
      %vm1982 = vcmp.ge.f32.partialorder %v1974, 0.0
      %vm1983 = vcmp.ge.f32.partialorder %v1975, 0.0
      %vm1984 = vcmp.ge.f32.partialorder %v1976, 0.0
      %vm1985 = vcmp.ge.f32.partialorder %v1977, 0.0
      %vm1986 = vcmp.ge.f32.partialorder %v1978, 0.0
      %vm1987 = vcmp.ge.f32.partialorder %v1979, 0.0
      %vm1988 = vcmp.ge.f32.partialorder %v1980, 0.0
      %vm1989 = vcmp.ge.f32.partialorder %v1981, 0.0
      %v1990 = vmul.f32 %v1974, 0.2
      %v1991 = vmul.f32 %v1975, 0.2
      %v1992 = vmul.f32 %v1976, 0.2
      %v1993 = vmul.f32 %v1977, 0.2
      %v1994 = vmul.f32 %v1978, 0.2
      %v1995 = vmul.f32 %v1979, 0.2
      %v1996 = vmul.f32 %v1980, 0.2
      %v1997 = vmul.f32 %v1981, 0.2
      %v1998 = vsel %vm1982, %v1974, %v1990
      %v1999 = vsel %vm1983, %v1975, %v1991
      %v2000 = vsel %vm1984, %v1976, %v1992
      %v2001 = vsel %vm1985, %v1977, %v1993
      %v2002 = vsel %vm1986, %v1978, %v1994
      %v2003 = vsel %vm1987, %v1979, %v1995
      %v2004 = vsel %vm1988, %v1980, %v1996
      %v2005 = vsel %vm1989, %v1981, %v1997
      %v2006 = vadd.f32 %v1966, %v1998
      %v2007 = vadd.f32 %v1967, %v1999
      %v2008 = vadd.f32 %v1968, %v2000
      %v2009 = vadd.f32 %v1969, %v2001
      %v2010 = vadd.f32 %v1970, %v2002
      %v2011 = vadd.f32 %v1971, %v2003
      %v2012 = vadd.f32 %v1972, %v2004
      %v2013 = vadd.f32 %v1973, %v2005
      %v2014 = vmul.f32 %v2006, 0.25
      %v2015 = vmul.f32 %v2007, 0.25
      %v2016 = vmul.f32 %v2008, 0.25
      %v2017 = vmul.f32 %v2009, 0.25
      %v2018 = vmul.f32 %v2010, 0.25
      %v2019 = vmul.f32 %v2011, 0.25
      %v2020 = vmul.f32 %v2012, 0.25
      %v2021 = vmul.f32 %v2013, 0.25
      %2024 = vrot.lane.b32.xlu0 %v2016, 1
      %v2025 = vpop.permute.xlu0 %2024
      %2026 = vrot.lane.b32.xlu0 %v2017, 1
      %v2027 = vpop.permute.xlu0 %2026
      %v2030 = vsel %vm1387, %v2025, 0.0
      %v2031 = vsel %vm1387, %v2027, 0.0
      %2034 = vrot.lane.b32.xlu0 %v2018, 1
      %v2035 = vpop.permute.xlu0 %2034
      %2036 = vrot.lane.b32.xlu0 %v2019, 1
      %v2037 = vpop.permute.xlu0 %2036
      %v2040 = vsel %vm1387, %v2035, 0.0
      %v2041 = vsel %vm1387, %v2037, 0.0
      %2044 = vrot.lane.b32.xlu0 %v2020, 1
      %v2045 = vpop.permute.xlu0 %2044
      %2046 = vrot.lane.b32.xlu0 %v2021, 1
      %v2047 = vpop.permute.xlu0 %2046
      %v2050 = vsel %vm1387, %v2045, 0.0
      %v2051 = vsel %vm1387, %v2047, 0.0
      %2054 = vrot.lane.b32.xlu0 %v2014, 127
      %v2055 = vpop.permute.xlu0 %2054
      %2056 = vrot.lane.b32.xlu0 %v2015, 127
      %v2057 = vpop.permute.xlu0 %2056
      %v2060 = vsel %vm1408, %v2055, 0.0
      %v2061 = vsel %vm1408, %v2057, 0.0
      %2062 = vrot.lane.b32.xlu0 %v2016, 127
      %v2063 = vpop.permute.xlu0 %2062
      %2064 = vrot.lane.b32.xlu0 %v2017, 127
      %v2065 = vpop.permute.xlu0 %2064
      %v2068 = vsel %vm1408, %v2063, 0.0
      %v2069 = vsel %vm1408, %v2065, 0.0
      %2070 = vrot.lane.b32.xlu0 %v2018, 127
      %v2071 = vpop.permute.xlu0 %2070
      %2072 = vrot.lane.b32.xlu0 %v2019, 127
      %v2073 = vpop.permute.xlu0 %2072
      %v2076 = vsel %vm1408, %v2071, 0.0
      %v2077 = vsel %vm1408, %v2073, 0.0
      %v2078 = vld [vmem:[%s5] sm:$0xff]
      %v2079 = vld [vmem:[%s5 + $0x8] sm:$0xff]
      %v2080 = vld [vmem:[%s5 + $0x10] sm:$0xff]
      %v2081 = vld [vmem:[%s5 + $0x18] sm:$0xff]
      %v2082 = vld [vmem:[%s5 + $0x20] sm:$0xff]
      %v2083 = vld [vmem:[%s5 + $0x28] sm:$0xff]
      %v2084 = vld [vmem:[%s5 + $0x30] sm:$0xff]
      %v2085 = vld [vmem:[%s5 + $0x38] sm:$0xff]
      %v2086 = vld [vmem:[%s5 + $0x40] sm:$0xff]
      %v2087 = vld [vmem:[%s5 + $0x48] sm:$0xff]
      %v2088 = vld [vmem:[%s5 + $0x50] sm:$0xff]
      %v2089 = vld [vmem:[%s5 + $0x58] sm:$0xff]
      %v2090 = vld [vmem:[%s5 + $0x60] sm:$0xff]
      %v2091 = vld [vmem:[%s5 + $0x68] sm:$0xff]
      %v2092 = vld [vmem:[%s5 + $0x70] sm:$0xff]
      %v2093 = vld [vmem:[%s5 + $0x78] sm:$0xff]
      %v2094 = vld [vmem:[%s5 + $0x80] sm:$0xff]
      %v2095 = vld [vmem:[%s5 + $0x88] sm:$0xff]
      %v2096 = vld [vmem:[%s5 + $0x90] sm:$0xff]
      %v2097 = vld [vmem:[%s5 + $0x98] sm:$0xff]
      %v2098 = vld [vmem:[%s5 + $0xa0] sm:$0xff]
      %v2099 = vld [vmem:[%s5 + $0xa8] sm:$0xff]
      %v2100 = vld [vmem:[%s5 + $0xb0] sm:$0xff]
      %v2101 = vld [vmem:[%s5 + $0xb8] sm:$0xff]
      %v2102 = vld [vmem:[%s5 + $0xc0] sm:$0xff]
      %v2103 = vld [vmem:[%s5 + $0xc8] sm:$0xff]
      %v2104 = vld [vmem:[%s5 + $0xd0] sm:$0xff]
      %v2105 = vld [vmem:[%s5 + $0xd8] sm:$0xff]
      %v2106 = vld [vmem:[%s5 + $0xe0] sm:$0xff]
      %v2107 = vld [vmem:[%s5 + $0xe8] sm:$0xff]
      %v2108 = vld [vmem:[%s5 + $0xf0] sm:$0xff]
      %v2109 = vld [vmem:[%s5 + $0xf8] sm:$0xff]
      %vm2110 = vcmask 261120
      %v2112 = vsel %vm2110, %v2079, 0
      %v2115 = vsel %vm2110, %v2081, 0
      %v2118 = vsel %vm2110, %v2083, 0
      %v2121 = vsel %vm2110, %v2085, 0
      %v2124 = vsel %vm2110, %v2087, 0
      %v2127 = vsel %vm2110, %v2089, 0
      %v2130 = vsel %vm2110, %v2091, 0
      %v2133 = vsel %vm2110, %v2093, 0
      %v2136 = vsel %vm2110, %v2095, 0
      %v2139 = vsel %vm2110, %v2097, 0
      %v2142 = vsel %vm2110, %v2099, 0
      %v2145 = vsel %vm2110, %v2101, 0
      %v2148 = vsel %vm2110, %v2103, 0
      %v2151 = vsel %vm2110, %v2105, 0
      %v2154 = vsel %vm2110, %v2107, 0
      %v2157 = vsel %vm2110, %v2109, 0
      %2159 = vmatprep.subr.mxu0 0.0
      %2160 = vmatpush1.msra.mxu0 %v2061
      %2161 = vmatprep.subr.mxu0 0.0
      %2162 = vmatpush1.msra.mxu0 %v2060
      %2163 = vmatprep.subr.mxu0 0.0
      %2164 = vmatpush1.msra.mxu0 %v2021
      %2165 = vmatprep.subr.mxu0 0.0
      %2166 = vmatpush1.msra.mxu0 %v2020
      %2167 = vmatprep.subr.mxu0 0.0
      %2168 = vmatpush1.msra.mxu0 %v2019
      %2169 = vmatprep.subr.mxu0 0.0
      %2170 = vmatpush1.msra.mxu0 %v2018
      %2171 = vmatprep.subr.mxu0 0.0
      %2172 = vmatpush1.msra.mxu0 %v2017
      %2173 = vmatprep.subr.mxu0 0.0
      %2174 = vmatpush1.msra.mxu0 %v2016
      %2175 = vmatprep.subr.mxu0 0.0
      %2176 = vmatpush1.msra.mxu0 %v2015
      %2177 = vmatprep.subr.mxu0 0.0
      %2178 = vmatpush1.msra.mxu0 %v2014
      %2179 = vmatprep.subr.mxu0 0.0
      %2180 = vmatpush1.msra.mxu0 %v2051
      %2181 = vmatprep.subr.mxu0 0.0
      %2182 = vmatpush1.msra.mxu0 %v2050
      %2183 = vmatprep.subr.mxu0 0.0
      %2184 = vmatpush1.msra.mxu0 %v2041
      %2185 = vmatprep.subr.mxu0 0.0
      %2186 = vmatpush1.msra.mxu0 %v2040
      %2187 = vmatprep.subr.mxu0 0.0
      %2188 = vmatpush1.msra.mxu0 %v2031
      %2189 = vmatprep.subr.mxu0 0.0
      %2190 = vmatpush1.msra.mxu0 %v2030
      %2191 = vmatprep.subr.mxu0 0.0
      %2192 = vmatpush2.msra.mxu0 0.0
      %2193 = vmatprep.subr.mxu0 0.0
      %2194 = vmatpush2.msra.mxu0 0.0
      %2195 = vmatprep.subr.mxu0 0.0
      %2196 = vmatpush2.msra.mxu0 0.0
      %2197 = vmatprep.subr.mxu0 0.0
      %2198 = vmatpush2.msra.mxu0 0.0
      %2199 = vmatprep.subr.mxu0 0.0
      %2200 = vmatpush2.msra.mxu0 0.0
      %2201 = vmatprep.subr.mxu0 0.0
      %2202 = vmatpush2.msra.mxu0 0.0
      %2203 = vmatprep.subr.mxu0 0.0
      %2204 = vmatpush2.msra.mxu0 0.0
      %2205 = vmatprep.subr.mxu0 0.0
      %2206 = vmatpush2.msra.mxu0 0.0
      %2207 = vmatprep.subr.mxu0 0.0
      %2208 = vmatpush2.msra.mxu0 0.0
      %2209 = vmatprep.subr.mxu0 0.0
      %2210 = vmatpush2.msra.mxu0 0.0
      %2211 = vmatprep.subr.mxu0 0.0
      %2212 = vmatpush2.msra.mxu0 0.0
      %2213 = vmatprep.subr.mxu0 0.0
      %2214 = vmatpush2.msra.mxu0 0.0
      %2215 = vmatprep.subr.mxu0 0.0
      %2216 = vmatpush2.msra.mxu0 %v2077
      %2217 = vmatprep.subr.mxu0 0.0
      %2218 = vmatpush2.msra.mxu0 %v2076
      %2219 = vmatprep.subr.mxu0 0.0
      %2220 = vmatpush2.msra.mxu0 %v2069
      %2221 = vmatprep.subr.mxu0 0.0
      %2222 = vmatpush2.msra.mxu0 %v2068
      %2223 = vmatprep.mubr.f32.mxu0 %v2112
      %2224 = vmatmul.mubr.f32.gmra.mxu0 %v2078
      %v2225 = vpop.f32.mrf.mxu0
      %v2226 = vadd.f32 0.0, %v2225
      %v2227 = vpop.f32.mrf.mxu0
      %2228 = vmatprep.mubr.f32.mxu0 %v2115
      %2229 = vmatmul.mubr.f32.gmra.mxu0 %v2080
      %v2230 = vpop.f32.mrf.mxu0
      %v2231 = vadd.f32 0.0, %v2230
      %v2232 = vpop.f32.mrf.mxu0
      %2233 = vmatprep.mubr.f32.mxu0 %v2118
      %2234 = vmatmul.mubr.f32.gmra.mxu0 %v2082
      %v2235 = vpop.f32.mrf.mxu0
      %v2236 = vadd.f32 0.0, %v2235
      %v2237 = vpop.f32.mrf.mxu0
      %2238 = vmatprep.mubr.f32.mxu0 %v2121
      %2239 = vmatmul.mubr.f32.gmra.mxu0 %v2084
      %v2240 = vpop.f32.mrf.mxu0
      %v2241 = vadd.f32 0.0, %v2240
      %v2242 = vpop.f32.mrf.mxu0
      %2243 = vmatprep.mubr.f32.mxu0 %v2124
      %2244 = vmatmul.mubr.f32.gmra.mxu0 %v2086
      %v2245 = vpop.f32.mrf.mxu0
      %v2246 = vadd.f32 0.0, %v2245
      %v2247 = vpop.f32.mrf.mxu0
      %2248 = vmatprep.mubr.f32.mxu0 %v2127
      %2249 = vmatmul.mubr.f32.gmra.mxu0 %v2088
      %v2250 = vpop.f32.mrf.mxu0
      %v2251 = vadd.f32 0.0, %v2250
      %v2252 = vpop.f32.mrf.mxu0
      %2253 = vmatprep.mubr.f32.mxu0 %v2130
      %2254 = vmatmul.mubr.f32.gmra.mxu0 %v2090
      %v2255 = vpop.f32.mrf.mxu0
      %v2256 = vadd.f32 0.0, %v2255
      %v2257 = vpop.f32.mrf.mxu0
      %2258 = vmatprep.mubr.f32.mxu0 %v2133
      %2259 = vmatmul.mubr.f32.gmra.mxu0 %v2092
      %v2260 = vpop.f32.mrf.mxu0
      %v2261 = vadd.f32 0.0, %v2260
      %v2262 = vpop.f32.mrf.mxu0
      %2263 = vmatprep.mubr.f32.mxu0 %v2136
      %2264 = vmatmul.mubr.f32.gmra.mxu0 %v2094
      %v2265 = vpop.f32.mrf.mxu0
      %v2266 = vadd.f32 0.0, %v2265
      %v2267 = vpop.f32.mrf.mxu0
      %2268 = vmatprep.mubr.f32.mxu0 %v2139
      %2269 = vmatmul.mubr.f32.gmra.mxu0 %v2096
      %v2270 = vpop.f32.mrf.mxu0
      %v2271 = vadd.f32 0.0, %v2270
      %v2272 = vpop.f32.mrf.mxu0
      %2273 = vmatprep.mubr.f32.mxu0 %v2142
      %2274 = vmatmul.mubr.f32.gmra.mxu0 %v2098
      %v2275 = vpop.f32.mrf.mxu0
      %v2276 = vadd.f32 0.0, %v2275
      %v2277 = vpop.f32.mrf.mxu0
      %2278 = vmatprep.mubr.f32.mxu0 %v2145
      %2279 = vmatmul.mubr.f32.gmra.mxu0 %v2100
      %v2280 = vpop.f32.mrf.mxu0
      %v2281 = vadd.f32 0.0, %v2280
      %v2282 = vpop.f32.mrf.mxu0
      %2283 = vmatprep.mubr.f32.mxu0 %v2148
      %2284 = vmatmul.mubr.f32.gmra.mxu0 %v2102
      %v2285 = vpop.f32.mrf.mxu0
      %v2286 = vadd.f32 0.0, %v2285
      %v2287 = vpop.f32.mrf.mxu0
      %2288 = vmatprep.mubr.f32.mxu0 %v2151
      %2289 = vmatmul.mubr.f32.gmra.mxu0 %v2104
      %v2290 = vpop.f32.mrf.mxu0
      %v2291 = vadd.f32 0.0, %v2290
      %v2292 = vpop.f32.mrf.mxu0
      %2293 = vmatprep.mubr.f32.mxu0 %v2154
      %2294 = vmatmul.mubr.f32.gmra.mxu0 %v2106
      %v2295 = vpop.f32.mrf.mxu0
      %v2296 = vadd.f32 0.0, %v2295
      %v2297 = vpop.f32.mrf.mxu0
      %2298 = vmatprep.mubr.f32.mxu0 %v2157
      %2299 = vmatmul.mubr.f32.gmra.mxu0 %v2108
      %v2300 = vpop.f32.mrf.mxu0
      %v2301 = vadd.f32 0.0, %v2300
      %v2302 = vpop.f32.mrf.mxu0
      %2303 = vdwg.mxu0
      %v2304 = vld [vmem:[%s6] sm:$0xff]
      %v2305 = vld [vmem:[%s6 + $0x8] sm:$0xff]
      %v2306 = vld [vmem:[%s6 + $0x10] sm:$0xff]
      %v2307 = vld [vmem:[%s6 + $0x18] sm:$0xff]
      %2309 = vset.pattern.permute.xlu0 0
      %2310 = vperm.xlu0 %2309, %v2304
      %v2311 = vpop.permute.xlu0 %2310
      %2314 = vset.pattern.permute.xlu0 0
      %2315 = vperm.xlu0 %2314, %v2305
      %v2316 = vpop.permute.xlu0 %2315
      %2319 = vset.pattern.permute.xlu0 0
      %2320 = vperm.xlu0 %2319, %v2306
      %v2321 = vpop.permute.xlu0 %2320
      %2324 = vset.pattern.permute.xlu0 0
      %2325 = vperm.xlu0 %2324, %v2307
      %v2326 = vpop.permute.xlu0 %2325
      %v2328 = vadd.f32 %v2226, %v2311
      %v2329 = vadd.f32 %v2231, %v2316
      %v2330 = vadd.f32 %v2236, %v2321
      %v2331 = vadd.f32 %v2241, %v2326
      %vm2332 = vcmp.ge.f32.partialorder %v2328, 0.0
      %vm2333 = vcmp.ge.f32.partialorder %v2329, 0.0
      %vm2334 = vcmp.ge.f32.partialorder %v2330, 0.0
      %vm2335 = vcmp.ge.f32.partialorder %v2331, 0.0
      %v2336 = vmul.f32 %v2328, 0.2
      %v2337 = vmul.f32 %v2329, 0.2
      %v2338 = vmul.f32 %v2330, 0.2
      %v2339 = vmul.f32 %v2331, 0.2
      %v2340 = vsel %vm2332, %v2328, %v2336
      %v2341 = vsel %vm2333, %v2329, %v2337
      %v2342 = vsel %vm2334, %v2330, %v2338
      %v2343 = vsel %vm2335, %v2331, %v2339
      %v2344 = vadd.f32 %v2340, 0.0
      %v2345 = vadd.f32 %v2341, 0.0
      %v2346 = vadd.f32 %v2342, 0.0
      %v2347 = vadd.f32 %v2343, 0.0
      %v2348 = vadd.f32 %v2246, %v2311
      %v2349 = vadd.f32 %v2251, %v2316
      %v2350 = vadd.f32 %v2256, %v2321
      %v2351 = vadd.f32 %v2261, %v2326
      %vm2352 = vcmp.ge.f32.partialorder %v2348, 0.0
      %vm2353 = vcmp.ge.f32.partialorder %v2349, 0.0
      %vm2354 = vcmp.ge.f32.partialorder %v2350, 0.0
      %vm2355 = vcmp.ge.f32.partialorder %v2351, 0.0
      %v2356 = vmul.f32 %v2348, 0.2
      %v2357 = vmul.f32 %v2349, 0.2
      %v2358 = vmul.f32 %v2350, 0.2
      %v2359 = vmul.f32 %v2351, 0.2
      %v2360 = vsel %vm2352, %v2348, %v2356
      %v2361 = vsel %vm2353, %v2349, %v2357
      %v2362 = vsel %vm2354, %v2350, %v2358
      %v2363 = vsel %vm2355, %v2351, %v2359
      %v2364 = vadd.f32 %v2344, %v2360
      %v2365 = vadd.f32 %v2345, %v2361
      %v2366 = vadd.f32 %v2346, %v2362
      %v2367 = vadd.f32 %v2347, %v2363
      %v2368 = vadd.f32 %v2266, %v2311
      %v2369 = vadd.f32 %v2271, %v2316
      %v2370 = vadd.f32 %v2276, %v2321
      %v2371 = vadd.f32 %v2281, %v2326
      %vm2372 = vcmp.ge.f32.partialorder %v2368, 0.0
      %vm2373 = vcmp.ge.f32.partialorder %v2369, 0.0
      %vm2374 = vcmp.ge.f32.partialorder %v2370, 0.0
      %vm2375 = vcmp.ge.f32.partialorder %v2371, 0.0
      %v2376 = vmul.f32 %v2368, 0.2
      %v2377 = vmul.f32 %v2369, 0.2
      %v2378 = vmul.f32 %v2370, 0.2
      %v2379 = vmul.f32 %v2371, 0.2
      %v2380 = vsel %vm2372, %v2368, %v2376
      %v2381 = vsel %vm2373, %v2369, %v2377
      %v2382 = vsel %vm2374, %v2370, %v2378
      %v2383 = vsel %vm2375, %v2371, %v2379
      %v2384 = vadd.f32 %v2364, %v2380
      %v2385 = vadd.f32 %v2365, %v2381
      %v2386 = vadd.f32 %v2366, %v2382
      %v2387 = vadd.f32 %v2367, %v2383
      %v2388 = vadd.f32 %v2286, %v2311
      %v2389 = vadd.f32 %v2291, %v2316
      %v2390 = vadd.f32 %v2296, %v2321
      %v2391 = vadd.f32 %v2301, %v2326
      %vm2392 = vcmp.ge.f32.partialorder %v2388, 0.0
      %vm2393 = vcmp.ge.f32.partialorder %v2389, 0.0
      %vm2394 = vcmp.ge.f32.partialorder %v2390, 0.0
      %vm2395 = vcmp.ge.f32.partialorder %v2391, 0.0
      %v2396 = vmul.f32 %v2388, 0.2
      %v2397 = vmul.f32 %v2389, 0.2
      %v2398 = vmul.f32 %v2390, 0.2
      %v2399 = vmul.f32 %v2391, 0.2
      %v2400 = vsel %vm2392, %v2388, %v2396
      %v2401 = vsel %vm2393, %v2389, %v2397
      %v2402 = vsel %vm2394, %v2390, %v2398
      %v2403 = vsel %vm2395, %v2391, %v2399
      %v2404 = vadd.f32 %v2384, %v2400
      %v2405 = vadd.f32 %v2385, %v2401
      %v2406 = vadd.f32 %v2386, %v2402
      %v2407 = vadd.f32 %v2387, %v2403
      %v2408 = vmul.f32 %v2404, 0.25
      %v2409 = vmul.f32 %v2405, 0.25
      %v2410 = vmul.f32 %v2406, 0.25
      %v2411 = vmul.f32 %v2407, 0.25
      %2412 = vst [vmem:[%s278] sm:$0xff] %v2408
      %2413 = vst [vmem:[%s278 + $0x8] sm:$0xff] %v2409
      %2414 = vst [vmem:[%s278 + $0x10] sm:$0xff] %v2410
      %2415 = vst [vmem:[%s278 + $0x18] sm:$0xff] %v2411
      %p2416 = scmp.lt.s32.totalorder %s18, 1
      %s2417 = scalar_select %p2416, %s18, 1
      %s2418 = smul.addr %s2417, 4
      %s2419 = smul.addr %s2418, 8
      %s2420 = scalar_lea.vmem %s7, %s2419
      // Predicated region
      $region49: #{_lambda_.2} parent=47 // pred_check
        %p2421 = pneg %p188
      $region50: #{_lambda_.2} parent=47 // pred_check_branch
        %2423 = sbr.rel (%p2421) target = $region52
      $region51: #{_lambda_.2} parent=47 // pred_region
        _
      $region52: #{_lambda_.2} parent=47 // pred_fallthru
        _
    $region48: #{_lambda_.2} parent=5 // pred_fallthru
      _
    %p2424 = scmp.le.s32.totalorder 2, %s13
    // Predicated region
    $region53: #{_lambda_.2} parent=5 // pred_check
      %p2425 = pneg %p2424
    $region54: #{_lambda_.2} parent=5 // pred_check_branch
      %2427 = sbr.rel (%p2425) target = $region56
    $region55: #{_lambda_.2} parent=5 // pred_region
      %s2428 = ssub.s32 %s13, 2
      // Predicated region
      $region57: #{_lambda_.2} parent=55 // pred_check
        %p2429 = pneg %p194
      $region58: #{_lambda_.2} parent=55 // pred_check_branch
        %2431 = sbr.rel (%p2429) target = $region60
      $region59: #{_lambda_.2} parent=55 // pred_region
        %p2432 = scmp.lt.s32.totalorder %s19, 1
        %s2433 = scalar_select %p2432, %s19, 1
        %s2434 = smul.addr %s2433, 4
        %s2435 = smul.addr %s2434, 8
        %s2436 = scalar_lea.vmem %s7, %s2435
      $region60: #{_lambda_.2} parent=55 // pred_fallthru
        _
    $region56: #{_lambda_.2} parent=5 // pred_fallthru
      _
  $region6: #{_lambda_.2} parent=0 // loop_footer
    %s17 = sadd.s32 1, %s13
  $region7: #{_lambda_.2} parent=0 // loop_footer_branch
    %12 = sbr.rel target = $region3
  $region8: #{_lambda_.2} parent=0 // loop_exit
    _

// kernel: _lambda_.3
$region0: #{_lambda_.3}
  #allocation0 [shape = 'u32[]', space=smem, size = 0x4, offset = 0x4, fixed_abs, tag = 'smem constant byte address 0x4 - core index']
  #allocation1 [shape = 'u32[144,128]{1,0:T(1,128)}', space=vmem, size = 0x12000, scoped, tag = 'internal scratch']
  %s0 = inlined_call_operand.vmem [shape: f32[16,512], index: 0, kind: input, shape index: {}]
  %s1 = inlined_call_operand.vmem [shape: f32[512,1024], index: 1, kind: input, shape index: {}]
  %s2 = inlined_call_operand.vmem [shape: f32[1,1024], index: 2, kind: input, shape index: {}]
  %s3 = inlined_call_operand.vmem [shape: f32[1,1024], index: 3, kind: input, shape index: {}]
  %s4 = inlined_call_operand.vmem [shape: f32[1,1024], index: 4, kind: input, shape index: {}]
  %s5 = inlined_call_operand.hbm [shape: f32[16,1024], index: 5, kind: output, shape index: {}]
  %s6 = sld [smem:[#allocation0]]
  $region76: #{_lambda_.3} parent=0
    _
  %s8 = ssub.s32 1, %s6
  %s9 = scalar_select 0, %s8, %s6
  $region1: #{_lambda_.3} parent=0
    #allocation2 [shape = 'u8[1048576]{0}', space=vmem, size = 0x100000, scoped, tag = 'input window, operand 1']
    #allocation3 [shape = 'u8[32768]{0}', space=vmem, size = 0x8000, scoped, tag = 'output window, operand 0']
    #allocation4 [shape = 's32[2]{0}', space=sflag, size = 0x8, scoped, tag = 'scoped memory for _lambda_.3']
    %10 = vsyncpa [#allocation4], 0
    %s11 = scalar_lea.sflag [#allocation4], 1
    %12 = vsyncpa %s11, 0
    loop: start=0, step=1, limit=6
    $region2: #{_lambda_.3} parent=1 // loop_pre_header
      _
    $region3: #{_lambda_.3} parent=1 // loop_header
      %s14 = sphi 0, %s18
      %p15 = scmp.ge.s32.totalorder %s14, 6
      %s22 = sphi 0, %s22
      %s24 = sphi 0, %s22
      %s25 = sphi 0, %s24
      %s39 = sphi 0, %s25
      %s45 = sphi 0, %s47
      %s48 = sphi 0, %s45
      %s49 = sphi 0, %s48
      %s65 = sphi 0, %s49
      %s71 = sphi 0, %s73
      %s74 = sphi 0, %s71
      %s75 = sphi 0, %s74
      %s91 = sphi 0, %s75
      %s97 = sphi 0, %s99
      %s100 = sphi 0, %s97
      %s101 = sphi 0, %s100
      %s117 = sphi 0, %s101
      %s123 = sphi 0, %s125
      %s126 = sphi 0, %s123
      %s127 = sphi 0, %s126
      %s143 = sphi 0, %s127
      %s149 = sphi 0, %s151
      %s152 = sphi 0, %s149
      %s153 = sphi 0, %s152
      %s169 = sphi 0, %s153
    $region4: #{_lambda_.3} parent=1 // loop_header_branch
      %17 = sbr.rel (%p15) target = $region8
    $region5: #{_lambda_.3} parent=1 // loop_body
      %s19 = ssub.s32 %s14, 1
      %s20 = ssub.s32 %s14, 2
      %s21 = sadd.s32 %s14, 1
      %s23 = sadd.s32 %s22, 1
      %p26 = scmp.eq.s32.totalorder %s14, 3
      %p27 = scmp.ne.s32.totalorder %s22, %s24
      %p28 = scmp.eq.s32.totalorder %s14, 0
      %p29 = por %p27, %p28
      %p30 = scmp.ne.s32.totalorder %s22, %s24
      %p31 = scmp.eq.s32.totalorder %s19, 3
      %p32 = por %p30, %p31
      %p33 = scmp.ne.s32.totalorder %s24, %s25
      %p34 = scmp.eq.s32.totalorder %s19, 0
      %p35 = por %p33, %p34
      %p36 = scmp.ne.s32.totalorder %s24, %s25
      %p37 = scmp.eq.s32.totalorder %s20, 3
      %p38 = por %p36, %p37
      %p40 = scmp.ne.s32.totalorder %s25, %s39
      %p41 = scmp.eq.s32.totalorder %s20, 0
      %p42 = por %p40, %p41
      %s43 = ssub.s32 %s14, %s21
      %p44 = scmp.eq.s32.totalorder %s43, 0
      %s46 = sadd.s32 %s45, 1
      %s47 = scalar_select %p44, %s45, %s46
      %p50 = pneg %p44
      %p51 = scmp.eq.s32.totalorder %s14, 3
      %p52 = por %p50, %p51
      %p53 = scmp.ne.s32.totalorder %s45, %s48
      %p54 = scmp.eq.s32.totalorder %s14, 0
      %p55 = por %p53, %p54
      %p56 = scmp.ne.s32.totalorder %s45, %s48
      %p57 = scmp.eq.s32.totalorder %s19, 3
      %p58 = por %p56, %p57
      %p59 = scmp.ne.s32.totalorder %s48, %s49
      %p60 = scmp.eq.s32.totalorder %s19, 0
      %p61 = por %p59, %p60
      %p62 = scmp.ne.s32.totalorder %s48, %s49
      %p63 = scmp.eq.s32.totalorder %s20, 3
      %p64 = por %p62, %p63
      %p66 = scmp.ne.s32.totalorder %s49, %s65
      %p67 = scmp.eq.s32.totalorder %s20, 0
      %p68 = por %p66, %p67
      %s69 = ssub.s32 %s14, %s21
      %p70 = scmp.eq.s32.totalorder %s69, 0
      %s72 = sadd.s32 %s71, 1
      %s73 = scalar_select %p70, %s71, %s72
      %p76 = pneg %p70
      %p77 = scmp.eq.s32.totalorder %s14, 3
      %p78 = por %p76, %p77
      %p79 = scmp.ne.s32.totalorder %s71, %s74
      %p80 = scmp.eq.s32.totalorder %s14, 0
      %p81 = por %p79, %p80
      %p82 = scmp.ne.s32.totalorder %s71, %s74
      %p83 = scmp.eq.s32.totalorder %s19, 3
      %p84 = por %p82, %p83
      %p85 = scmp.ne.s32.totalorder %s74, %s75
      %p86 = scmp.eq.s32.totalorder %s19, 0
      %p87 = por %p85, %p86
      %p88 = scmp.ne.s32.totalorder %s74, %s75
      %p89 = scmp.eq.s32.totalorder %s20, 3
      %p90 = por %p88, %p89
      %p92 = scmp.ne.s32.totalorder %s75, %s91
      %p93 = scmp.eq.s32.totalorder %s20, 0
      %p94 = por %p92, %p93
      %s95 = ssub.s32 %s14, %s21
      %p96 = scmp.eq.s32.totalorder %s95, 0
      %s98 = sadd.s32 %s97, 1
      %s99 = scalar_select %p96, %s97, %s98
      %p102 = pneg %p96
      %p103 = scmp.eq.s32.totalorder %s14, 3
      %p104 = por %p102, %p103
      %p105 = scmp.ne.s32.totalorder %s97, %s100
      %p106 = scmp.eq.s32.totalorder %s14, 0
      %p107 = por %p105, %p106
      %p108 = scmp.ne.s32.totalorder %s97, %s100
      %p109 = scmp.eq.s32.totalorder %s19, 3
      %p110 = por %p108, %p109
      %p111 = scmp.ne.s32.totalorder %s100, %s101
      %p112 = scmp.eq.s32.totalorder %s19, 0
      %p113 = por %p111, %p112
      %p114 = scmp.ne.s32.totalorder %s100, %s101
      %p115 = scmp.eq.s32.totalorder %s20, 3
      %p116 = por %p114, %p115
      %p118 = scmp.ne.s32.totalorder %s101, %s117
      %p119 = scmp.eq.s32.totalorder %s20, 0
      %p120 = por %p118, %p119
      %s121 = ssub.s32 %s14, %s21
      %p122 = scmp.eq.s32.totalorder %s121, 0
      %s124 = sadd.s32 %s123, 1
      %s125 = scalar_select %p122, %s123, %s124
      %p128 = pneg %p122
      %p129 = scmp.eq.s32.totalorder %s14, 3
      %p130 = por %p128, %p129
      %p131 = scmp.ne.s32.totalorder %s123, %s126
      %p132 = scmp.eq.s32.totalorder %s14, 0
      %p133 = por %p131, %p132
      %p134 = scmp.ne.s32.totalorder %s123, %s126
      %p135 = scmp.eq.s32.totalorder %s19, 3
      %p136 = por %p134, %p135
      %p137 = scmp.ne.s32.totalorder %s126, %s127
      %p138 = scmp.eq.s32.totalorder %s19, 0
      %p139 = por %p137, %p138
      %p140 = scmp.ne.s32.totalorder %s126, %s127
      %p141 = scmp.eq.s32.totalorder %s20, 3
      %p142 = por %p140, %p141
      %p144 = scmp.ne.s32.totalorder %s127, %s143
      %p145 = scmp.eq.s32.totalorder %s20, 0
      %p146 = por %p144, %p145
      %s147 = ssub.s32 %s14, %s21
      %p148 = scmp.eq.s32.totalorder %s147, 0
      %s150 = sadd.s32 %s149, 1
      %s151 = scalar_select %p148, %s149, %s150
      %p154 = pneg %p148
      %p155 = scmp.eq.s32.totalorder %s14, 3
      %p156 = por %p154, %p155
      %p157 = scmp.ne.s32.totalorder %s149, %s152
      %p158 = scmp.eq.s32.totalorder %s14, 0
      %p159 = por %p157, %p158
      %p160 = scmp.ne.s32.totalorder %s149, %s152
      %p161 = scmp.eq.s32.totalorder %s19, 3
      %p162 = por %p160, %p161
      %p163 = scmp.ne.s32.totalorder %s152, %s153
      %p164 = scmp.eq.s32.totalorder %s19, 0
      %p165 = por %p163, %p164
      %p166 = scmp.ne.s32.totalorder %s152, %s153
      %p167 = scmp.eq.s32.totalorder %s20, 3
      %p168 = por %p166, %p167
      %p170 = scmp.ne.s32.totalorder %s153, %s169
      %p171 = scmp.eq.s32.totalorder %s20, 0
      %p172 = por %p170, %p171
      %p173 = scmp.le.s32.totalorder 1, %s14
      %p174 = scmp.lt.s32.totalorder %s14, 5
      %p175 = pnand %p173, %p174
      %p176 = pneg %p175
      // Predicated region
      $region9: #{_lambda_.3} parent=5 // pred_check
        _
      $region10: #{_lambda_.3} parent=5 // pred_check_branch
        %178 = sbr.rel (%p175) target = $region12
      $region11: #{_lambda_.3} parent=5 // pred_region
        %s179 = ssub.s32 %s14, 1
        // Predicated region
        $region13: #{_lambda_.3} parent=11 // pred_check
          %p180 = pneg %p35
        $region14: #{_lambda_.3} parent=11 // pred_check_branch
          %182 = sbr.rel (%p180) target = $region16
        $region15: #{_lambda_.3} parent=11 // pred_region
          _
        $region16: #{_lambda_.3} parent=11 // pred_fallthru
          _
      $region12: #{_lambda_.3} parent=5 // pred_fallthru
        _
      %p183 = scmp.lt.s32.totalorder %s14, 4
      // Predicated region
      $region17: #{_lambda_.3} parent=5 // pred_check
        %p184 = pneg %p183
      $region18: #{_lambda_.3} parent=5 // pred_check_branch
        %186 = sbr.rel (%p184) target = $region20
      $region19: #{_lambda_.3} parent=5 // pred_region
        // Predicated region
        $region21: #{_lambda_.3} parent=19 // pred_check
          %p187 = pneg %p55
        $region22: #{_lambda_.3} parent=19 // pred_check_branch
          %189 = sbr.rel (%p187) target = $region24
        $region23: #{_lambda_.3} parent=19 // pred_region
          %s190 = sand.u32 %s45, 1
          %s191 = sand.u32 %s45, 1
          %s192 = smul.addr %s191, 1024
          %s193 = scalar_lea.vmem [#allocation2], %s192
          %s194 = smul.u32 2, %s14
          %s195 = smul.addr %s194, 8
          %s196 = scalar_lea.vmem %s1, %s195
          // Predicated region
          $region25: #{_lambda_.3} parent=23 // pred_check
            _
          $region26: #{_lambda_.3} parent=23 // pred_check_branch
            %198 = sbr.rel (0) target = $region28
          $region27: #{_lambda_.3} parent=23 // pred_region
            // Predicated region
            $region29: #{_lambda_.3} parent=27 // pred_check
              _
            $region30: #{_lambda_.3} parent=27 // pred_check_branch
              %200 = sbr.rel (0) target = $region32
            $region31: #{_lambda_.3} parent=27 // pred_region
              loop: start=0, step=1, limit=1
              $region33: #{_lambda_.3} parent=31 // loop_pre_header
                _
              $region34: #{_lambda_.3} parent=31 // loop_header
                %s202 = sphi 0, %s206
                %p203 = scmp.ge.s32.totalorder %s202, 1
                %s207 = sphi %s196, %s196
                %s208 = sphi %s193, %s193
              $region35: #{_lambda_.3} parent=31 // loop_header_branch
                %205 = sbr.rel (%p203) target = $region39
              $region36: #{_lambda_.3} parent=31 // loop_body
                %v209 = vld [vmem:[%s207] sm:$0xff]
                %210 = vst [vmem:[%s208] sm:$0xff] %v209
                %v211 = vld [vmem:[%s207 + $0x8] sm:$0xff]
                %212 = vst [vmem:[%s208 + $0x8] sm:$0xff] %v211
                %v213 = vld [vmem:[%s207 + $0x40] sm:$0xff]
                %214 = vst [vmem:[%s208 + $0x10] sm:$0xff] %v213
                %v215 = vld [vmem:[%s207 + $0x48] sm:$0xff]
                %216 = vst [vmem:[%s208 + $0x18] sm:$0xff] %v215
                %v217 = vld [vmem:[%s207 + $0x80] sm:$0xff]
                %218 = vst [vmem:[%s208 + $0x20] sm:$0xff] %v217
                %v219 = vld [vmem:[%s207 + $0x88] sm:$0xff]
                %220 = vst [vmem:[%s208 + $0x28] sm:$0xff] %v219
                %v221 = vld [vmem:[%s207 + $0xc0] sm:$0xff]
                %222 = vst [vmem:[%s208 + $0x30] sm:$0xff] %v221
                %v223 = vld [vmem:[%s207 + $0xc8] sm:$0xff]
                %224 = vst [vmem:[%s208 + $0x38] sm:$0xff] %v223
                %v225 = vld [vmem:[%s207 + $0x100] sm:$0xff]
                %226 = vst [vmem:[%s208 + $0x40] sm:$0xff] %v225
                %v227 = vld [vmem:[%s207 + $0x108] sm:$0xff]
                %228 = vst [vmem:[%s208 + $0x48] sm:$0xff] %v227
                %v229 = vld [vmem:[%s207 + $0x140] sm:$0xff]
                %230 = vst [vmem:[%s208 + $0x50] sm:$0xff] %v229
                %v231 = vld [vmem:[%s207 + $0x148] sm:$0xff]
                %232 = vst [vmem:[%s208 + $0x58] sm:$0xff] %v231
                %v233 = vld [vmem:[%s207 + $0x180] sm:$0xff]
                %234 = vst [vmem:[%s208 + $0x60] sm:$0xff] %v233
                %v235 = vld [vmem:[%s207 + $0x188] sm:$0xff]
                %236 = vst [vmem:[%s208 + $0x68] sm:$0xff] %v235
                %v237 = vld [vmem:[%s207 + $0x1c0] sm:$0xff]
                %238 = vst [vmem:[%s208 + $0x70] sm:$0xff] %v237
                %v239 = vld [vmem:[%s207 + $0x1c8] sm:$0xff]
                %240 = vst [vmem:[%s208 + $0x78] sm:$0xff] %v239
                %v241 = vld [vmem:[%s207 + $0x200] sm:$0xff]
                %242 = vst [vmem:[%s208 + $0x80] sm:$0xff] %v241
                %v243 = vld [vmem:[%s207 + $0x208] sm:$0xff]
                %244 = vst [vmem:[%s208 + $0x88] sm:$0xff] %v243
                %v245 = vld [vmem:[%s207 + $0x240] sm:$0xff]
                %246 = vst [vmem:[%s208 + $0x90] sm:$0xff] %v245
                %v247 = vld [vmem:[%s207 + $0x248] sm:$0xff]
                %248 = vst [vmem:[%s208 + $0x98] sm:$0xff] %v247
                %v249 = vld [vmem:[%s207 + $0x280] sm:$0xff]
                %250 = vst [vmem:[%s208 + $0xa0] sm:$0xff] %v249
                %v251 = vld [vmem:[%s207 + $0x288] sm:$0xff]
                %252 = vst [vmem:[%s208 + $0xa8] sm:$0xff] %v251
                %v253 = vld [vmem:[%s207 + $0x2c0] sm:$0xff]
                %254 = vst [vmem:[%s208 + $0xb0] sm:$0xff] %v253
                %v255 = vld [vmem:[%s207 + $0x2c8] sm:$0xff]
                %256 = vst [vmem:[%s208 + $0xb8] sm:$0xff] %v255
                %v257 = vld [vmem:[%s207 + $0x300] sm:$0xff]
                %258 = vst [vmem:[%s208 + $0xc0] sm:$0xff] %v257
                %v259 = vld [vmem:[%s207 + $0x308] sm:$0xff]
                %260 = vst [vmem:[%s208 + $0xc8] sm:$0xff] %v259
                %v261 = vld [vmem:[%s207 + $0x340] sm:$0xff]
                %262 = vst [vmem:[%s208 + $0xd0] sm:$0xff] %v261
                %v263 = vld [vmem:[%s207 + $0x348] sm:$0xff]
                %264 = vst [vmem:[%s208 + $0xd8] sm:$0xff] %v263
                %v265 = vld [vmem:[%s207 + $0x380] sm:$0xff]
                %266 = vst [vmem:[%s208 + $0xe0] sm:$0xff] %v265
                %v267 = vld [vmem:[%s207 + $0x388] sm:$0xff]
                %268 = vst [vmem:[%s208 + $0xe8] sm:$0xff] %v267
                %v269 = vld [vmem:[%s207 + $0x3c0] sm:$0xff]
                %270 = vst [vmem:[%s208 + $0xf0] sm:$0xff] %v269
                %v271 = vld [vmem:[%s207 + $0x3c8] sm:$0xff]
                %272 = vst [vmem:[%s208 + $0xf8] sm:$0xff] %v271
                %v273 = vld [vmem:[%s207 + $0x400] sm:$0xff]
                %274 = vst [vmem:[%s208 + $0x100] sm:$0xff] %v273
                %v275 = vld [vmem:[%s207 + $0x408] sm:$0xff]
                %276 = vst [vmem:[%s208 + $0x108] sm:$0xff] %v275
                %v277 = vld [vmem:[%s207 + $0x440] sm:$0xff]
                %278 = vst [vmem:[%s208 + $0x110] sm:$0xff] %v277
                %v279 = vld [vmem:[%s207 + $0x448] sm:$0xff]
                %280 = vst [vmem:[%s208 + $0x118] sm:$0xff] %v279
                %v281 = vld [vmem:[%s207 + $0x480] sm:$0xff]
                %282 = vst [vmem:[%s208 + $0x120] sm:$0xff] %v281
                %v283 = vld [vmem:[%s207 + $0x488] sm:$0xff]
                %284 = vst [vmem:[%s208 + $0x128] sm:$0xff] %v283
                %v285 = vld [vmem:[%s207 + $0x4c0] sm:$0xff]
                %286 = vst [vmem:[%s208 + $0x130] sm:$0xff] %v285
                %v287 = vld [vmem:[%s207 + $0x4c8] sm:$0xff]
                %288 = vst [vmem:[%s208 + $0x138] sm:$0xff] %v287
                %v289 = vld [vmem:[%s207 + $0x500] sm:$0xff]
                %290 = vst [vmem:[%s208 + $0x140] sm:$0xff] %v289
                %v291 = vld [vmem:[%s207 + $0x508] sm:$0xff]
                %292 = vst [vmem:[%s208 + $0x148] sm:$0xff] %v291
                %v293 = vld [vmem:[%s207 + $0x540] sm:$0xff]
                %294 = vst [vmem:[%s208 + $0x150] sm:$0xff] %v293
                %v295 = vld [vmem:[%s207 + $0x548] sm:$0xff]
                %296 = vst [vmem:[%s208 + $0x158] sm:$0xff] %v295
                %v297 = vld [vmem:[%s207 + $0x580] sm:$0xff]
                %298 = vst [vmem:[%s208 + $0x160] sm:$0xff] %v297
                %v299 = vld [vmem:[%s207 + $0x588] sm:$0xff]
                %300 = vst [vmem:[%s208 + $0x168] sm:$0xff] %v299
                %v301 = vld [vmem:[%s207 + $0x5c0] sm:$0xff]
                %302 = vst [vmem:[%s208 + $0x170] sm:$0xff] %v301
                %v303 = vld [vmem:[%s207 + $0x5c8] sm:$0xff]
                %304 = vst [vmem:[%s208 + $0x178] sm:$0xff] %v303
                %v305 = vld [vmem:[%s207 + $0x600] sm:$0xff]
                %306 = vst [vmem:[%s208 + $0x180] sm:$0xff] %v305
                %v307 = vld [vmem:[%s207 + $0x608] sm:$0xff]
                %308 = vst [vmem:[%s208 + $0x188] sm:$0xff] %v307
                %v309 = vld [vmem:[%s207 + $0x640] sm:$0xff]
                %310 = vst [vmem:[%s208 + $0x190] sm:$0xff] %v309
                %v311 = vld [vmem:[%s207 + $0x648] sm:$0xff]
                %312 = vst [vmem:[%s208 + $0x198] sm:$0xff] %v311
                %v313 = vld [vmem:[%s207 + $0x680] sm:$0xff]
                %314 = vst [vmem:[%s208 + $0x1a0] sm:$0xff] %v313
                %v315 = vld [vmem:[%s207 + $0x688] sm:$0xff]
                %316 = vst [vmem:[%s208 + $0x1a8] sm:$0xff] %v315
                %v317 = vld [vmem:[%s207 + $0x6c0] sm:$0xff]
                %318 = vst [vmem:[%s208 + $0x1b0] sm:$0xff] %v317
                %v319 = vld [vmem:[%s207 + $0x6c8] sm:$0xff]
                %320 = vst [vmem:[%s208 + $0x1b8] sm:$0xff] %v319
                %v321 = vld [vmem:[%s207 + $0x700] sm:$0xff]
                %322 = vst [vmem:[%s208 + $0x1c0] sm:$0xff] %v321
                %v323 = vld [vmem:[%s207 + $0x708] sm:$0xff]
                %324 = vst [vmem:[%s208 + $0x1c8] sm:$0xff] %v323
                %v325 = vld [vmem:[%s207 + $0x740] sm:$0xff]
                %326 = vst [vmem:[%s208 + $0x1d0] sm:$0xff] %v325
                %v327 = vld [vmem:[%s207 + $0x748] sm:$0xff]
                %328 = vst [vmem:[%s208 + $0x1d8] sm:$0xff] %v327
                %v329 = vld [vmem:[%s207 + $0x780] sm:$0xff]
                %330 = vst [vmem:[%s208 + $0x1e0] sm:$0xff] %v329
                %v331 = vld [vmem:[%s207 + $0x788] sm:$0xff]
                %332 = vst [vmem:[%s208 + $0x1e8] sm:$0xff] %v331
                %v333 = vld [vmem:[%s207 + $0x7c0] sm:$0xff]
                %334 = vst [vmem:[%s208 + $0x1f0] sm:$0xff] %v333
                %v335 = vld [vmem:[%s207 + $0x7c8] sm:$0xff]
                %336 = vst [vmem:[%s208 + $0x1f8] sm:$0xff] %v335
                %v337 = vld [vmem:[%s207 + $0x800] sm:$0xff]
                %338 = vst [vmem:[%s208 + $0x200] sm:$0xff] %v337
                %v339 = vld [vmem:[%s207 + $0x808] sm:$0xff]
                %340 = vst [vmem:[%s208 + $0x208] sm:$0xff] %v339
                %v341 = vld [vmem:[%s207 + $0x840] sm:$0xff]
                %342 = vst [vmem:[%s208 + $0x210] sm:$0xff] %v341
                %v343 = vld [vmem:[%s207 + $0x848] sm:$0xff]
                %344 = vst [vmem:[%s208 + $0x218] sm:$0xff] %v343
                %v345 = vld [vmem:[%s207 + $0x880] sm:$0xff]
                %346 = vst [vmem:[%s208 + $0x220] sm:$0xff] %v345
                %v347 = vld [vmem:[%s207 + $0x888] sm:$0xff]
                %348 = vst [vmem:[%s208 + $0x228] sm:$0xff] %v347
                %v349 = vld [vmem:[%s207 + $0x8c0] sm:$0xff]
                %350 = vst [vmem:[%s208 + $0x230] sm:$0xff] %v349
                %v351 = vld [vmem:[%s207 + $0x8c8] sm:$0xff]
                %352 = vst [vmem:[%s208 + $0x238] sm:$0xff] %v351
                %v353 = vld [vmem:[%s207 + $0x900] sm:$0xff]
                %354 = vst [vmem:[%s208 + $0x240] sm:$0xff] %v353
                %v355 = vld [vmem:[%s207 + $0x908] sm:$0xff]
                %356 = vst [vmem:[%s208 + $0x248] sm:$0xff] %v355
                %v357 = vld [vmem:[%s207 + $0x940] sm:$0xff]
                %358 = vst [vmem:[%s208 + $0x250] sm:$0xff] %v357
                %v359 = vld [vmem:[%s207 + $0x948] sm:$0xff]
                %360 = vst [vmem:[%s208 + $0x258] sm:$0xff] %v359
                %v361 = vld [vmem:[%s207 + $0x980] sm:$0xff]
                %362 = vst [vmem:[%s208 + $0x260] sm:$0xff] %v361
                %v363 = vld [vmem:[%s207 + $0x988] sm:$0xff]
                %364 = vst [vmem:[%s208 + $0x268] sm:$0xff] %v363
                %v365 = vld [vmem:[%s207 + $0x9c0] sm:$0xff]
                %366 = vst [vmem:[%s208 + $0x270] sm:$0xff] %v365
                %v367 = vld [vmem:[%s207 + $0x9c8] sm:$0xff]
                %368 = vst [vmem:[%s208 + $0x278] sm:$0xff] %v367
                %v369 = vld [vmem:[%s207 + $0xa00] sm:$0xff]
                %370 = vst [vmem:[%s208 + $0x280] sm:$0xff] %v369
                %v371 = vld [vmem:[%s207 + $0xa08] sm:$0xff]
                %372 = vst [vmem:[%s208 + $0x288] sm:$0xff] %v371
                %v373 = vld [vmem:[%s207 + $0xa40] sm:$0xff]
                %374 = vst [vmem:[%s208 + $0x290] sm:$0xff] %v373
                %v375 = vld [vmem:[%s207 + $0xa48] sm:$0xff]
                %376 = vst [vmem:[%s208 + $0x298] sm:$0xff] %v375
                %v377 = vld [vmem:[%s207 + $0xa80] sm:$0xff]
                %378 = vst [vmem:[%s208 + $0x2a0] sm:$0xff] %v377
                %v379 = vld [vmem:[%s207 + $0xa88] sm:$0xff]
                %380 = vst [vmem:[%s208 + $0x2a8] sm:$0xff] %v379
                %v381 = vld [vmem:[%s207 + $0xac0] sm:$0xff]
                %382 = vst [vmem:[%s208 + $0x2b0] sm:$0xff] %v381
                %v383 = vld [vmem:[%s207 + $0xac8] sm:$0xff]
                %384 = vst [vmem:[%s208 + $0x2b8] sm:$0xff] %v383
                %v385 = vld [vmem:[%s207 + $0xb00] sm:$0xff]
                %386 = vst [vmem:[%s208 + $0x2c0] sm:$0xff] %v385
                %v387 = vld [vmem:[%s207 + $0xb08] sm:$0xff]
                %388 = vst [vmem:[%s208 + $0x2c8] sm:$0xff] %v387
                %v389 = vld [vmem:[%s207 + $0xb40] sm:$0xff]
                %390 = vst [vmem:[%s208 + $0x2d0] sm:$0xff] %v389
                %v391 = vld [vmem:[%s207 + $0xb48] sm:$0xff]
                %392 = vst [vmem:[%s208 + $0x2d8] sm:$0xff] %v391
                %v393 = vld [vmem:[%s207 + $0xb80] sm:$0xff]
                %394 = vst [vmem:[%s208 + $0x2e0] sm:$0xff] %v393
                %v395 = vld [vmem:[%s207 + $0xb88] sm:$0xff]
                %396 = vst [vmem:[%s208 + $0x2e8] sm:$0xff] %v395
                %v397 = vld [vmem:[%s207 + $0xbc0] sm:$0xff]
                %398 = vst [vmem:[%s208 + $0x2f0] sm:$0xff] %v397
                %v399 = vld [vmem:[%s207 + $0xbc8] sm:$0xff]
                %400 = vst [vmem:[%s208 + $0x2f8] sm:$0xff] %v399
                %v401 = vld [vmem:[%s207 + $0xc00] sm:$0xff]
                %402 = vst [vmem:[%s208 + $0x300] sm:$0xff] %v401
                %v403 = vld [vmem:[%s207 + $0xc08] sm:$0xff]
                %404 = vst [vmem:[%s208 + $0x308] sm:$0xff] %v403
                %v405 = vld [vmem:[%s207 + $0xc40] sm:$0xff]
                %406 = vst [vmem:[%s208 + $0x310] sm:$0xff] %v405
                %v407 = vld [vmem:[%s207 + $0xc48] sm:$0xff]
                %408 = vst [vmem:[%s208 + $0x318] sm:$0xff] %v407
                %v409 = vld [vmem:[%s207 + $0xc80] sm:$0xff]
                %410 = vst [vmem:[%s208 + $0x320] sm:$0xff] %v409
                %v411 = vld [vmem:[%s207 + $0xc88] sm:$0xff]
                %412 = vst [vmem:[%s208 + $0x328] sm:$0xff] %v411
                %v413 = vld [vmem:[%s207 + $0xcc0] sm:$0xff]
                %414 = vst [vmem:[%s208 + $0x330] sm:$0xff] %v413
                %v415 = vld [vmem:[%s207 + $0xcc8] sm:$0xff]
                %416 = vst [vmem:[%s208 + $0x338] sm:$0xff] %v415
                %v417 = vld [vmem:[%s207 + $0xd00] sm:$0xff]
                %418 = vst [vmem:[%s208 + $0x340] sm:$0xff] %v417
                %v419 = vld [vmem:[%s207 + $0xd08] sm:$0xff]
                %420 = vst [vmem:[%s208 + $0x348] sm:$0xff] %v419
                %v421 = vld [vmem:[%s207 + $0xd40] sm:$0xff]
                %422 = vst [vmem:[%s208 + $0x350] sm:$0xff] %v421
                %v423 = vld [vmem:[%s207 + $0xd48] sm:$0xff]
                %424 = vst [vmem:[%s208 + $0x358] sm:$0xff] %v423
                %v425 = vld [vmem:[%s207 + $0xd80] sm:$0xff]
                %426 = vst [vmem:[%s208 + $0x360] sm:$0xff] %v425
                %v427 = vld [vmem:[%s207 + $0xd88] sm:$0xff]
                %428 = vst [vmem:[%s208 + $0x368] sm:$0xff] %v427
                %v429 = vld [vmem:[%s207 + $0xdc0] sm:$0xff]
                %430 = vst [vmem:[%s208 + $0x370] sm:$0xff] %v429
                %v431 = vld [vmem:[%s207 + $0xdc8] sm:$0xff]
                %432 = vst [vmem:[%s208 + $0x378] sm:$0xff] %v431
                %v433 = vld [vmem:[%s207 + $0xe00] sm:$0xff]
                %434 = vst [vmem:[%s208 + $0x380] sm:$0xff] %v433
                %v435 = vld [vmem:[%s207 + $0xe08] sm:$0xff]
                %436 = vst [vmem:[%s208 + $0x388] sm:$0xff] %v435
                %v437 = vld [vmem:[%s207 + $0xe40] sm:$0xff]
                %438 = vst [vmem:[%s208 + $0x390] sm:$0xff] %v437
                %v439 = vld [vmem:[%s207 + $0xe48] sm:$0xff]
                %440 = vst [vmem:[%s208 + $0x398] sm:$0xff] %v439
                %v441 = vld [vmem:[%s207 + $0xe80] sm:$0xff]
                %442 = vst [vmem:[%s208 + $0x3a0] sm:$0xff] %v441
                %v443 = vld [vmem:[%s207 + $0xe88] sm:$0xff]
                %444 = vst [vmem:[%s208 + $0x3a8] sm:$0xff] %v443
                %v445 = vld [vmem:[%s207 + $0xec0] sm:$0xff]
                %446 = vst [vmem:[%s208 + $0x3b0] sm:$0xff] %v445
                %v447 = vld [vmem:[%s207 + $0xec8] sm:$0xff]
                %448 = vst [vmem:[%s208 + $0x3b8] sm:$0xff] %v447
                %v449 = vld [vmem:[%s207 + $0xf00] sm:$0xff]
                %450 = vst [vmem:[%s208 + $0x3c0] sm:$0xff] %v449
                %v451 = vld [vmem:[%s207 + $0xf08] sm:$0xff]
                %452 = vst [vmem:[%s208 + $0x3c8] sm:$0xff] %v451
                %v453 = vld [vmem:[%s207 + $0xf40] sm:$0xff]
                %454 = vst [vmem:[%s208 + $0x3d0] sm:$0xff] %v453
                %v455 = vld [vmem:[%s207 + $0xf48] sm:$0xff]
                %456 = vst [vmem:[%s208 + $0x3d8] sm:$0xff] %v455
                %v457 = vld [vmem:[%s207 + $0xf80] sm:$0xff]
                %458 = vst [vmem:[%s208 + $0x3e0] sm:$0xff] %v457
                %v459 = vld [vmem:[%s207 + $0xf88] sm:$0xff]
                %460 = vst [vmem:[%s208 + $0x3e8] sm:$0xff] %v459
                %v461 = vld [vmem:[%s207 + $0xfc0] sm:$0xff]
                %462 = vst [vmem:[%s208 + $0x3f0] sm:$0xff] %v461
                %v463 = vld [vmem:[%s207 + $0xfc8] sm:$0xff]
                %464 = vst [vmem:[%s208 + $0x3f8] sm:$0xff] %v463
              $region37: #{_lambda_.3} parent=31 // loop_footer
                %s206 = sadd.s32 1, %s202
              $region38: #{_lambda_.3} parent=31 // loop_footer_branch
                %201 = sbr.rel target = $region34
              $region39: #{_lambda_.3} parent=31 // loop_exit
                _
            $region32: #{_lambda_.3} parent=27 // pred_fallthru
              _
            // Predicated region
            $region40: #{_lambda_.3} parent=27 // pred_check
              _
            $region41: #{_lambda_.3} parent=27 // pred_check_branch
              %466 = sbr.rel target = $region43
            $region42: #{_lambda_.3} parent=27 // pred_region
              _
            $region43: #{_lambda_.3} parent=27 // pred_fallthru
              _
          $region28: #{_lambda_.3} parent=23 // pred_fallthru
            _
          %467 = vnop
        $region24: #{_lambda_.3} parent=19 // pred_fallthru
          _
        // Predicated region
        $region44: #{_lambda_.3} parent=19 // pred_check
          %p468 = pneg %p81
        $region45: #{_lambda_.3} parent=19 // pred_check_branch
          %470 = sbr.rel (%p468) target = $region47
        $region46: #{_lambda_.3} parent=19 // pred_region
          %s471 = smul.u32 2, %s14
          %p472 = scmp.lt.s32.totalorder %s471, 7
          %s473 = scalar_select %p472, %s471, 7
          %s474 = scalar_lea.vmem %s2, %s473
          %s475 = smul.u32 2, %s14
        $region47: #{_lambda_.3} parent=19 // pred_fallthru
          _
        // Predicated region
        $region48: #{_lambda_.3} parent=19 // pred_check
          %p476 = pneg %p107
        $region49: #{_lambda_.3} parent=19 // pred_check_branch
          %478 = sbr.rel (%p476) target = $region51
        $region50: #{_lambda_.3} parent=19 // pred_region
          %s479 = smul.u32 2, %s14
          %p480 = scmp.lt.s32.totalorder %s479, 7
          %s481 = scalar_select %p480, %s479, 7
          %s482 = scalar_lea.vmem %s3, %s481
          %s483 = smul.u32 2, %s14
        $region51: #{_lambda_.3} parent=19 // pred_fallthru
          _
        // Predicated region
        $region52: #{_lambda_.3} parent=19 // pred_check
          %p484 = pneg %p133
        $region53: #{_lambda_.3} parent=19 // pred_check_branch
          %486 = sbr.rel (%p484) target = $region55
        $region54: #{_lambda_.3} parent=19 // pred_region
          %s487 = smul.u32 2, %s14
          %p488 = scmp.lt.s32.totalorder %s487, 7
          %s489 = scalar_select %p488, %s487, 7
          %s490 = scalar_lea.vmem %s4, %s489
          %s491 = smul.u32 2, %s14
        $region55: #{_lambda_.3} parent=19 // pred_fallthru
          _
      $region20: #{_lambda_.3} parent=5 // pred_fallthru
        _
      %p492 = scmp.le.s32.totalorder 1, %s14
      %p493 = scmp.lt.s32.totalorder %s14, 5
      %p494 = pnand %p492, %p493
      %p495 = pneg %p494
      // Predicated region
      $region56: #{_lambda_.3} parent=5 // pred_check
        _
      $region57: #{_lambda_.3} parent=5 // pred_check_branch
        %497 = sbr.rel (%p494) target = $region59
      $region58: #{_lambda_.3} parent=5 // pred_region
        %s498 = ssub.s32 %s14, 1
        %s499 = sand.u32 %s48, 1
        %s500 = sand.u32 %s48, 1
        %s501 = smul.addr %s500, 1024
        %s502 = scalar_lea.vmem [#allocation2], %s501
        // Predicated region
        $region60: #{_lambda_.3} parent=58 // pred_check
          %p503 = pneg %p61
        $region61: #{_lambda_.3} parent=58 // pred_check_branch
          %505 = sbr.rel (%p503) target = $region63
        $region62: #{_lambda_.3} parent=58 // pred_region
          _
        $region63: #{_lambda_.3} parent=58 // pred_fallthru
          _
        %p506 = pneg %p35
        %p507 = pneg %p32
        %s508 = sand.u32 %s48, 1
        %s509 = sand.u32 %s48, 1
        %s510 = smul.addr %s509, 1024
        %s511 = scalar_lea.vmem [#allocation2], %s510
        %p512 = pneg %p61
        %p513 = pneg %p58
        %s514 = smul.u32 2, %s19
        %p515 = scmp.lt.s32.totalorder %s514, 7
        %s516 = scalar_select %p515, %s514, 7
        %s517 = scalar_lea.vmem %s2, %s516
        %p518 = pneg %p87
        %p519 = pneg %p84
        %s520 = smul.u32 2, %s19
        %p521 = scmp.lt.s32.totalorder %s520, 7
        %s522 = scalar_select %p521, %s520, 7
        %s523 = scalar_lea.vmem %s3, %s522
        %p524 = pneg %p113
        %p525 = pneg %p110
        %s526 = smul.u32 2, %s19
        %p527 = scmp.lt.s32.totalorder %s526, 7
        %s528 = scalar_select %p527, %s526, 7
        %s529 = scalar_lea.vmem %s4, %s528
        %p530 = pneg %p139
        %p531 = pneg %p136
        %p532 = pneg %p165
        %p533 = pneg %p162
        %s534 = sand.u32 %s152, 1
        %s535 = scalar_lea.sflag [#allocation4], %s534
        %s536 = sand.u32 %s152, 1
        %s537 = smul.addr %s536, 32
        %s538 = scalar_lea.vmem [#allocation3], %s537
        %s539 = smul.u32 2, %s19
        %s540 = smul.u32 2, %s19
        %p541 = scmp.lt.s32.totalorder %s540, 7
        %s542 = scalar_select %p541, %s540, 7
        %s543 = scalar_lea.vmem %s2, %s542
        %s544 = smul.u32 2, %s19
        %s545 = smul.u32 2, %s19
        %p546 = scmp.lt.s32.totalorder %s545, 7
        %s547 = scalar_select %p546, %s545, 7
        %s548 = scalar_lea.vmem %s3, %s547
        %s549 = smul.u32 2, %s19
        %s550 = smul.u32 2, %s19
        %p551 = scmp.lt.s32.totalorder %s550, 7
        %s552 = scalar_select %p551, %s550, 7
        %s553 = scalar_lea.vmem %s4, %s552
        %s554 = smul.u32 2, %s19
        %s555 = smul.u32 2, %s19
        %v556 = vld [vmem:[%s0] sm:$0xff]
        %v557 = vld [vmem:[%s0 + $0x8] sm:$0xff]
        %v558 = vld [vmem:[%s0 + $0x10] sm:$0xff]
        %v559 = vld [vmem:[%s0 + $0x18] sm:$0xff]
        %v560 = vld [vmem:[%s0 + $0x20] sm:$0xff]
        %v561 = vld [vmem:[%s0 + $0x28] sm:$0xff]
        %v562 = vld [vmem:[%s0 + $0x30] sm:$0xff]
        %v563 = vld [vmem:[%s0 + $0x38] sm:$0xff]
        %v564 = vld [vmem:[%s502] sm:$0xff]
        %v565 = vld [vmem:[%s502 + $0x8] sm:$0xff]
        %v566 = vld [vmem:[%s502 + $0x10] sm:$0xff]
        %v567 = vld [vmem:[%s502 + $0x18] sm:$0xff]
        %v568 = vld [vmem:[%s502 + $0x20] sm:$0xff]
        %v569 = vld [vmem:[%s502 + $0x28] sm:$0xff]
        %v570 = vld [vmem:[%s502 + $0x30] sm:$0xff]
        %v571 = vld [vmem:[%s502 + $0x38] sm:$0xff]
        %v572 = vld [vmem:[%s502 + $0x40] sm:$0xff]
        %v573 = vld [vmem:[%s502 + $0x48] sm:$0xff]
        %v574 = vld [vmem:[%s502 + $0x50] sm:$0xff]
        %v575 = vld [vmem:[%s502 + $0x58] sm:$0xff]
        %v576 = vld [vmem:[%s502 + $0x60] sm:$0xff]
        %v577 = vld [vmem:[%s502 + $0x68] sm:$0xff]
        %v578 = vld [vmem:[%s502 + $0x70] sm:$0xff]
        %v579 = vld [vmem:[%s502 + $0x78] sm:$0xff]
        %v580 = vld [vmem:[%s502 + $0x80] sm:$0xff]
        %v581 = vld [vmem:[%s502 + $0x88] sm:$0xff]
        %v582 = vld [vmem:[%s502 + $0x90] sm:$0xff]
        %v583 = vld [vmem:[%s502 + $0x98] sm:$0xff]
        %v584 = vld [vmem:[%s502 + $0xa0] sm:$0xff]
        %v585 = vld [vmem:[%s502 + $0xa8] sm:$0xff]
        %v586 = vld [vmem:[%s502 + $0xb0] sm:$0xff]
        %v587 = vld [vmem:[%s502 + $0xb8] sm:$0xff]
        %v588 = vld [vmem:[%s502 + $0xc0] sm:$0xff]
        %v589 = vld [vmem:[%s502 + $0xc8] sm:$0xff]
        %v590 = vld [vmem:[%s502 + $0xd0] sm:$0xff]
        %v591 = vld [vmem:[%s502 + $0xd8] sm:$0xff]
        %v592 = vld [vmem:[%s502 + $0xe0] sm:$0xff]
        %v593 = vld [vmem:[%s502 + $0xe8] sm:$0xff]
        %v594 = vld [vmem:[%s502 + $0xf0] sm:$0xff]
        %v595 = vld [vmem:[%s502 + $0xf8] sm:$0xff]
        %v596 = vld [vmem:[%s502 + $0x100] sm:$0xff]
        %v597 = vld [vmem:[%s502 + $0x108] sm:$0xff]
        %v598 = vld [vmem:[%s502 + $0x110] sm:$0xff]
        %v599 = vld [vmem:[%s502 + $0x118] sm:$0xff]
        %v600 = vld [vmem:[%s502 + $0x120] sm:$0xff]
        %v601 = vld [vmem:[%s502 + $0x128] sm:$0xff]
        %v602 = vld [vmem:[%s502 + $0x130] sm:$0xff]
        %v603 = vld [vmem:[%s502 + $0x138] sm:$0xff]
        %v604 = vld [vmem:[%s502 + $0x140] sm:$0xff]
        %v605 = vld [vmem:[%s502 + $0x148] sm:$0xff]
        %v606 = vld [vmem:[%s502 + $0x150] sm:$0xff]
        %v607 = vld [vmem:[%s502 + $0x158] sm:$0xff]
        %v608 = vld [vmem:[%s502 + $0x160] sm:$0xff]
        %v609 = vld [vmem:[%s502 + $0x168] sm:$0xff]
        %v610 = vld [vmem:[%s502 + $0x170] sm:$0xff]
        %v611 = vld [vmem:[%s502 + $0x178] sm:$0xff]
        %v612 = vld [vmem:[%s502 + $0x180] sm:$0xff]
        %v613 = vld [vmem:[%s502 + $0x188] sm:$0xff]
        %v614 = vld [vmem:[%s502 + $0x190] sm:$0xff]
        %v615 = vld [vmem:[%s502 + $0x198] sm:$0xff]
        %v616 = vld [vmem:[%s502 + $0x1a0] sm:$0xff]
        %v617 = vld [vmem:[%s502 + $0x1a8] sm:$0xff]
        %v618 = vld [vmem:[%s502 + $0x1b0] sm:$0xff]
        %v619 = vld [vmem:[%s502 + $0x1b8] sm:$0xff]
        %v620 = vld [vmem:[%s502 + $0x1c0] sm:$0xff]
        %v621 = vld [vmem:[%s502 + $0x1c8] sm:$0xff]
        %v622 = vld [vmem:[%s502 + $0x1d0] sm:$0xff]
        %v623 = vld [vmem:[%s502 + $0x1d8] sm:$0xff]
        %v624 = vld [vmem:[%s502 + $0x1e0] sm:$0xff]
        %v625 = vld [vmem:[%s502 + $0x1e8] sm:$0xff]
        %v626 = vld [vmem:[%s502 + $0x1f0] sm:$0xff]
        %v627 = vld [vmem:[%s502 + $0x1f8] sm:$0xff]
        %v628 = vld [vmem:[%s502 + $0x200] sm:$0xff]
        %v629 = vld [vmem:[%s502 + $0x208] sm:$0xff]
        %v630 = vld [vmem:[%s502 + $0x210] sm:$0xff]
        %v631 = vld [vmem:[%s502 + $0x218] sm:$0xff]
        %v632 = vld [vmem:[%s502 + $0x220] sm:$0xff]
        %v633 = vld [vmem:[%s502 + $0x228] sm:$0xff]
        %v634 = vld [vmem:[%s502 + $0x230] sm:$0xff]
        %v635 = vld [vmem:[%s502 + $0x238] sm:$0xff]
        %v636 = vld [vmem:[%s502 + $0x240] sm:$0xff]
        %v637 = vld [vmem:[%s502 + $0x248] sm:$0xff]
        %v638 = vld [vmem:[%s502 + $0x250] sm:$0xff]
        %v639 = vld [vmem:[%s502 + $0x258] sm:$0xff]
        %v640 = vld [vmem:[%s502 + $0x260] sm:$0xff]
        %v641 = vld [vmem:[%s502 + $0x268] sm:$0xff]
        %v642 = vld [vmem:[%s502 + $0x270] sm:$0xff]
        %v643 = vld [vmem:[%s502 + $0x278] sm:$0xff]
        %v644 = vld [vmem:[%s502 + $0x280] sm:$0xff]
        %v645 = vld [vmem:[%s502 + $0x288] sm:$0xff]
        %v646 = vld [vmem:[%s502 + $0x290] sm:$0xff]
        %v647 = vld [vmem:[%s502 + $0x298] sm:$0xff]
        %v648 = vld [vmem:[%s502 + $0x2a0] sm:$0xff]
        %v649 = vld [vmem:[%s502 + $0x2a8] sm:$0xff]
        %v650 = vld [vmem:[%s502 + $0x2b0] sm:$0xff]
        %v651 = vld [vmem:[%s502 + $0x2b8] sm:$0xff]
        %v652 = vld [vmem:[%s502 + $0x2c0] sm:$0xff]
        %v653 = vld [vmem:[%s502 + $0x2c8] sm:$0xff]
        %v654 = vld [vmem:[%s502 + $0x2d0] sm:$0xff]
        %v655 = vld [vmem:[%s502 + $0x2d8] sm:$0xff]
        %v656 = vld [vmem:[%s502 + $0x2e0] sm:$0xff]
        %v657 = vld [vmem:[%s502 + $0x2e8] sm:$0xff]
        %v658 = vld [vmem:[%s502 + $0x2f0] sm:$0xff]
        %v659 = vld [vmem:[%s502 + $0x2f8] sm:$0xff]
        %v660 = vld [vmem:[%s502 + $0x300] sm:$0xff]
        %v661 = vld [vmem:[%s502 + $0x308] sm:$0xff]
        %v662 = vld [vmem:[%s502 + $0x310] sm:$0xff]
        %v663 = vld [vmem:[%s502 + $0x318] sm:$0xff]
        %v664 = vld [vmem:[%s502 + $0x320] sm:$0xff]
        %v665 = vld [vmem:[%s502 + $0x328] sm:$0xff]
        %v666 = vld [vmem:[%s502 + $0x330] sm:$0xff]
        %v667 = vld [vmem:[%s502 + $0x338] sm:$0xff]
        %v668 = vld [vmem:[%s502 + $0x340] sm:$0xff]
        %v669 = vld [vmem:[%s502 + $0x348] sm:$0xff]
        %v670 = vld [vmem:[%s502 + $0x350] sm:$0xff]
        %v671 = vld [vmem:[%s502 + $0x358] sm:$0xff]
        %v672 = vld [vmem:[%s502 + $0x360] sm:$0xff]
        %v673 = vld [vmem:[%s502 + $0x368] sm:$0xff]
        %v674 = vld [vmem:[%s502 + $0x370] sm:$0xff]
        %v675 = vld [vmem:[%s502 + $0x378] sm:$0xff]
        %v676 = vld [vmem:[%s502 + $0x380] sm:$0xff]
        %v677 = vld [vmem:[%s502 + $0x388] sm:$0xff]
        %v678 = vld [vmem:[%s502 + $0x390] sm:$0xff]
        %v679 = vld [vmem:[%s502 + $0x398] sm:$0xff]
        %v680 = vld [vmem:[%s502 + $0x3a0] sm:$0xff]
        %v681 = vld [vmem:[%s502 + $0x3a8] sm:$0xff]
        %v682 = vld [vmem:[%s502 + $0x3b0] sm:$0xff]
        %v683 = vld [vmem:[%s502 + $0x3b8] sm:$0xff]
        %v684 = vld [vmem:[%s502 + $0x3c0] sm:$0xff]
        %v685 = vld [vmem:[%s502 + $0x3c8] sm:$0xff]
        %v686 = vld [vmem:[%s502 + $0x3d0] sm:$0xff]
        %v687 = vld [vmem:[%s502 + $0x3d8] sm:$0xff]
        %v688 = vld [vmem:[%s502 + $0x3e0] sm:$0xff]
        %v689 = vld [vmem:[%s502 + $0x3e8] sm:$0xff]
        %v690 = vld [vmem:[%s502 + $0x3f0] sm:$0xff]
        %v691 = vld [vmem:[%s502 + $0x3f8] sm:$0xff]
        %v692 = vld [vmem:[%s543] sm:$0x3]
        %v694 = vlaneseq
        %v695 = vshrl.u32 %v694, 7
        %v696 = vsub.s32 0, %v695
        %v697 = vrot.slane %v692, %v696
        %v698 = vlaneseq
        %v699 = vshrl.u32 %v698, 7
        %v700 = vsub.s32 1, %v699
        %v701 = vrot.slane %v692, %v700
        %704 = vmatprep.subr.mxu0 %v595
        %705 = vmatpush1.msra.mxu0 %v594
        %706 = vmatprep.subr.mxu0 %v593
        %707 = vmatpush1.msra.mxu0 %v592
        %708 = vmatprep.subr.mxu0 %v591
        %709 = vmatpush1.msra.mxu0 %v590
        %710 = vmatprep.subr.mxu0 %v589
        %711 = vmatpush1.msra.mxu0 %v588
        %712 = vmatprep.subr.mxu0 %v587
        %713 = vmatpush1.msra.mxu0 %v586
        %714 = vmatprep.subr.mxu0 %v585
        %715 = vmatpush1.msra.mxu0 %v584
        %716 = vmatprep.subr.mxu0 %v583
        %717 = vmatpush1.msra.mxu0 %v582
        %718 = vmatprep.subr.mxu0 %v581
        %719 = vmatpush1.msra.mxu0 %v580
        %720 = vmatprep.subr.mxu0 %v579
        %721 = vmatpush1.msra.mxu0 %v578
        %722 = vmatprep.subr.mxu0 %v577
        %723 = vmatpush1.msra.mxu0 %v576
        %724 = vmatprep.subr.mxu0 %v575
        %725 = vmatpush1.msra.mxu0 %v574
        %726 = vmatprep.subr.mxu0 %v573
        %727 = vmatpush1.msra.mxu0 %v572
        %728 = vmatprep.subr.mxu0 %v571
        %729 = vmatpush1.msra.mxu0 %v570
        %730 = vmatprep.subr.mxu0 %v569
        %731 = vmatpush1.msra.mxu0 %v568
        %732 = vmatprep.subr.mxu0 %v567
        %733 = vmatpush1.msra.mxu0 %v566
        %734 = vmatprep.subr.mxu0 %v565
        %735 = vmatpush1.msra.mxu0 %v564
        %736 = vmatprep.subr.mxu0 %v627
        %737 = vmatpush2.msra.mxu0 %v626
        %738 = vmatprep.subr.mxu0 %v625
        %739 = vmatpush2.msra.mxu0 %v624
        %740 = vmatprep.subr.mxu0 %v623
        %741 = vmatpush2.msra.mxu0 %v622
        %742 = vmatprep.subr.mxu0 %v621
        %743 = vmatpush2.msra.mxu0 %v620
        %744 = vmatprep.subr.mxu0 %v619
        %745 = vmatpush2.msra.mxu0 %v618
        %746 = vmatprep.subr.mxu0 %v617
        %747 = vmatpush2.msra.mxu0 %v616
        %748 = vmatprep.subr.mxu0 %v615
        %749 = vmatpush2.msra.mxu0 %v614
        %750 = vmatprep.subr.mxu0 %v613
        %751 = vmatpush2.msra.mxu0 %v612
        %752 = vmatprep.subr.mxu0 %v611
        %753 = vmatpush2.msra.mxu0 %v610
        %754 = vmatprep.subr.mxu0 %v609
        %755 = vmatpush2.msra.mxu0 %v608
        %756 = vmatprep.subr.mxu0 %v607
        %757 = vmatpush2.msra.mxu0 %v606
        %758 = vmatprep.subr.mxu0 %v605
        %759 = vmatpush2.msra.mxu0 %v604
        %760 = vmatprep.subr.mxu0 %v603
        %761 = vmatpush2.msra.mxu0 %v602
        %762 = vmatprep.subr.mxu0 %v601
        %763 = vmatpush2.msra.mxu0 %v600
        %764 = vmatprep.subr.mxu0 %v599
        %765 = vmatpush2.msra.mxu0 %v598
        %766 = vmatprep.subr.mxu0 %v597
        %767 = vmatpush2.msra.mxu0 %v596
        %768 = vmatprep.mubr.f32.mxu0 %v557
        %769 = vmatmul.mubr.f32.gmra.mxu0 %v556
        %v770 = vpop.f32.mrf.mxu0
        %v771 = vadd.f32 %v697, %v770
        %v772 = vpop.f32.mrf.mxu0
        %v773 = vadd.f32 %v701, %v772
        %774 = vmatprep.mubr.f32.mxu0 %v561
        %775 = vmatmul.mubr.f32.gmra.mxu0 %v560
        %v776 = vpop.f32.mrf.mxu0
        %v777 = vadd.f32 %v697, %v776
        %v778 = vpop.f32.mrf.mxu0
        %v779 = vadd.f32 %v701, %v778
        %780 = vdwg.mxu0
        %781 = vmatprep.subr.mxu0 %v659
        %782 = vmatpush1.msra.mxu0 %v658
        %783 = vmatprep.subr.mxu0 %v657
        %784 = vmatpush1.msra.mxu0 %v656
        %785 = vmatprep.subr.mxu0 %v655
        %786 = vmatpush1.msra.mxu0 %v654
        %787 = vmatprep.subr.mxu0 %v653
        %788 = vmatpush1.msra.mxu0 %v652
        %789 = vmatprep.subr.mxu0 %v651
        %790 = vmatpush1.msra.mxu0 %v650
        %791 = vmatprep.subr.mxu0 %v649
        %792 = vmatpush1.msra.mxu0 %v648
        %793 = vmatprep.subr.mxu0 %v647
        %794 = vmatpush1.msra.mxu0 %v646
        %795 = vmatprep.subr.mxu0 %v645
        %796 = vmatpush1.msra.mxu0 %v644
        %797 = vmatprep.subr.mxu0 %v643
        %798 = vmatpush1.msra.mxu0 %v642
        %799 = vmatprep.subr.mxu0 %v641
        %800 = vmatpush1.msra.mxu0 %v640
        %801 = vmatprep.subr.mxu0 %v639
        %802 = vmatpush1.msra.mxu0 %v638
        %803 = vmatprep.subr.mxu0 %v637
        %804 = vmatpush1.msra.mxu0 %v636
        %805 = vmatprep.subr.mxu0 %v635
        %806 = vmatpush1.msra.mxu0 %v634
        %807 = vmatprep.subr.mxu0 %v633
        %808 = vmatpush1.msra.mxu0 %v632
        %809 = vmatprep.subr.mxu0 %v631
        %810 = vmatpush1.msra.mxu0 %v630
        %811 = vmatprep.subr.mxu0 %v629
        %812 = vmatpush1.msra.mxu0 %v628
        %813 = vmatprep.subr.mxu0 %v691
        %814 = vmatpush2.msra.mxu0 %v690
        %815 = vmatprep.subr.mxu0 %v689
        %816 = vmatpush2.msra.mxu0 %v688
        %817 = vmatprep.subr.mxu0 %v687
        %818 = vmatpush2.msra.mxu0 %v686
        %819 = vmatprep.subr.mxu0 %v685
        %820 = vmatpush2.msra.mxu0 %v684
        %821 = vmatprep.subr.mxu0 %v683
        %822 = vmatpush2.msra.mxu0 %v682
        %823 = vmatprep.subr.mxu0 %v681
        %824 = vmatpush2.msra.mxu0 %v680
        %825 = vmatprep.subr.mxu0 %v679
        %826 = vmatpush2.msra.mxu0 %v678
        %827 = vmatprep.subr.mxu0 %v677
        %828 = vmatpush2.msra.mxu0 %v676
        %829 = vmatprep.subr.mxu0 %v675
        %830 = vmatpush2.msra.mxu0 %v674
        %831 = vmatprep.subr.mxu0 %v673
        %832 = vmatpush2.msra.mxu0 %v672
        %833 = vmatprep.subr.mxu0 %v671
        %834 = vmatpush2.msra.mxu0 %v670
        %835 = vmatprep.subr.mxu0 %v669
        %836 = vmatpush2.msra.mxu0 %v668
        %837 = vmatprep.subr.mxu0 %v667
        %838 = vmatpush2.msra.mxu0 %v666
        %839 = vmatprep.subr.mxu0 %v665
        %840 = vmatpush2.msra.mxu0 %v664
        %841 = vmatprep.subr.mxu0 %v663
        %842 = vmatpush2.msra.mxu0 %v662
        %843 = vmatprep.subr.mxu0 %v661
        %844 = vmatpush2.msra.mxu0 %v660
        %845 = vmatprep.mubr.f32.mxu0 %v559
        %846 = vmatmul.mubr.f32.gmra.mxu0 %v558
        %v847 = vpop.f32.mrf.mxu0
        %v848 = vadd.f32 %v771, %v847
        %v849 = vpop.f32.mrf.mxu0
        %v850 = vadd.f32 %v773, %v849
        %851 = vmatprep.mubr.f32.mxu0 %v563
        %852 = vmatmul.mubr.f32.gmra.mxu0 %v562
        %v853 = vpop.f32.mrf.mxu0
        %v854 = vadd.f32 %v777, %v853
        %v855 = vpop.f32.mrf.mxu0
        %v856 = vadd.f32 %v779, %v855
        %857 = vdwg.mxu0
        %v858 = vadd.f32 %v848, %v854
        %v859 = vrot.slane %v858, 4
        %v860 = vadd.f32 %v858, %v859
        %v861 = vrot.slane %v860, 2
        %v862 = vadd.f32 %v860, %v861
        %v863 = vrot.slane %v862, 1
        %v864 = vadd.f32 %v862, %v863
        %v865 = vadd.f32 %v850, %v856
        %v866 = vrot.slane %v865, 4
        %v867 = vadd.f32 %v865, %v866
        %v868 = vrot.slane %v867, 2
        %v869 = vadd.f32 %v867, %v868
        %v870 = vrot.slane %v869, 1
        %v871 = vadd.f32 %v869, %v870
        %v872 = vrcp.pop 16.0
        %v873 = vmul.f32 %v864, %v872
        %v874 = vmul.f32 %v871, %v872
        %v875 = vsub.f32 %v848, %v873
        %v876 = vsub.f32 %v850, %v874
        %v877 = vsub.f32 %v854, %v873
        %v878 = vsub.f32 %v856, %v874
        %v879 = vmul.f32 %v875, %v875
        %v880 = vmul.f32 %v876, %v876
        %v881 = vmul.f32 %v877, %v877
        %v882 = vmul.f32 %v878, %v878
        %v883 = vadd.f32 %v879, %v881
        %v884 = vrot.slane %v883, 4
        %v885 = vadd.f32 %v883, %v884
        %v886 = vrot.slane %v885, 2
        %v887 = vadd.f32 %v885, %v886
        %v888 = vrot.slane %v887, 1
        %v889 = vadd.f32 %v887, %v888
        %v890 = vadd.f32 %v880, %v882
        %v891 = vrot.slane %v890, 4
        %v892 = vadd.f32 %v890, %v891
        %v893 = vrot.slane %v892, 2
        %v894 = vadd.f32 %v892, %v893
        %v895 = vrot.slane %v894, 1
        %v896 = vadd.f32 %v894, %v895
        %v897 = vmul.f32 %v889, %v872
        %v898 = vmul.f32 %v896, %v872
        %v899 = vadd.f32 %v897, 1e-05
        %v900 = vadd.f32 %v898, 1e-05
        %v901 = vrsqrt.pop %v899
        %v902 = vrsqrt.pop %v900
        %v903 = vmul.f32 %v875, %v901
        %v904 = vmul.f32 %v876, %v902
        %v905 = vmul.f32 %v877, %v901
        %v906 = vmul.f32 %v878, %v902
        %v907 = vld [vmem:[%s548] sm:$0x3]
        %v909 = vlaneseq
        %v910 = vshrl.u32 %v909, 7
        %v911 = vsub.s32 0, %v910
        %v912 = vrot.slane %v907, %v911
        %v913 = vlaneseq
        %v914 = vshrl.u32 %v913, 7
        %v915 = vsub.s32 1, %v914
        %v916 = vrot.slane %v907, %v915
        %v919 = vmul.f32 %v903, %v912
        %v920 = vmul.f32 %v904, %v916
        %v921 = vmul.f32 %v905, %v912
        %v922 = vmul.f32 %v906, %v916
        %v923 = vld [vmem:[%s553] sm:$0x3]
        %v925 = vlaneseq
        %v926 = vshrl.u32 %v925, 7
        %v927 = vsub.s32 0, %v926
        %v928 = vrot.slane %v923, %v927
        %v929 = vlaneseq
        %v930 = vshrl.u32 %v929, 7
        %v931 = vsub.s32 1, %v930
        %v932 = vrot.slane %v923, %v931
        %v935 = vadd.f32 %v919, %v928
        %v936 = vadd.f32 %v920, %v932
        %v937 = vadd.f32 %v921, %v928
        %v938 = vadd.f32 %v922, %v932
        %939 = vst [vmem:[%s538] sm:$0xff] %v935
        %940 = vst [vmem:[%s538 + $0x8] sm:$0xff] %v936
        %941 = vst [vmem:[%s538 + $0x10] sm:$0xff] %v937
        %942 = vst [vmem:[%s538 + $0x18] sm:$0xff] %v938
        %s943 = sand.u32 %s152, 1
        %s944 = scalar_lea.sflag [#allocation4], %s943
        %s945 = sand.u32 %s152, 1
        %s946 = smul.addr %s945, 32
        %s947 = scalar_lea.vmem [#allocation3], %s946
        // Predicated region
        $region64: #{_lambda_.3} parent=58 // pred_check
          %p948 = pneg %p162
        $region65: #{_lambda_.3} parent=58 // pred_check_branch
          %950 = sbr.rel (%p948) target = $region67
        $region66: #{_lambda_.3} parent=58 // pred_region
          %s951 = smul.u32 2, %s19
          %s953 = ssub.s32 512, 512
          %954 = vsyncadd %s944, %s953
          %s955 = smul.addr %s951, 128
          %s956 = scalar_lea.hbm %s5, %s955
          %s957 = sshll.u32 %s947, 4
          %s958 = int_to_ptr.vmem [resolvable:$true] %s957
          %963 = dma.vmem_to_hbm [thread:$0]  %s958, 512, %s956, %s944, 256, 1024, 16
        $region67: #{_lambda_.3} parent=58 // pred_fallthru
          _
      $region59: #{_lambda_.3} parent=5 // pred_fallthru
        _
      %p964 = scmp.le.s32.totalorder 2, %s14
      // Predicated region
      $region68: #{_lambda_.3} parent=5 // pred_check
        %p965 = pneg %p964
      $region69: #{_lambda_.3} parent=5 // pred_check_branch
        %967 = sbr.rel (%p965) target = $region71
      $region70: #{_lambda_.3} parent=5 // pred_region
        %s968 = ssub.s32 %s14, 2
        // Predicated region
        $region72: #{_lambda_.3} parent=70 // pred_check
          %p969 = pneg %p168
        $region73: #{_lambda_.3} parent=70 // pred_check_branch
          %971 = sbr.rel (%p969) target = $region75
        $region74: #{_lambda_.3} parent=70 // pred_region
          %s972 = sand.u32 %s153, 1
          %s973 = scalar_lea.sflag [#allocation4], %s972
          %s974 = sand.u32 %s153, 1
          %s975 = smul.addr %s974, 32
          %s976 = scalar_lea.vmem [#allocation3], %s975
          %977 = dma.done %s973, 512
        $region75: #{_lambda_.3} parent=70 // pred_fallthru
          _
      $region71: #{_lambda_.3} parent=5 // pred_fallthru
        _
    $region6: #{_lambda_.3} parent=1 // loop_footer
      %s18 = sadd.s32 1, %s14
    $region7: #{_lambda_.3} parent=1 // loop_footer_branch
      %13 = sbr.rel target = $region3
    $region8: #{_lambda_.3} parent=1 // loop_exit
      _
    %978 = vsyncpa [#allocation4], 1
    %s979 = scalar_lea.sflag [#allocation4], 1
    %980 = vsyncpa %s979, 1

</llo_original>
